<compile_context>
chip_gen: v6e
topology: v6e:2x2x1
jax: 0.10.0
libtpu: 0.0.40
codegen_flags: <defaults>
</compile_context>

<pallas_src>
import functools
import math

import jax
import jax.numpy as jnp
from jax.experimental import pallas as pl

BN_EPS = 1e-5


# --------------------------------------------------------------------------------------
# Fused kernel: x -> [Linear(no bias) -> BatchNorm1d(batch stats) -> act] * n_layers -> out
# --------------------------------------------------------------------------------------
def _fused_autoencoder_kernel(*refs, acts):
    x_ref = refs[0]
    o_ref = refs[-1]
    layer_refs = refs[1:-1]  # (w, gamma, beta) per layer

    h = x_ref[...].astype(jnp.float32)
    for i, act in enumerate(acts):
        w_ref = layer_refs[3 * i]
        g_ref = layer_refs[3 * i + 1]
        beta_ref = layer_refs[3 * i + 2]

        # Linear (bias omitted: cancels under batch-stat BN). bf16 operands, f32 accumulate.
        y = jnp.dot(h.astype(jnp.bfloat16), w_ref[...],
                    preferred_element_type=jnp.float32)

        # BatchNorm1d, training-mode forward: biased batch statistics over the batch dim.
        mean = jnp.mean(y, axis=0, keepdims=True)
        centered = y - mean
        var = jnp.mean(centered * centered, axis=0, keepdims=True)
        scale = g_ref[...] * jax.lax.rsqrt(var + BN_EPS)   # fold gamma into the (1,N) row
        y = centered * scale + beta_ref[...]

        # Activation
        if act == "relu":
            y = jnp.maximum(y, 0.0)
        elif act == "sigmoid":
            y = jax.nn.sigmoid(y)
        elif act != "none":
            raise ValueError(f"unknown activation {act}")
        h = y

    o_ref[...] = h.astype(o_ref.dtype)


def _full_spec(shape):
    # Full-array block (no grid): everything here is tiny and fits VMEM comfortably.
    return pl.BlockSpec(shape, lambda: (0,) * len(shape))


# --------------------------------------------------------------------------------------
# Parameter construction (mimics torch defaults) and kernel-side packing
# --------------------------------------------------------------------------------------
def init_linear(key, in_features, out_features):
    """Deterministic init mimicking torch.nn.Linear (uniform +/- 1/sqrt(fan_in))."""
    kw, kb = jax.random.split(key)
    bound = 1.0 / math.sqrt(in_features)
    w_t = jax.random.uniform(kw, (in_features, out_features), jnp.float32, -bound, bound)
    b = jax.random.uniform(kb, (out_features,), jnp.float32, -bound, bound)
    return w_t, b


def build_autoencoder_layers(key, feature_size, hidden_sizes, latent_dim):
    """Returns list of (w_t, b, gamma, beta, act) f32 layer descriptors (encoder + decoder)."""
    layers = []

    def add(k, fan_in, fan_out, act):
        w_t, b = init_linear(k, fan_in, fan_out)
        gamma = jnp.ones((fan_out,), jnp.float32)    # BatchNorm1d default affine init
        beta = jnp.zeros((fan_out,), jnp.float32)
        layers.append((w_t, b, gamma, beta, act))

    keys = jax.random.split(key, 2 * (len(hidden_sizes) + 1))
    ki = 0
    # Encoder: [Linear, BN, ReLU] per hidden size, then Linear -> latent, BN (no activation).
    in_size = feature_size
    for h in hidden_sizes:
        add(keys[ki], in_size, h, "relu"); ki += 1
        in_size = h
    add(keys[ki], in_size, latent_dim, "none"); ki += 1
    # Decoder: [Linear, BN, ReLU] per reversed hidden size, then Linear -> feature, BN, Sigmoid.
    in_size = latent_dim
    for h in reversed(hidden_sizes):
        add(keys[ki], in_size, h, "relu"); ki += 1
        in_size = h
    add(keys[ki], in_size, feature_size, "sigmoid"); ki += 1
    return layers


def _prepare_kernel_params(layers, lane_multiple=128):
    """Pack layers for the kernel: bf16 weights, (1,N) gamma/beta rows, last layer lane-padded."""
    kparams = []
    last = len(layers) - 1
    for i, (w_t, _b, gamma, beta, act) in enumerate(layers):
        _, n = w_t.shape
        n_pad = n
        if i == last:  # make the final HBM store lane-dense (64 -> 128)
            n_pad = ((n + lane_multiple - 1) // lane_multiple) * lane_multiple
        if n_pad != n:
            w_t = jnp.pad(w_t, ((0, 0), (0, n_pad - n)))
            gamma = jnp.pad(gamma, (0, n_pad - n), constant_values=1.0)
            beta = jnp.pad(beta, (0, n_pad - n))
        kparams.append((w_t.astype(jnp.bfloat16),
                        gamma.reshape(1, n_pad),
                        beta.reshape(1, n_pad),
                        act))
    return kparams


# --------------------------------------------------------------------------------------
# Forward wrapper: single fused pallas_call
# --------------------------------------------------------------------------------------
def autoencoder_forward(x, layers, feature_size):
    kparams = _prepare_kernel_params(layers)
    acts = tuple(p[3] for p in kparams)

    batch = x.shape[0]
    n_out = kparams[-1][0].shape[1]  # lane-padded final width

    args = [x]
    in_specs = [_full_spec(x.shape)]
    for w, g, b, _ in kparams:
        for a in (w, g, b):
            args.append(a)
            in_specs.append(_full_spec(a.shape))

    kernel = functools.partial(_fused_autoencoder_kernel, acts=acts)
    out = pl.pallas_call(
        kernel,
        out_shape=jax.ShapeDtypeStruct((batch, n_out), jnp.float32),
        in_specs=in_specs,
        out_specs=_full_spec((batch, n_out)),
    )(*args)
    return out[:, :feature_size]


# --------------------------------------------------------------------------------------
# Pure-JAX references for correctness checking
# --------------------------------------------------------------------------------------
def _reference_forward(x, layers, *, bf16_matmul, use_bias):
    h = x
    for (w_t, b, gamma, beta, act) in layers:
        if bf16_matmul:
            y = jnp.dot(h.astype(jnp.bfloat16), w_t.astype(jnp.bfloat16),
                        preferred_element_type=jnp.float32)
        else:
            y = h @ w_t
        if use_bias:
            y = y + b[None, :]
        mean = jnp.mean(y, axis=0, keepdims=True)
        centered = y - mean
        var = jnp.mean(centered * centered, axis=0, keepdims=True)
        y = centered * (gamma[None, :] * jax.lax.rsqrt(var + BN_EPS)) + beta[None, :]
        if act == "relu":
            y = jnp.maximum(y, 0.0)
        elif act == "sigmoid":
            y = jax.nn.sigmoid(y)
        h = y
    return h


if __name__ == "__main__":
    # Small shapes consistent with the fc forward: x is (batch, feature_size).
    # NOTE: real workloads should use batch >= 128 (v5e) / 256 (v6e, v7x) to fill the MXU rows.
    batch = 8
    feature_size = 64
    hidden_sizes = [512, 512]   # module defaults
    latent_dim = 256            # module default

    key = jax.random.PRNGKey(0)
    k_params, k_x = jax.random.split(key)
    layers = build_autoencoder_layers(k_params, feature_size, hidden_sizes, latent_dim)

    x = jax.random.uniform(k_x, (batch, feature_size), jnp.float32)  # image-like in [0, 1)

    out = autoencoder_forward(x, layers, feature_size)
    out = jax.block_until_ready(out)
    assert out.shape == (batch, feature_size)

    # 1) Tight check against a reference using the kernel's exact math (bf16 matmul, no bias).
    ref_same = _reference_forward(x, layers, bf16_matmul=True, use_bias=False)
    assert jnp.allclose(out, ref_same, atol=1e-2, rtol=1e-2), "mismatch vs bf16-matmul reference"

    # 2) Looser check against the torch-faithful f32 reference (with Linear bias); confirms that
    #    bias-drop (exact cancellation under batch-stat BN) + bf16 MXU only introduce fp noise.
    ref_torch = _reference_forward(x, layers, bf16_matmul=False, use_bias=True)
    assert jnp.allclose(out, ref_torch, atol=1e-1, rtol=1e-1), "mismatch vs f32 torch-faithful reference"

    print("KERNEL_OK")
</pallas_src>

<mosaic_0001>
module attributes {stable_mosaic.version = 11 : i64} {
  func.func @_fused_autoencoder_kernel(%arg0: memref<8x64xf32, #tpu.memory_space<vmem>>, %arg1: memref<64x512xbf16, #tpu.memory_space<vmem>>, %arg2: memref<1x512xf32, #tpu.memory_space<vmem>>, %arg3: memref<1x512xf32, #tpu.memory_space<vmem>>, %arg4: memref<512x512xbf16, #tpu.memory_space<vmem>>, %arg5: memref<1x512xf32, #tpu.memory_space<vmem>>, %arg6: memref<1x512xf32, #tpu.memory_space<vmem>>, %arg7: memref<512x256xbf16, #tpu.memory_space<vmem>>, %arg8: memref<1x256xf32, #tpu.memory_space<vmem>>, %arg9: memref<1x256xf32, #tpu.memory_space<vmem>>, %arg10: memref<256x512xbf16, #tpu.memory_space<vmem>>, %arg11: memref<1x512xf32, #tpu.memory_space<vmem>>, %arg12: memref<1x512xf32, #tpu.memory_space<vmem>>, %arg13: memref<512x512xbf16, #tpu.memory_space<vmem>>, %arg14: memref<1x512xf32, #tpu.memory_space<vmem>>, %arg15: memref<1x512xf32, #tpu.memory_space<vmem>>, %arg16: memref<512x128xbf16, #tpu.memory_space<vmem>>, %arg17: memref<1x128xf32, #tpu.memory_space<vmem>>, %arg18: memref<1x128xf32, #tpu.memory_space<vmem>>, %arg19: memref<8x128xf32, #tpu.memory_space<vmem>>) attributes {dimension_semantics = [], scalar_prefetch = 0 : i64, scratch_operands = 0 : i64, tpu.core_type = #tpu.core_type<tc>} {
    %c0 = arith.constant 0 : index
    %c0_0 = arith.constant 0 : index
    %0 = vector.load %arg0[%c0, %c0_0] : memref<8x64xf32, #tpu.memory_space<vmem>>, vector<8x64xf32>
    %1 = arith.truncf %0 : vector<8x64xf32> to vector<8x64xbf16>
    %c0_1 = arith.constant 0 : index
    %c0_2 = arith.constant 0 : index
    %2 = vector.load %arg1[%c0_1, %c0_2] : memref<64x512xbf16, #tpu.memory_space<vmem>>, vector<64x512xbf16>
    %cst = arith.constant dense<0.000000e+00> : vector<8x512xf32>
    %3 = tpu.matmul %1, %2, %cst {dimension_numbers = #tpu.dot_dimension_numbers<[1], [0], [0], [1], [0, 0, 1, 1], [], []>} : vector<8x64xbf16>, vector<64x512xbf16>, vector<8x512xf32> -> vector<8x512xf32>
    %cst_3 = arith.constant dense<0.000000e+00> : vector<512xf32>
    %4 = vector.multi_reduction <add>, %3, %cst_3 [0] : vector<8x512xf32> to vector<512xf32>
    %5 = vector.shape_cast %4 : vector<512xf32> to vector<1x512xf32>
    %cst_4 = arith.constant 8.000000e+00 : f32
    %6 = vector.broadcast %cst_4 : f32 to vector<1x512xf32>
    %7 = arith.divf %5, %6 : vector<1x512xf32>
    %8 = vector.broadcast %7 : vector<1x512xf32> to vector<8x512xf32>
    %9 = arith.subf %3, %8 : vector<8x512xf32>
    %10 = arith.mulf %9, %9 : vector<8x512xf32>
    %cst_5 = arith.constant dense<0.000000e+00> : vector<512xf32>
    %11 = vector.multi_reduction <add>, %10, %cst_5 [0] : vector<8x512xf32> to vector<512xf32>
    %12 = vector.shape_cast %11 : vector<512xf32> to vector<1x512xf32>
    %cst_6 = arith.constant 8.000000e+00 : f32
    %13 = vector.broadcast %cst_6 : f32 to vector<1x512xf32>
    %14 = arith.divf %12, %13 : vector<1x512xf32>
    %c0_7 = arith.constant 0 : index
    %c0_8 = arith.constant 0 : index
    %15 = vector.load %arg2[%c0_7, %c0_8] : memref<1x512xf32, #tpu.memory_space<vmem>>, vector<1x512xf32>
    %cst_9 = arith.constant 9.99999974E-6 : f32
    %16 = vector.broadcast %cst_9 : f32 to vector<1x512xf32>
    %17 = arith.addf %14, %16 : vector<1x512xf32>
    %18 = math.rsqrt %17 : vector<1x512xf32>
    %19 = arith.mulf %15, %18 : vector<1x512xf32>
    %20 = vector.broadcast %19 : vector<1x512xf32> to vector<8x512xf32>
    %21 = arith.mulf %9, %20 : vector<8x512xf32>
    %c0_10 = arith.constant 0 : index
    %c0_11 = arith.constant 0 : index
    %22 = vector.load %arg3[%c0_10, %c0_11] : memref<1x512xf32, #tpu.memory_space<vmem>>, vector<1x512xf32>
    %23 = vector.broadcast %22 : vector<1x512xf32> to vector<8x512xf32>
    %24 = arith.addf %21, %23 : vector<8x512xf32>
    %cst_12 = arith.constant 0.000000e+00 : f32
    %25 = vector.broadcast %cst_12 : f32 to vector<8x512xf32>
    %26 = arith.maximumf %24, %25 : vector<8x512xf32>
    %27 = arith.truncf %26 : vector<8x512xf32> to vector<8x512xbf16>
    %c0_13 = arith.constant 0 : index
    %c0_14 = arith.constant 0 : index
    %28 = vector.load %arg4[%c0_13, %c0_14] : memref<512x512xbf16, #tpu.memory_space<vmem>>, vector<512x512xbf16>
    %cst_15 = arith.constant dense<0.000000e+00> : vector<8x512xf32>
    %29 = tpu.matmul %27, %28, %cst_15 {dimension_numbers = #tpu.dot_dimension_numbers<[1], [0], [0], [1], [0, 0, 1, 1], [], []>} : vector<8x512xbf16>, vector<512x512xbf16>, vector<8x512xf32> -> vector<8x512xf32>
    %cst_16 = arith.constant dense<0.000000e+00> : vector<512xf32>
    %30 = vector.multi_reduction <add>, %29, %cst_16 [0] : vector<8x512xf32> to vector<512xf32>
    %31 = vector.shape_cast %30 : vector<512xf32> to vector<1x512xf32>
    %cst_17 = arith.constant 8.000000e+00 : f32
    %32 = vector.broadcast %cst_17 : f32 to vector<1x512xf32>
    %33 = arith.divf %31, %32 : vector<1x512xf32>
    %34 = vector.broadcast %33 : vector<1x512xf32> to vector<8x512xf32>
    %35 = arith.subf %29, %34 : vector<8x512xf32>
    %36 = arith.mulf %35, %35 : vector<8x512xf32>
    %cst_18 = arith.constant dense<0.000000e+00> : vector<512xf32>
    %37 = vector.multi_reduction <add>, %36, %cst_18 [0] : vector<8x512xf32> to vector<512xf32>
    %38 = vector.shape_cast %37 : vector<512xf32> to vector<1x512xf32>
    %cst_19 = arith.constant 8.000000e+00 : f32
    %39 = vector.broadcast %cst_19 : f32 to vector<1x512xf32>
    %40 = arith.divf %38, %39 : vector<1x512xf32>
    %c0_20 = arith.constant 0 : index
    %c0_21 = arith.constant 0 : index
    %41 = vector.load %arg5[%c0_20, %c0_21] : memref<1x512xf32, #tpu.memory_space<vmem>>, vector<1x512xf32>
    %cst_22 = arith.constant 9.99999974E-6 : f32
    %42 = vector.broadcast %cst_22 : f32 to vector<1x512xf32>
    %43 = arith.addf %40, %42 : vector<1x512xf32>
    %44 = math.rsqrt %43 : vector<1x512xf32>
    %45 = arith.mulf %41, %44 : vector<1x512xf32>
    %46 = vector.broadcast %45 : vector<1x512xf32> to vector<8x512xf32>
    %47 = arith.mulf %35, %46 : vector<8x512xf32>
    %c0_23 = arith.constant 0 : index
    %c0_24 = arith.constant 0 : index
    %48 = vector.load %arg6[%c0_23, %c0_24] : memref<1x512xf32, #tpu.memory_space<vmem>>, vector<1x512xf32>
    %49 = vector.broadcast %48 : vector<1x512xf32> to vector<8x512xf32>
    %50 = arith.addf %47, %49 : vector<8x512xf32>
    %cst_25 = arith.constant 0.000000e+00 : f32
    %51 = vector.broadcast %cst_25 : f32 to vector<8x512xf32>
    %52 = arith.maximumf %50, %51 : vector<8x512xf32>
    %53 = arith.truncf %52 : vector<8x512xf32> to vector<8x512xbf16>
    %c0_26 = arith.constant 0 : index
    %c0_27 = arith.constant 0 : index
    %54 = vector.load %arg7[%c0_26, %c0_27] : memref<512x256xbf16, #tpu.memory_space<vmem>>, vector<512x256xbf16>
    %cst_28 = arith.constant dense<0.000000e+00> : vector<8x256xf32>
    %55 = tpu.matmul %53, %54, %cst_28 {dimension_numbers = #tpu.dot_dimension_numbers<[1], [0], [0], [1], [0, 0, 1, 1], [], []>} : vector<8x512xbf16>, vector<512x256xbf16>, vector<8x256xf32> -> vector<8x256xf32>
    %cst_29 = arith.constant dense<0.000000e+00> : vector<256xf32>
    %56 = vector.multi_reduction <add>, %55, %cst_29 [0] : vector<8x256xf32> to vector<256xf32>
    %57 = vector.shape_cast %56 : vector<256xf32> to vector<1x256xf32>
    %cst_30 = arith.constant 8.000000e+00 : f32
    %58 = vector.broadcast %cst_30 : f32 to vector<1x256xf32>
    %59 = arith.divf %57, %58 : vector<1x256xf32>
    %60 = vector.broadcast %59 : vector<1x256xf32> to vector<8x256xf32>
    %61 = arith.subf %55, %60 : vector<8x256xf32>
    %62 = arith.mulf %61, %61 : vector<8x256xf32>
    %cst_31 = arith.constant dense<0.000000e+00> : vector<256xf32>
    %63 = vector.multi_reduction <add>, %62, %cst_31 [0] : vector<8x256xf32> to vector<256xf32>
    %64 = vector.shape_cast %63 : vector<256xf32> to vector<1x256xf32>
    %cst_32 = arith.constant 8.000000e+00 : f32
    %65 = vector.broadcast %cst_32 : f32 to vector<1x256xf32>
    %66 = arith.divf %64, %65 : vector<1x256xf32>
    %c0_33 = arith.constant 0 : index
    %c0_34 = arith.constant 0 : index
    %67 = vector.load %arg8[%c0_33, %c0_34] : memref<1x256xf32, #tpu.memory_space<vmem>>, vector<1x256xf32>
    %cst_35 = arith.constant 9.99999974E-6 : f32
    %68 = vector.broadcast %cst_35 : f32 to vector<1x256xf32>
    %69 = arith.addf %66, %68 : vector<1x256xf32>
    %70 = math.rsqrt %69 : vector<1x256xf32>
    %71 = arith.mulf %67, %70 : vector<1x256xf32>
    %72 = vector.broadcast %71 : vector<1x256xf32> to vector<8x256xf32>
    %73 = arith.mulf %61, %72 : vector<8x256xf32>
    %c0_36 = arith.constant 0 : index
    %c0_37 = arith.constant 0 : index
    %74 = vector.load %arg9[%c0_36, %c0_37] : memref<1x256xf32, #tpu.memory_space<vmem>>, vector<1x256xf32>
    %75 = vector.broadcast %74 : vector<1x256xf32> to vector<8x256xf32>
    %76 = arith.addf %73, %75 : vector<8x256xf32>
    %77 = arith.truncf %76 : vector<8x256xf32> to vector<8x256xbf16>
    %c0_38 = arith.constant 0 : index
    %c0_39 = arith.constant 0 : index
    %78 = vector.load %arg10[%c0_38, %c0_39] : memref<256x512xbf16, #tpu.memory_space<vmem>>, vector<256x512xbf16>
    %cst_40 = arith.constant dense<0.000000e+00> : vector<8x512xf32>
    %79 = tpu.matmul %77, %78, %cst_40 {dimension_numbers = #tpu.dot_dimension_numbers<[1], [0], [0], [1], [0, 0, 1, 1], [], []>} : vector<8x256xbf16>, vector<256x512xbf16>, vector<8x512xf32> -> vector<8x512xf32>
    %cst_41 = arith.constant dense<0.000000e+00> : vector<512xf32>
    %80 = vector.multi_reduction <add>, %79, %cst_41 [0] : vector<8x512xf32> to vector<512xf32>
    %81 = vector.shape_cast %80 : vector<512xf32> to vector<1x512xf32>
    %cst_42 = arith.constant 8.000000e+00 : f32
    %82 = vector.broadcast %cst_42 : f32 to vector<1x512xf32>
    %83 = arith.divf %81, %82 : vector<1x512xf32>
    %84 = vector.broadcast %83 : vector<1x512xf32> to vector<8x512xf32>
    %85 = arith.subf %79, %84 : vector<8x512xf32>
    %86 = arith.mulf %85, %85 : vector<8x512xf32>
    %cst_43 = arith.constant dense<0.000000e+00> : vector<512xf32>
    %87 = vector.multi_reduction <add>, %86, %cst_43 [0] : vector<8x512xf32> to vector<512xf32>
    %88 = vector.shape_cast %87 : vector<512xf32> to vector<1x512xf32>
    %cst_44 = arith.constant 8.000000e+00 : f32
    %89 = vector.broadcast %cst_44 : f32 to vector<1x512xf32>
    %90 = arith.divf %88, %89 : vector<1x512xf32>
    %c0_45 = arith.constant 0 : index
    %c0_46 = arith.constant 0 : index
    %91 = vector.load %arg11[%c0_45, %c0_46] : memref<1x512xf32, #tpu.memory_space<vmem>>, vector<1x512xf32>
    %cst_47 = arith.constant 9.99999974E-6 : f32
    %92 = vector.broadcast %cst_47 : f32 to vector<1x512xf32>
    %93 = arith.addf %90, %92 : vector<1x512xf32>
    %94 = math.rsqrt %93 : vector<1x512xf32>
    %95 = arith.mulf %91, %94 : vector<1x512xf32>
    %96 = vector.broadcast %95 : vector<1x512xf32> to vector<8x512xf32>
    %97 = arith.mulf %85, %96 : vector<8x512xf32>
    %c0_48 = arith.constant 0 : index
    %c0_49 = arith.constant 0 : index
    %98 = vector.load %arg12[%c0_48, %c0_49] : memref<1x512xf32, #tpu.memory_space<vmem>>, vector<1x512xf32>
    %99 = vector.broadcast %98 : vector<1x512xf32> to vector<8x512xf32>
    %100 = arith.addf %97, %99 : vector<8x512xf32>
    %cst_50 = arith.constant 0.000000e+00 : f32
    %101 = vector.broadcast %cst_50 : f32 to vector<8x512xf32>
    %102 = arith.maximumf %100, %101 : vector<8x512xf32>
    %103 = arith.truncf %102 : vector<8x512xf32> to vector<8x512xbf16>
    %c0_51 = arith.constant 0 : index
    %c0_52 = arith.constant 0 : index
    %104 = vector.load %arg13[%c0_51, %c0_52] : memref<512x512xbf16, #tpu.memory_space<vmem>>, vector<512x512xbf16>
    %cst_53 = arith.constant dense<0.000000e+00> : vector<8x512xf32>
    %105 = tpu.matmul %103, %104, %cst_53 {dimension_numbers = #tpu.dot_dimension_numbers<[1], [0], [0], [1], [0, 0, 1, 1], [], []>} : vector<8x512xbf16>, vector<512x512xbf16>, vector<8x512xf32> -> vector<8x512xf32>
    %cst_54 = arith.constant dense<0.000000e+00> : vector<512xf32>
    %106 = vector.multi_reduction <add>, %105, %cst_54 [0] : vector<8x512xf32> to vector<512xf32>
    %107 = vector.shape_cast %106 : vector<512xf32> to vector<1x512xf32>
    %cst_55 = arith.constant 8.000000e+00 : f32
    %108 = vector.broadcast %cst_55 : f32 to vector<1x512xf32>
    %109 = arith.divf %107, %108 : vector<1x512xf32>
    %110 = vector.broadcast %109 : vector<1x512xf32> to vector<8x512xf32>
    %111 = arith.subf %105, %110 : vector<8x512xf32>
    %112 = arith.mulf %111, %111 : vector<8x512xf32>
    %cst_56 = arith.constant dense<0.000000e+00> : vector<512xf32>
    %113 = vector.multi_reduction <add>, %112, %cst_56 [0] : vector<8x512xf32> to vector<512xf32>
    %114 = vector.shape_cast %113 : vector<512xf32> to vector<1x512xf32>
    %cst_57 = arith.constant 8.000000e+00 : f32
    %115 = vector.broadcast %cst_57 : f32 to vector<1x512xf32>
    %116 = arith.divf %114, %115 : vector<1x512xf32>
    %c0_58 = arith.constant 0 : index
    %c0_59 = arith.constant 0 : index
    %117 = vector.load %arg14[%c0_58, %c0_59] : memref<1x512xf32, #tpu.memory_space<vmem>>, vector<1x512xf32>
    %cst_60 = arith.constant 9.99999974E-6 : f32
    %118 = vector.broadcast %cst_60 : f32 to vector<1x512xf32>
    %119 = arith.addf %116, %118 : vector<1x512xf32>
    %120 = math.rsqrt %119 : vector<1x512xf32>
    %121 = arith.mulf %117, %120 : vector<1x512xf32>
    %122 = vector.broadcast %121 : vector<1x512xf32> to vector<8x512xf32>
    %123 = arith.mulf %111, %122 : vector<8x512xf32>
    %c0_61 = arith.constant 0 : index
    %c0_62 = arith.constant 0 : index
    %124 = vector.load %arg15[%c0_61, %c0_62] : memref<1x512xf32, #tpu.memory_space<vmem>>, vector<1x512xf32>
    %125 = vector.broadcast %124 : vector<1x512xf32> to vector<8x512xf32>
    %126 = arith.addf %123, %125 : vector<8x512xf32>
    %cst_63 = arith.constant 0.000000e+00 : f32
    %127 = vector.broadcast %cst_63 : f32 to vector<8x512xf32>
    %128 = arith.maximumf %126, %127 : vector<8x512xf32>
    %129 = arith.truncf %128 : vector<8x512xf32> to vector<8x512xbf16>
    %c0_64 = arith.constant 0 : index
    %c0_65 = arith.constant 0 : index
    %130 = vector.load %arg16[%c0_64, %c0_65] : memref<512x128xbf16, #tpu.memory_space<vmem>>, vector<512x128xbf16>
    %cst_66 = arith.constant dense<0.000000e+00> : vector<8x128xf32>
    %131 = tpu.matmul %129, %130, %cst_66 {dimension_numbers = #tpu.dot_dimension_numbers<[1], [0], [0], [1], [0, 0, 1, 1], [], []>} : vector<8x512xbf16>, vector<512x128xbf16>, vector<8x128xf32> -> vector<8x128xf32>
    %cst_67 = arith.constant dense<0.000000e+00> : vector<128xf32>
    %132 = vector.multi_reduction <add>, %131, %cst_67 [0] : vector<8x128xf32> to vector<128xf32>
    %133 = vector.shape_cast %132 : vector<128xf32> to vector<1x128xf32>
    %cst_68 = arith.constant 8.000000e+00 : f32
    %134 = vector.broadcast %cst_68 : f32 to vector<1x128xf32>
    %135 = arith.divf %133, %134 : vector<1x128xf32>
    %136 = vector.broadcast %135 : vector<1x128xf32> to vector<8x128xf32>
    %137 = arith.subf %131, %136 : vector<8x128xf32>
    %138 = arith.mulf %137, %137 : vector<8x128xf32>
    %cst_69 = arith.constant dense<0.000000e+00> : vector<128xf32>
    %139 = vector.multi_reduction <add>, %138, %cst_69 [0] : vector<8x128xf32> to vector<128xf32>
    %140 = vector.shape_cast %139 : vector<128xf32> to vector<1x128xf32>
    %cst_70 = arith.constant 8.000000e+00 : f32
    %141 = vector.broadcast %cst_70 : f32 to vector<1x128xf32>
    %142 = arith.divf %140, %141 : vector<1x128xf32>
    %c0_71 = arith.constant 0 : index
    %c0_72 = arith.constant 0 : index
    %143 = vector.load %arg17[%c0_71, %c0_72] : memref<1x128xf32, #tpu.memory_space<vmem>>, vector<1x128xf32>
    %cst_73 = arith.constant 9.99999974E-6 : f32
    %144 = vector.broadcast %cst_73 : f32 to vector<1x128xf32>
    %145 = arith.addf %142, %144 : vector<1x128xf32>
    %146 = math.rsqrt %145 : vector<1x128xf32>
    %147 = arith.mulf %143, %146 : vector<1x128xf32>
    %148 = vector.broadcast %147 : vector<1x128xf32> to vector<8x128xf32>
    %149 = arith.mulf %137, %148 : vector<8x128xf32>
    %c0_74 = arith.constant 0 : index
    %c0_75 = arith.constant 0 : index
    %150 = vector.load %arg18[%c0_74, %c0_75] : memref<1x128xf32, #tpu.memory_space<vmem>>, vector<1x128xf32>
    %151 = vector.broadcast %150 : vector<1x128xf32> to vector<8x128xf32>
    %152 = arith.addf %149, %151 : vector<8x128xf32>
    %153 = arith.negf %152 : vector<8x128xf32>
    %154 = math.exp %153 : vector<8x128xf32>
    %cst_76 = arith.constant 1.000000e+00 : f32
    %155 = vector.broadcast %cst_76 : f32 to vector<8x128xf32>
    %156 = arith.addf %155, %154 : vector<8x128xf32>
    %157 = arith.divf %155, %156 : vector<8x128xf32>
    %c0_77 = arith.constant 0 : index
    %c0_78 = arith.constant 0 : index
    %158 = vector.load %arg19[%c0_77, %c0_78] : memref<8x128xf32, #tpu.memory_space<vmem>>, vector<8x128xf32>
    tpu.vector_store %arg19[%c0_77, %c0_78], %157 {strides = array<i32>} : memref<8x128xf32, #tpu.memory_space<vmem>>, vector<8x128xf32>,
    return
  }
}

</mosaic_0001>

<llo_original>
// kernel: tpu_custom_call.1
$region0: #{tpu_custom_call.1}
  #allocation0 [shape = 'u32[]', space=smem, size = 0x4, offset = 0x4, fixed_abs, tag = 'smem constant byte address 0x4 - core index']
  #allocation1 [shape = 'u32[144,128]{1,0:T(1,128)}', space=vmem, size = 0x12000, scoped, tag = 'internal scratch']
  %s0 = inlined_call_operand.hbm [shape: f32[8,64], index: 0, kind: input, shape index: {}]
  %s1 = inlined_call_operand.hbm [shape: bf16[64,512], index: 1, kind: input, shape index: {}]
  %s2 = inlined_call_operand.hbm [shape: f32[1,512], index: 2, kind: input, shape index: {}]
  %s3 = inlined_call_operand.vmem [shape: f32[1,512], index: 3, kind: input, shape index: {}]
  %s4 = inlined_call_operand.hbm [shape: bf16[512,512], index: 4, kind: input, shape index: {}]
  %s5 = inlined_call_operand.vmem [shape: f32[1,512], index: 5, kind: input, shape index: {}]
  %s6 = inlined_call_operand.hbm [shape: f32[1,512], index: 6, kind: input, shape index: {}]
  %s7 = inlined_call_operand.hbm [shape: bf16[512,256], index: 7, kind: input, shape index: {}]
  %s8 = inlined_call_operand.hbm [shape: f32[1,256], index: 8, kind: input, shape index: {}]
  %s9 = inlined_call_operand.hbm [shape: f32[1,256], index: 9, kind: input, shape index: {}]
  %s10 = inlined_call_operand.hbm [shape: bf16[256,512], index: 10, kind: input, shape index: {}]
  %s11 = inlined_call_operand.vmem [shape: f32[1,512], index: 11, kind: input, shape index: {}]
  %s12 = inlined_call_operand.vmem [shape: f32[1,512], index: 12, kind: input, shape index: {}]
  %s13 = inlined_call_operand.hbm [shape: bf16[512,512], index: 13, kind: input, shape index: {}]
  %s14 = inlined_call_operand.vmem [shape: f32[1,512], index: 14, kind: input, shape index: {}]
  %s15 = inlined_call_operand.vmem [shape: f32[1,512], index: 15, kind: input, shape index: {}]
  %s16 = inlined_call_operand.hbm [shape: bf16[512,128], index: 16, kind: input, shape index: {}]
  %s17 = inlined_call_operand.vmem [shape: f32[1,128], index: 17, kind: input, shape index: {}]
  %s18 = inlined_call_operand.vmem [shape: f32[1,128], index: 18, kind: input, shape index: {}]
  %s19 = inlined_call_operand.hbm [shape: f32[8,128], index: 19, kind: output, shape index: {}]
  %s20 = sld [smem:[#allocation0]]
  $region130: #{tpu_custom_call.1} parent=0
    _
  %s22 = ssub.s32 1, %s20
  %s23 = scalar_select 0, %s22, %s20
  $region1: #{tpu_custom_call.1} parent=0
    #allocation2 [shape = 'u8[4096]{0}', space=vmem, size = 0x1000, scoped, tag = 'input window, operand 0, single buffered']
    #allocation3 [shape = 's32[1]{0}', space=sflag, size = 0x4, scoped, tag = 'scoped memory for tpu_custom_call.1']
    #allocation4 [shape = 's32[1]{0}', space=sflag, size = 0x4, scoped, tag = 'scoped memory for tpu_custom_call.1']
    #allocation5 [shape = 'u8[65536]{0}', space=vmem, size = 0x10000, scoped, tag = 'input window, operand 1, single buffered']
    #allocation6 [shape = 's32[1]{0}', space=sflag, size = 0x4, scoped, tag = 'scoped memory for tpu_custom_call.1']
    #allocation7 [shape = 'u8[2048]{0}', space=vmem, size = 0x800, scoped, tag = 'input window, operand 2, single buffered']
    #allocation8 [shape = 'u8[524288]{0}', space=vmem, size = 0x80000, scoped, tag = 'input window, operand 4, single buffered']
    #allocation9 [shape = 's32[1]{0}', space=sflag, size = 0x4, scoped, tag = 'scoped memory for tpu_custom_call.1']
    #allocation10 [shape = 'u8[2048]{0}', space=vmem, size = 0x800, scoped, tag = 'input window, operand 6, single buffered']
    #allocation11 [shape = 'u8[262144]{0}', space=vmem, size = 0x40000, scoped, tag = 'input window, operand 7, single buffered']
    #allocation12 [shape = 's32[1]{0}', space=sflag, size = 0x4, scoped, tag = 'scoped memory for tpu_custom_call.1']
    #allocation13 [shape = 'u8[1024]{0}', space=vmem, size = 0x400, scoped, tag = 'input window, operand 8, single buffered']
    #allocation14 [shape = 'u8[1024]{0}', space=vmem, size = 0x400, scoped, tag = 'input window, operand 9, single buffered']
    #allocation15 [shape = 's32[1]{0}', space=sflag, size = 0x4, scoped, tag = 'scoped memory for tpu_custom_call.1']
    #allocation16 [shape = 'u8[262144]{0}', space=vmem, size = 0x40000, scoped, tag = 'input window, operand 10, single buffered']
    #allocation17 [shape = 'u8[524288]{0}', space=vmem, size = 0x80000, scoped, tag = 'input window, operand 13, single buffered']
    #allocation18 [shape = 's32[1]{0}', space=sflag, size = 0x4, scoped, tag = 'scoped memory for tpu_custom_call.1']
    #allocation19 [shape = 'u8[131072]{0}', space=vmem, size = 0x20000, scoped, tag = 'input window, operand 16, single buffered']
    #allocation20 [shape = 'u8[4096]{0}', space=vmem, size = 0x1000, scoped, tag = 'output window, operand 0, single buffered']
    %24 = vsyncpa [#allocation3], 0
    %25 = vsyncpa [#allocation6], 0
    %26 = vsyncpa [#allocation9], 0
    %27 = vsyncpa [#allocation12], 0
    %28 = vsyncpa [#allocation15], 0
    %29 = vsyncpa [#allocation18], 0
    %30 = vsyncpa [#allocation4], 0
    // Predicated region
    $region2: #{tpu_custom_call.1} parent=1 // pred_check
      _
    $region3: #{tpu_custom_call.1} parent=1 // pred_check_branch
      %32 = sbr.rel (0) target = $region5
    $region4: #{tpu_custom_call.1} parent=1 // pred_region
      %s34 = ssub.s32 128, 128
      %35 = vsyncadd [#allocation3], %s34
      %s37 = sshll.u32 [#allocation2], 4
      %s38 = int_to_ptr.vmem [resolvable:$true] %s37
      %40 = dma.hbm_to_vmem [thread:$0]  %s0, 128, %s38, [#allocation3]
    $region5: #{tpu_custom_call.1} parent=1 // pred_fallthru
      _
    // Predicated region
    $region6: #{tpu_custom_call.1} parent=1 // pred_check
      _
    $region7: #{tpu_custom_call.1} parent=1 // pred_check_branch
      %42 = sbr.rel (0) target = $region9
    $region8: #{tpu_custom_call.1} parent=1 // pred_region
      %s44 = ssub.s32 2048, 2048
      %45 = vsyncadd [#allocation6], %s44
      %s46 = sshll.u32 [#allocation5], 4
      %s47 = int_to_ptr.vmem [resolvable:$true] %s46
      %52 = dma.hbm_to_vmem [thread:$0]  %s1, 2048, %s47, [#allocation6], 256, 256, 16
    $region9: #{tpu_custom_call.1} parent=1 // pred_fallthru
      _
    // Predicated region
    $region10: #{tpu_custom_call.1} parent=1 // pred_check
      _
    $region11: #{tpu_custom_call.1} parent=1 // pred_check_branch
      %54 = sbr.rel (0) target = $region13
    $region12: #{tpu_custom_call.1} parent=1 // pred_region
      %s56 = ssub.s32 64, 64
      %57 = vsyncadd [#allocation6], %s56
      %s59 = sshll.u32 [#allocation7], 4
      %s60 = int_to_ptr.vmem [resolvable:$true] %s59
      %62 = dma.hbm_to_vmem [thread:$0]  %s2, 64, %s60, [#allocation6]
    $region13: #{tpu_custom_call.1} parent=1 // pred_fallthru
      _
    // Predicated region
    $region14: #{tpu_custom_call.1} parent=1 // pred_check
      _
    $region15: #{tpu_custom_call.1} parent=1 // pred_check_branch
      %64 = sbr.rel (0) target = $region17
    $region16: #{tpu_custom_call.1} parent=1 // pred_region
      _
    $region17: #{tpu_custom_call.1} parent=1 // pred_fallthru
      _
    // Predicated region
    $region18: #{tpu_custom_call.1} parent=1 // pred_check
      _
    $region19: #{tpu_custom_call.1} parent=1 // pred_check_branch
      %66 = sbr.rel (0) target = $region21
    $region20: #{tpu_custom_call.1} parent=1 // pred_region
      %s68 = ssub.s32 16384, 16384
      %69 = vsyncadd [#allocation9], %s68
      %s70 = sshll.u32 [#allocation8], 4
      %s71 = int_to_ptr.vmem [resolvable:$true] %s70
      %76 = dma.hbm_to_vmem [thread:$0]  %s4, 16384, %s71, [#allocation9], 256, 256, 16
    $region21: #{tpu_custom_call.1} parent=1 // pred_fallthru
      _
    // Predicated region
    $region22: #{tpu_custom_call.1} parent=1 // pred_check
      _
    $region23: #{tpu_custom_call.1} parent=1 // pred_check_branch
      %78 = sbr.rel (0) target = $region25
    $region24: #{tpu_custom_call.1} parent=1 // pred_region
      _
    $region25: #{tpu_custom_call.1} parent=1 // pred_fallthru
      _
    // Predicated region
    $region26: #{tpu_custom_call.1} parent=1 // pred_check
      _
    $region27: #{tpu_custom_call.1} parent=1 // pred_check_branch
      %80 = sbr.rel (0) target = $region29
    $region28: #{tpu_custom_call.1} parent=1 // pred_region
      %s82 = ssub.s32 64, 64
      %83 = vsyncadd [#allocation9], %s82
      %s85 = sshll.u32 [#allocation10], 4
      %s86 = int_to_ptr.vmem [resolvable:$true] %s85
      %88 = dma.hbm_to_vmem [thread:$0]  %s6, 64, %s86, [#allocation9]
    $region29: #{tpu_custom_call.1} parent=1 // pred_fallthru
      _
    // Predicated region
    $region30: #{tpu_custom_call.1} parent=1 // pred_check
      _
    $region31: #{tpu_custom_call.1} parent=1 // pred_check_branch
      %90 = sbr.rel (0) target = $region33
    $region32: #{tpu_custom_call.1} parent=1 // pred_region
      %s92 = ssub.s32 8192, 8192
      %93 = vsyncadd [#allocation12], %s92
      %s94 = sshll.u32 [#allocation11], 4
      %s95 = int_to_ptr.vmem [resolvable:$true] %s94
      %100 = dma.hbm_to_vmem [thread:$0]  %s7, 8192, %s95, [#allocation12], 128, 128, 8
    $region33: #{tpu_custom_call.1} parent=1 // pred_fallthru
      _
    // Predicated region
    $region34: #{tpu_custom_call.1} parent=1 // pred_check
      _
    $region35: #{tpu_custom_call.1} parent=1 // pred_check_branch
      %102 = sbr.rel (0) target = $region37
    $region36: #{tpu_custom_call.1} parent=1 // pred_region
      %s104 = ssub.s32 32, 32
      %105 = vsyncadd [#allocation12], %s104
      %s107 = sshll.u32 [#allocation13], 4
      %s108 = int_to_ptr.vmem [resolvable:$true] %s107
      %110 = dma.hbm_to_vmem [thread:$0]  %s8, 32, %s108, [#allocation12]
    $region37: #{tpu_custom_call.1} parent=1 // pred_fallthru
      _
    // Predicated region
    $region38: #{tpu_custom_call.1} parent=1 // pred_check
      _
    $region39: #{tpu_custom_call.1} parent=1 // pred_check_branch
      %112 = sbr.rel (0) target = $region41
    $region40: #{tpu_custom_call.1} parent=1 // pred_region
      %s114 = ssub.s32 32, 32
      %115 = vsyncadd [#allocation15], %s114
      %s117 = sshll.u32 [#allocation14], 4
      %s118 = int_to_ptr.vmem [resolvable:$true] %s117
      %120 = dma.hbm_to_vmem [thread:$0]  %s9, 32, %s118, [#allocation15]
    $region41: #{tpu_custom_call.1} parent=1 // pred_fallthru
      _
    // Predicated region
    $region42: #{tpu_custom_call.1} parent=1 // pred_check
      _
    $region43: #{tpu_custom_call.1} parent=1 // pred_check_branch
      %122 = sbr.rel (0) target = $region45
    $region44: #{tpu_custom_call.1} parent=1 // pred_region
      %s124 = ssub.s32 8192, 8192
      %125 = vsyncadd [#allocation15], %s124
      %s126 = sshll.u32 [#allocation16], 4
      %s127 = int_to_ptr.vmem [resolvable:$true] %s126
      %132 = dma.hbm_to_vmem [thread:$0]  %s10, 8192, %s127, [#allocation15], 256, 256, 16
    $region45: #{tpu_custom_call.1} parent=1 // pred_fallthru
      _
    // Predicated region
    $region46: #{tpu_custom_call.1} parent=1 // pred_check
      _
    $region47: #{tpu_custom_call.1} parent=1 // pred_check_branch
      %134 = sbr.rel (0) target = $region49
    $region48: #{tpu_custom_call.1} parent=1 // pred_region
      _
    $region49: #{tpu_custom_call.1} parent=1 // pred_fallthru
      _
    // Predicated region
    $region50: #{tpu_custom_call.1} parent=1 // pred_check
      _
    $region51: #{tpu_custom_call.1} parent=1 // pred_check_branch
      %136 = sbr.rel (0) target = $region53
    $region52: #{tpu_custom_call.1} parent=1 // pred_region
      _
    $region53: #{tpu_custom_call.1} parent=1 // pred_fallthru
      _
    // Predicated region
    $region54: #{tpu_custom_call.1} parent=1 // pred_check
      _
    $region55: #{tpu_custom_call.1} parent=1 // pred_check_branch
      %138 = sbr.rel (0) target = $region57
    $region56: #{tpu_custom_call.1} parent=1 // pred_region
      %s140 = ssub.s32 16384, 16384
      %141 = vsyncadd [#allocation18], %s140
      %s142 = sshll.u32 [#allocation17], 4
      %s143 = int_to_ptr.vmem [resolvable:$true] %s142
      %148 = dma.hbm_to_vmem [thread:$0]  %s13, 16384, %s143, [#allocation18], 256, 256, 16
    $region57: #{tpu_custom_call.1} parent=1 // pred_fallthru
      _
    // Predicated region
    $region58: #{tpu_custom_call.1} parent=1 // pred_check
      _
    $region59: #{tpu_custom_call.1} parent=1 // pred_check_branch
      %150 = sbr.rel (0) target = $region61
    $region60: #{tpu_custom_call.1} parent=1 // pred_region
      _
    $region61: #{tpu_custom_call.1} parent=1 // pred_fallthru
      _
    // Predicated region
    $region62: #{tpu_custom_call.1} parent=1 // pred_check
      _
    $region63: #{tpu_custom_call.1} parent=1 // pred_check_branch
      %152 = sbr.rel (0) target = $region65
    $region64: #{tpu_custom_call.1} parent=1 // pred_region
      _
    $region65: #{tpu_custom_call.1} parent=1 // pred_fallthru
      _
    // Predicated region
    $region66: #{tpu_custom_call.1} parent=1 // pred_check
      _
    $region67: #{tpu_custom_call.1} parent=1 // pred_check_branch
      %154 = sbr.rel (0) target = $region69
    $region68: #{tpu_custom_call.1} parent=1 // pred_region
      %s156 = ssub.s32 4096, 4096
      %157 = vsyncadd [#allocation18], %s156
      %s158 = sshll.u32 [#allocation19], 4
      %s159 = int_to_ptr.vmem [resolvable:$true] %s158
      %164 = dma.hbm_to_vmem [thread:$0]  %s16, 4096, %s159, [#allocation18], 64, 64, 4
    $region69: #{tpu_custom_call.1} parent=1 // pred_fallthru
      _
    // Predicated region
    $region70: #{tpu_custom_call.1} parent=1 // pred_check
      _
    $region71: #{tpu_custom_call.1} parent=1 // pred_check_branch
      %166 = sbr.rel (0) target = $region73
    $region72: #{tpu_custom_call.1} parent=1 // pred_region
      _
    $region73: #{tpu_custom_call.1} parent=1 // pred_fallthru
      _
    // Predicated region
    $region74: #{tpu_custom_call.1} parent=1 // pred_check
      _
    $region75: #{tpu_custom_call.1} parent=1 // pred_check_branch
      %168 = sbr.rel (0) target = $region77
    $region76: #{tpu_custom_call.1} parent=1 // pred_region
      _
    $region77: #{tpu_custom_call.1} parent=1 // pred_fallthru
      _
    // Predicated region
    $region78: #{tpu_custom_call.1} parent=1 // pred_check
      _
    $region79: #{tpu_custom_call.1} parent=1 // pred_check_branch
      %170 = sbr.rel (0) target = $region81
    $region80: #{tpu_custom_call.1} parent=1 // pred_region
      %171 = dma.done [#allocation3], 128
    $region81: #{tpu_custom_call.1} parent=1 // pred_fallthru
      _
    // Predicated region
    $region82: #{tpu_custom_call.1} parent=1 // pred_check
      _
    $region83: #{tpu_custom_call.1} parent=1 // pred_check_branch
      %173 = sbr.rel (0) target = $region85
    $region84: #{tpu_custom_call.1} parent=1 // pred_region
      %174 = dma.done [#allocation6], 2048
    $region85: #{tpu_custom_call.1} parent=1 // pred_fallthru
      _
    // Predicated region
    $region86: #{tpu_custom_call.1} parent=1 // pred_check
      _
    $region87: #{tpu_custom_call.1} parent=1 // pred_check_branch
      %176 = sbr.rel (0) target = $region89
    $region88: #{tpu_custom_call.1} parent=1 // pred_region
      %177 = dma.done [#allocation6], 64
    $region89: #{tpu_custom_call.1} parent=1 // pred_fallthru
      _
    // Predicated region
    $region90: #{tpu_custom_call.1} parent=1 // pred_check
      _
    $region91: #{tpu_custom_call.1} parent=1 // pred_check_branch
      %179 = sbr.rel (0) target = $region93
    $region92: #{tpu_custom_call.1} parent=1 // pred_region
      %180 = dma.done [#allocation9], 16384
    $region93: #{tpu_custom_call.1} parent=1 // pred_fallthru
      _
    // Predicated region
    $region94: #{tpu_custom_call.1} parent=1 // pred_check
      _
    $region95: #{tpu_custom_call.1} parent=1 // pred_check_branch
      %182 = sbr.rel (0) target = $region97
    $region96: #{tpu_custom_call.1} parent=1 // pred_region
      %183 = dma.done [#allocation9], 64
    $region97: #{tpu_custom_call.1} parent=1 // pred_fallthru
      _
    // Predicated region
    $region98: #{tpu_custom_call.1} parent=1 // pred_check
      _
    $region99: #{tpu_custom_call.1} parent=1 // pred_check_branch
      %185 = sbr.rel (0) target = $region101
    $region100: #{tpu_custom_call.1} parent=1 // pred_region
      %186 = dma.done [#allocation12], 8192
    $region101: #{tpu_custom_call.1} parent=1 // pred_fallthru
      _
    // Predicated region
    $region102: #{tpu_custom_call.1} parent=1 // pred_check
      _
    $region103: #{tpu_custom_call.1} parent=1 // pred_check_branch
      %188 = sbr.rel (0) target = $region105
    $region104: #{tpu_custom_call.1} parent=1 // pred_region
      %189 = dma.done [#allocation12], 32
    $region105: #{tpu_custom_call.1} parent=1 // pred_fallthru
      _
    // Predicated region
    $region106: #{tpu_custom_call.1} parent=1 // pred_check
      _
    $region107: #{tpu_custom_call.1} parent=1 // pred_check_branch
      %191 = sbr.rel (0) target = $region109
    $region108: #{tpu_custom_call.1} parent=1 // pred_region
      %192 = dma.done [#allocation15], 32
    $region109: #{tpu_custom_call.1} parent=1 // pred_fallthru
      _
    // Predicated region
    $region110: #{tpu_custom_call.1} parent=1 // pred_check
      _
    $region111: #{tpu_custom_call.1} parent=1 // pred_check_branch
      %194 = sbr.rel (0) target = $region113
    $region112: #{tpu_custom_call.1} parent=1 // pred_region
      %195 = dma.done [#allocation15], 8192
    $region113: #{tpu_custom_call.1} parent=1 // pred_fallthru
      _
    // Predicated region
    $region114: #{tpu_custom_call.1} parent=1 // pred_check
      _
    $region115: #{tpu_custom_call.1} parent=1 // pred_check_branch
      %197 = sbr.rel (0) target = $region117
    $region116: #{tpu_custom_call.1} parent=1 // pred_region
      %198 = dma.done [#allocation18], 16384
    $region117: #{tpu_custom_call.1} parent=1 // pred_fallthru
      _
    // Predicated region
    $region118: #{tpu_custom_call.1} parent=1 // pred_check
      _
    $region119: #{tpu_custom_call.1} parent=1 // pred_check_branch
      %200 = sbr.rel (0) target = $region121
    $region120: #{tpu_custom_call.1} parent=1 // pred_region
      %201 = dma.done [#allocation18], 4096
    $region121: #{tpu_custom_call.1} parent=1 // pred_fallthru
      _
    %v203 = vld [vmem:[#allocation2] sm:$0xff]
    %v204 = vpack.c.bf16 %v203, %v203
    %v205 = vld [vmem:[#allocation5] sm:$0xff]
    %v206 = vld [vmem:[#allocation5 + $0x8] sm:$0xff]
    %v207 = vld [vmem:[#allocation5 + $0x10] sm:$0xff]
    %v208 = vld [vmem:[#allocation5 + $0x18] sm:$0xff]
    %v209 = vld [vmem:[#allocation5 + $0x20] sm:$0xff]
    %v210 = vld [vmem:[#allocation5 + $0x28] sm:$0xff]
    %v211 = vld [vmem:[#allocation5 + $0x30] sm:$0xff]
    %v212 = vld [vmem:[#allocation5 + $0x38] sm:$0xff]
    %v213 = vld [vmem:[#allocation5 + $0x40] sm:$0xff]
    %v214 = vld [vmem:[#allocation5 + $0x48] sm:$0xff]
    %v215 = vld [vmem:[#allocation5 + $0x50] sm:$0xff]
    %v216 = vld [vmem:[#allocation5 + $0x58] sm:$0xff]
    %v217 = vld [vmem:[#allocation5 + $0x60] sm:$0xff]
    %v218 = vld [vmem:[#allocation5 + $0x68] sm:$0xff]
    %v219 = vld [vmem:[#allocation5 + $0x70] sm:$0xff]
    %v220 = vld [vmem:[#allocation5 + $0x78] sm:$0xff]
    %v237 = vunpack.c.l.b16 %v205
    %v238 = vunpack.c.h.b16 %v205
    %v239 = vunpack.c.l.b16 %v206
    %v240 = vunpack.c.h.b16 %v206
    %v241 = vunpack.c.l.b16 %v207
    %v242 = vunpack.c.h.b16 %v207
    %v243 = vunpack.c.l.b16 %v208
    %v244 = vunpack.c.h.b16 %v208
    %v245 = vunpack.c.l.b16 %v209
    %v246 = vunpack.c.h.b16 %v209
    %v247 = vunpack.c.l.b16 %v210
    %v248 = vunpack.c.h.b16 %v210
    %v249 = vunpack.c.l.b16 %v211
    %v250 = vunpack.c.h.b16 %v211
    %v251 = vunpack.c.l.b16 %v212
    %v252 = vunpack.c.h.b16 %v212
    %v253 = vunpack.c.l.b16 %v213
    %v254 = vunpack.c.h.b16 %v213
    %v255 = vunpack.c.l.b16 %v214
    %v256 = vunpack.c.h.b16 %v214
    %v257 = vunpack.c.l.b16 %v215
    %v258 = vunpack.c.h.b16 %v215
    %v259 = vunpack.c.l.b16 %v216
    %v260 = vunpack.c.h.b16 %v216
    %v261 = vunpack.c.l.b16 %v217
    %v262 = vunpack.c.h.b16 %v217
    %v263 = vunpack.c.l.b16 %v218
    %v264 = vunpack.c.h.b16 %v218
    %v265 = vunpack.c.l.b16 %v219
    %v266 = vunpack.c.h.b16 %v219
    %v267 = vunpack.c.l.b16 %v220
    %v268 = vunpack.c.h.b16 %v220
    %v269 = vpack.c.b16 %v241, %v237
    %v270 = vpack.c.b16 %v242, %v238
    %v271 = vpack.c.b16 %v243, %v239
    %v272 = vpack.c.b16 %v244, %v240
    %v273 = vpack.c.b16 %v249, %v245
    %v274 = vpack.c.b16 %v250, %v246
    %v275 = vpack.c.b16 %v251, %v247
    %v276 = vpack.c.b16 %v252, %v248
    %v277 = vpack.c.b16 %v257, %v253
    %v278 = vpack.c.b16 %v258, %v254
    %v279 = vpack.c.b16 %v259, %v255
    %v280 = vpack.c.b16 %v260, %v256
    %v281 = vpack.c.b16 %v265, %v261
    %v282 = vpack.c.b16 %v266, %v262
    %v283 = vpack.c.b16 %v267, %v263
    %v284 = vpack.c.b16 %v268, %v264
    %vm301 = vcmask 523264
    %v303 = vsel %vm301, %v204, 0
    %305 = vmatprep.subr.bf16.mxu0 0
    %306 = vmatpush1.bf16.msra.mxu0 0
    %307 = vmatprep.subr.bf16.mxu0 0
    %308 = vmatpush1.bf16.msra.mxu0 0
    %309 = vmatprep.subr.bf16.mxu0 0
    %310 = vmatpush1.bf16.msra.mxu0 0
    %311 = vmatprep.subr.bf16.mxu0 0
    %312 = vmatpush1.bf16.msra.mxu0 0
    %313 = vmatprep.subr.bf16.mxu0 %v282
    %314 = vmatpush1.bf16.msra.mxu0 %v281
    %315 = vmatprep.subr.bf16.mxu0 %v278
    %316 = vmatpush1.bf16.msra.mxu0 %v277
    %317 = vmatprep.subr.bf16.mxu0 %v274
    %318 = vmatpush1.bf16.msra.mxu0 %v273
    %319 = vmatprep.subr.bf16.mxu0 %v270
    %320 = vmatpush1.bf16.msra.mxu0 %v269
    %321 = vmatprep.subr.bf16.mxu0 0
    %322 = vmatpush2.bf16.msra.mxu0 0
    %323 = vmatprep.subr.bf16.mxu0 0
    %324 = vmatpush2.bf16.msra.mxu0 0
    %325 = vmatprep.subr.bf16.mxu0 0
    %326 = vmatpush2.bf16.msra.mxu0 0
    %327 = vmatprep.subr.bf16.mxu0 0
    %328 = vmatpush2.bf16.msra.mxu0 0
    %329 = vmatprep.subr.bf16.mxu0 0
    %330 = vmatpush2.bf16.msra.mxu0 0
    %331 = vmatprep.subr.bf16.mxu0 0
    %332 = vmatpush2.bf16.msra.mxu0 0
    %333 = vmatprep.subr.bf16.mxu0 0
    %334 = vmatpush2.bf16.msra.mxu0 0
    %335 = vmatprep.subr.bf16.mxu0 0
    %336 = vmatpush2.bf16.msra.mxu0 0
    %337 = vmatprep.mubr.bf16.mxu0 0
    %338 = vmatmul.mubr.bf16.gmra.mxu0 %v303
    %v339 = vpop.f32.mrf.mxu0
    %v340 = vadd.f32 0.0, %v339
    %v341 = vpop.f32.mrf.mxu0
    %v342 = vadd.f32 0.0, %v341
    %v343 = vpop.f32.mrf.mxu0
    %v344 = vpop.f32.mrf.mxu0
    %345 = vdwg.mxu0
    %346 = vmatprep.subr.bf16.mxu0 0
    %347 = vmatpush1.bf16.msra.mxu0 0
    %348 = vmatprep.subr.bf16.mxu0 0
    %349 = vmatpush1.bf16.msra.mxu0 0
    %350 = vmatprep.subr.bf16.mxu0 0
    %351 = vmatpush1.bf16.msra.mxu0 0
    %352 = vmatprep.subr.bf16.mxu0 0
    %353 = vmatpush1.bf16.msra.mxu0 0
    %354 = vmatprep.subr.bf16.mxu0 %v284
    %355 = vmatpush1.bf16.msra.mxu0 %v283
    %356 = vmatprep.subr.bf16.mxu0 %v280
    %357 = vmatpush1.bf16.msra.mxu0 %v279
    %358 = vmatprep.subr.bf16.mxu0 %v276
    %359 = vmatpush1.bf16.msra.mxu0 %v275
    %360 = vmatprep.subr.bf16.mxu0 %v272
    %361 = vmatpush1.bf16.msra.mxu0 %v271
    %362 = vmatprep.subr.bf16.mxu0 0
    %363 = vmatpush2.bf16.msra.mxu0 0
    %364 = vmatprep.subr.bf16.mxu0 0
    %365 = vmatpush2.bf16.msra.mxu0 0
    %366 = vmatprep.subr.bf16.mxu0 0
    %367 = vmatpush2.bf16.msra.mxu0 0
    %368 = vmatprep.subr.bf16.mxu0 0
    %369 = vmatpush2.bf16.msra.mxu0 0
    %370 = vmatprep.subr.bf16.mxu0 0
    %371 = vmatpush2.bf16.msra.mxu0 0
    %372 = vmatprep.subr.bf16.mxu0 0
    %373 = vmatpush2.bf16.msra.mxu0 0
    %374 = vmatprep.subr.bf16.mxu0 0
    %375 = vmatpush2.bf16.msra.mxu0 0
    %376 = vmatprep.subr.bf16.mxu0 0
    %377 = vmatpush2.bf16.msra.mxu0 0
    %378 = vmatprep.mubr.bf16.mxu0 0
    %379 = vmatmul.mubr.bf16.gmra.mxu0 %v303
    %v380 = vpop.f32.mrf.mxu0
    %v381 = vadd.f32 0.0, %v380
    %v382 = vpop.f32.mrf.mxu0
    %v383 = vadd.f32 0.0, %v382
    %v384 = vpop.f32.mrf.mxu0
    %v385 = vpop.f32.mrf.mxu0
    %386 = vdwg.mxu0
    %v387 = vrot.slane %v340, 4
    %v388 = vadd.f32 %v340, %v387
    %v389 = vrot.slane %v388, 2
    %v390 = vadd.f32 %v388, %v389
    %v391 = vrot.slane %v390, 1
    %v392 = vadd.f32 %v390, %v391
    %v393 = vrot.slane %v342, 4
    %v394 = vadd.f32 %v342, %v393
    %v395 = vrot.slane %v394, 2
    %v396 = vadd.f32 %v394, %v395
    %v397 = vrot.slane %v396, 1
    %v398 = vadd.f32 %v396, %v397
    %v399 = vrot.slane %v381, 4
    %v400 = vadd.f32 %v381, %v399
    %v401 = vrot.slane %v400, 2
    %v402 = vadd.f32 %v400, %v401
    %v403 = vrot.slane %v402, 1
    %v404 = vadd.f32 %v402, %v403
    %v405 = vrot.slane %v383, 4
    %v406 = vadd.f32 %v383, %v405
    %v407 = vrot.slane %v406, 2
    %v408 = vadd.f32 %v406, %v407
    %v409 = vrot.slane %v408, 1
    %v410 = vadd.f32 %v408, %v409
    %v411 = vrcp.pop 8.0
    %v412 = vmul.f32 %v392, %v411
    %v413 = vmul.f32 %v398, %v411
    %v414 = vmul.f32 %v404, %v411
    %v415 = vmul.f32 %v410, %v411
    %v416 = vsub.f32 %v340, %v412
    %v417 = vsub.f32 %v342, %v413
    %v418 = vsub.f32 %v381, %v414
    %v419 = vsub.f32 %v383, %v415
    %v420 = vmul.f32 %v416, %v416
    %v421 = vmul.f32 %v417, %v417
    %v422 = vmul.f32 %v418, %v418
    %v423 = vmul.f32 %v419, %v419
    %v424 = vrot.slane %v420, 4
    %v425 = vadd.f32 %v420, %v424
    %v426 = vrot.slane %v425, 2
    %v427 = vadd.f32 %v425, %v426
    %v428 = vrot.slane %v427, 1
    %v429 = vadd.f32 %v427, %v428
    %v430 = vrot.slane %v421, 4
    %v431 = vadd.f32 %v421, %v430
    %v432 = vrot.slane %v431, 2
    %v433 = vadd.f32 %v431, %v432
    %v434 = vrot.slane %v433, 1
    %v435 = vadd.f32 %v433, %v434
    %v436 = vrot.slane %v422, 4
    %v437 = vadd.f32 %v422, %v436
    %v438 = vrot.slane %v437, 2
    %v439 = vadd.f32 %v437, %v438
    %v440 = vrot.slane %v439, 1
    %v441 = vadd.f32 %v439, %v440
    %v442 = vrot.slane %v423, 4
    %v443 = vadd.f32 %v423, %v442
    %v444 = vrot.slane %v443, 2
    %v445 = vadd.f32 %v443, %v444
    %v446 = vrot.slane %v445, 1
    %v447 = vadd.f32 %v445, %v446
    %v448 = vmul.f32 %v429, %v411
    %v449 = vmul.f32 %v435, %v411
    %v450 = vmul.f32 %v441, %v411
    %v451 = vmul.f32 %v447, %v411
    %v452 = vld [vmem:[#allocation7] sm:$0xf]
    %v453 = vadd.f32 %v448, 1e-05
    %v454 = vadd.f32 %v449, 1e-05
    %v455 = vadd.f32 %v450, 1e-05
    %v456 = vadd.f32 %v451, 1e-05
    %v457 = vrsqrt.pop %v453
    %v458 = vrsqrt.pop %v454
    %v459 = vrsqrt.pop %v455
    %v460 = vrsqrt.pop %v456
    %v465 = vcombine.low %v457, %v458
    %v466 = vcombine.low %v459, %v460
    %v468 = vunpack.c.l.s4 1966171168
    %v469 = vunpack.c.0.s8 %v468
    %v470 = vlaneseq
    %v471 = vshrl.u32 %v470, 7
    %v472 = vsub.s32 %v469, %v471
    %v473 = vrot.slane %v465, %v472
    %v475 = vunpack.c.l.s4 1966171168
    %v476 = vunpack.c.0.s8 %v475
    %v477 = vlaneseq
    %v478 = vshrl.u32 %v477, 7
    %v479 = vsub.s32 %v476, %v478
    %v480 = vrot.slane %v466, %v479
    %v481 = vcombine.low %v473, %v480
    %v483 = vunpack.c.l.s4 1966171168
    %v484 = vunpack.c.0.s8 %v483
    %v485 = vlaneseq
    %v486 = vshrl.u32 %v485, 7
    %v487 = vsub.s32 %v484, %v486
    %v488 = vrot.slane %v481, %v487
    %v490 = vmul.f32 %v452, %v488
    %v492 = vlaneseq
    %v493 = vshrl.u32 %v492, 7
    %v494 = vsub.s32 0, %v493
    %v495 = vrot.slane %v490, %v494
    %v496 = vlaneseq
    %v497 = vshrl.u32 %v496, 7
    %v498 = vsub.s32 1, %v497
    %v499 = vrot.slane %v490, %v498
    %v500 = vlaneseq
    %v501 = vshrl.u32 %v500, 7
    %v502 = vsub.s32 2, %v501
    %v503 = vrot.slane %v490, %v502
    %v504 = vlaneseq
    %v505 = vshrl.u32 %v504, 7
    %v506 = vsub.s32 3, %v505
    %v507 = vrot.slane %v490, %v506
    %v512 = vmul.f32 %v416, %v495
    %v513 = vmul.f32 %v417, %v499
    %v514 = vmul.f32 %v418, %v503
    %v515 = vmul.f32 %v419, %v507
    %v516 = vld [vmem:[%s3] sm:$0xf]
    %v518 = vlaneseq
    %v519 = vshrl.u32 %v518, 7
    %v520 = vsub.s32 0, %v519
    %v521 = vrot.slane %v516, %v520
    %v522 = vlaneseq
    %v523 = vshrl.u32 %v522, 7
    %v524 = vsub.s32 1, %v523
    %v525 = vrot.slane %v516, %v524
    %v526 = vlaneseq
    %v527 = vshrl.u32 %v526, 7
    %v528 = vsub.s32 2, %v527
    %v529 = vrot.slane %v516, %v528
    %v530 = vlaneseq
    %v531 = vshrl.u32 %v530, 7
    %v532 = vsub.s32 3, %v531
    %v533 = vrot.slane %v516, %v532
    %v538 = vadd.f32 %v512, %v521
    %v539 = vadd.f32 %v513, %v525
    %v540 = vadd.f32 %v514, %v529
    %v541 = vadd.f32 %v515, %v533
    %v542 = vmax.f32 %v538, 0.0
    %v543 = vmax.f32 %v539, 0.0
    %v544 = vmax.f32 %v540, 0.0
    %v545 = vmax.f32 %v541, 0.0
    %v546 = vpack.c.bf16 %v542, %v542
    %v547 = vpack.c.bf16 %v543, %v543
    %v548 = vpack.c.bf16 %v544, %v544
    %v549 = vpack.c.bf16 %v545, %v545
    %v550 = vld [vmem:[#allocation8] sm:$0xff]
    %v551 = vld [vmem:[#allocation8 + $0x8] sm:$0xff]
    %v552 = vld [vmem:[#allocation8 + $0x10] sm:$0xff]
    %v553 = vld [vmem:[#allocation8 + $0x18] sm:$0xff]
    %v554 = vld [vmem:[#allocation8 + $0x20] sm:$0xff]
    %v555 = vld [vmem:[#allocation8 + $0x28] sm:$0xff]
    %v556 = vld [vmem:[#allocation8 + $0x30] sm:$0xff]
    %v557 = vld [vmem:[#allocation8 + $0x38] sm:$0xff]
    %v558 = vld [vmem:[#allocation8 + $0x40] sm:$0xff]
    %v559 = vld [vmem:[#allocation8 + $0x48] sm:$0xff]
    %v560 = vld [vmem:[#allocation8 + $0x50] sm:$0xff]
    %v561 = vld [vmem:[#allocation8 + $0x58] sm:$0xff]
    %v562 = vld [vmem:[#allocation8 + $0x60] sm:$0xff]
    %v563 = vld [vmem:[#allocation8 + $0x68] sm:$0xff]
    %v564 = vld [vmem:[#allocation8 + $0x70] sm:$0xff]
    %v565 = vld [vmem:[#allocation8 + $0x78] sm:$0xff]
    %v566 = vld [vmem:[#allocation8 + $0x80] sm:$0xff]
    %v567 = vld [vmem:[#allocation8 + $0x88] sm:$0xff]
    %v568 = vld [vmem:[#allocation8 + $0x90] sm:$0xff]
    %v569 = vld [vmem:[#allocation8 + $0x98] sm:$0xff]
    %v570 = vld [vmem:[#allocation8 + $0xa0] sm:$0xff]
    %v571 = vld [vmem:[#allocation8 + $0xa8] sm:$0xff]
    %v572 = vld [vmem:[#allocation8 + $0xb0] sm:$0xff]
    %v573 = vld [vmem:[#allocation8 + $0xb8] sm:$0xff]
    %v574 = vld [vmem:[#allocation8 + $0xc0] sm:$0xff]
    %v575 = vld [vmem:[#allocation8 + $0xc8] sm:$0xff]
    %v576 = vld [vmem:[#allocation8 + $0xd0] sm:$0xff]
    %v577 = vld [vmem:[#allocation8 + $0xd8] sm:$0xff]
    %v578 = vld [vmem:[#allocation8 + $0xe0] sm:$0xff]
    %v579 = vld [vmem:[#allocation8 + $0xe8] sm:$0xff]
    %v580 = vld [vmem:[#allocation8 + $0xf0] sm:$0xff]
    %v581 = vld [vmem:[#allocation8 + $0xf8] sm:$0xff]
    %v582 = vld [vmem:[#allocation8 + $0x100] sm:$0xff]
    %v583 = vld [vmem:[#allocation8 + $0x108] sm:$0xff]
    %v584 = vld [vmem:[#allocation8 + $0x110] sm:$0xff]
    %v585 = vld [vmem:[#allocation8 + $0x118] sm:$0xff]
    %v586 = vld [vmem:[#allocation8 + $0x120] sm:$0xff]
    %v587 = vld [vmem:[#allocation8 + $0x128] sm:$0xff]
    %v588 = vld [vmem:[#allocation8 + $0x130] sm:$0xff]
    %v589 = vld [vmem:[#allocation8 + $0x138] sm:$0xff]
    %v590 = vld [vmem:[#allocation8 + $0x140] sm:$0xff]
    %v591 = vld [vmem:[#allocation8 + $0x148] sm:$0xff]
    %v592 = vld [vmem:[#allocation8 + $0x150] sm:$0xff]
    %v593 = vld [vmem:[#allocation8 + $0x158] sm:$0xff]
    %v594 = vld [vmem:[#allocation8 + $0x160] sm:$0xff]
    %v595 = vld [vmem:[#allocation8 + $0x168] sm:$0xff]
    %v596 = vld [vmem:[#allocation8 + $0x170] sm:$0xff]
    %v597 = vld [vmem:[#allocation8 + $0x178] sm:$0xff]
    %v598 = vld [vmem:[#allocation8 + $0x180] sm:$0xff]
    %v599 = vld [vmem:[#allocation8 + $0x188] sm:$0xff]
    %v600 = vld [vmem:[#allocation8 + $0x190] sm:$0xff]
    %v601 = vld [vmem:[#allocation8 + $0x198] sm:$0xff]
    %v602 = vld [vmem:[#allocation8 + $0x1a0] sm:$0xff]
    %v603 = vld [vmem:[#allocation8 + $0x1a8] sm:$0xff]
    %v604 = vld [vmem:[#allocation8 + $0x1b0] sm:$0xff]
    %v605 = vld [vmem:[#allocation8 + $0x1b8] sm:$0xff]
    %v606 = vld [vmem:[#allocation8 + $0x1c0] sm:$0xff]
    %v607 = vld [vmem:[#allocation8 + $0x1c8] sm:$0xff]
    %v608 = vld [vmem:[#allocation8 + $0x1d0] sm:$0xff]
    %v609 = vld [vmem:[#allocation8 + $0x1d8] sm:$0xff]
    %v610 = vld [vmem:[#allocation8 + $0x1e0] sm:$0xff]
    %v611 = vld [vmem:[#allocation8 + $0x1e8] sm:$0xff]
    %v612 = vld [vmem:[#allocation8 + $0x1f0] sm:$0xff]
    %v613 = vld [vmem:[#allocation8 + $0x1f8] sm:$0xff]
    %v614 = vld [vmem:[#allocation8 + $0x200] sm:$0xff]
    %v615 = vld [vmem:[#allocation8 + $0x208] sm:$0xff]
    %v616 = vld [vmem:[#allocation8 + $0x210] sm:$0xff]
    %v617 = vld [vmem:[#allocation8 + $0x218] sm:$0xff]
    %v618 = vld [vmem:[#allocation8 + $0x220] sm:$0xff]
    %v619 = vld [vmem:[#allocation8 + $0x228] sm:$0xff]
    %v620 = vld [vmem:[#allocation8 + $0x230] sm:$0xff]
    %v621 = vld [vmem:[#allocation8 + $0x238] sm:$0xff]
    %v622 = vld [vmem:[#allocation8 + $0x240] sm:$0xff]
    %v623 = vld [vmem:[#allocation8 + $0x248] sm:$0xff]
    %v624 = vld [vmem:[#allocation8 + $0x250] sm:$0xff]
    %v625 = vld [vmem:[#allocation8 + $0x258] sm:$0xff]
    %v626 = vld [vmem:[#allocation8 + $0x260] sm:$0xff]
    %v627 = vld [vmem:[#allocation8 + $0x268] sm:$0xff]
    %v628 = vld [vmem:[#allocation8 + $0x270] sm:$0xff]
    %v629 = vld [vmem:[#allocation8 + $0x278] sm:$0xff]
    %v630 = vld [vmem:[#allocation8 + $0x280] sm:$0xff]
    %v631 = vld [vmem:[#allocation8 + $0x288] sm:$0xff]
    %v632 = vld [vmem:[#allocation8 + $0x290] sm:$0xff]
    %v633 = vld [vmem:[#allocation8 + $0x298] sm:$0xff]
    %v634 = vld [vmem:[#allocation8 + $0x2a0] sm:$0xff]
    %v635 = vld [vmem:[#allocation8 + $0x2a8] sm:$0xff]
    %v636 = vld [vmem:[#allocation8 + $0x2b0] sm:$0xff]
    %v637 = vld [vmem:[#allocation8 + $0x2b8] sm:$0xff]
    %v638 = vld [vmem:[#allocation8 + $0x2c0] sm:$0xff]
    %v639 = vld [vmem:[#allocation8 + $0x2c8] sm:$0xff]
    %v640 = vld [vmem:[#allocation8 + $0x2d0] sm:$0xff]
    %v641 = vld [vmem:[#allocation8 + $0x2d8] sm:$0xff]
    %v642 = vld [vmem:[#allocation8 + $0x2e0] sm:$0xff]
    %v643 = vld [vmem:[#allocation8 + $0x2e8] sm:$0xff]
    %v644 = vld [vmem:[#allocation8 + $0x2f0] sm:$0xff]
    %v645 = vld [vmem:[#allocation8 + $0x2f8] sm:$0xff]
    %v646 = vld [vmem:[#allocation8 + $0x300] sm:$0xff]
    %v647 = vld [vmem:[#allocation8 + $0x308] sm:$0xff]
    %v648 = vld [vmem:[#allocation8 + $0x310] sm:$0xff]
    %v649 = vld [vmem:[#allocation8 + $0x318] sm:$0xff]
    %v650 = vld [vmem:[#allocation8 + $0x320] sm:$0xff]
    %v651 = vld [vmem:[#allocation8 + $0x328] sm:$0xff]
    %v652 = vld [vmem:[#allocation8 + $0x330] sm:$0xff]
    %v653 = vld [vmem:[#allocation8 + $0x338] sm:$0xff]
    %v654 = vld [vmem:[#allocation8 + $0x340] sm:$0xff]
    %v655 = vld [vmem:[#allocation8 + $0x348] sm:$0xff]
    %v656 = vld [vmem:[#allocation8 + $0x350] sm:$0xff]
    %v657 = vld [vmem:[#allocation8 + $0x358] sm:$0xff]
    %v658 = vld [vmem:[#allocation8 + $0x360] sm:$0xff]
    %v659 = vld [vmem:[#allocation8 + $0x368] sm:$0xff]
    %v660 = vld [vmem:[#allocation8 + $0x370] sm:$0xff]
    %v661 = vld [vmem:[#allocation8 + $0x378] sm:$0xff]
    %v662 = vld [vmem:[#allocation8 + $0x380] sm:$0xff]
    %v663 = vld [vmem:[#allocation8 + $0x388] sm:$0xff]
    %v664 = vld [vmem:[#allocation8 + $0x390] sm:$0xff]
    %v665 = vld [vmem:[#allocation8 + $0x398] sm:$0xff]
    %v666 = vld [vmem:[#allocation8 + $0x3a0] sm:$0xff]
    %v667 = vld [vmem:[#allocation8 + $0x3a8] sm:$0xff]
    %v668 = vld [vmem:[#allocation8 + $0x3b0] sm:$0xff]
    %v669 = vld [vmem:[#allocation8 + $0x3b8] sm:$0xff]
    %v670 = vld [vmem:[#allocation8 + $0x3c0] sm:$0xff]
    %v671 = vld [vmem:[#allocation8 + $0x3c8] sm:$0xff]
    %v672 = vld [vmem:[#allocation8 + $0x3d0] sm:$0xff]
    %v673 = vld [vmem:[#allocation8 + $0x3d8] sm:$0xff]
    %v674 = vld [vmem:[#allocation8 + $0x3e0] sm:$0xff]
    %v675 = vld [vmem:[#allocation8 + $0x3e8] sm:$0xff]
    %v676 = vld [vmem:[#allocation8 + $0x3f0] sm:$0xff]
    %v677 = vld [vmem:[#allocation8 + $0x3f8] sm:$0xff]
    %v806 = vunpack.c.l.b16 %v550
    %v807 = vunpack.c.h.b16 %v550
    %v808 = vunpack.c.l.b16 %v551
    %v809 = vunpack.c.h.b16 %v551
    %v810 = vunpack.c.l.b16 %v552
    %v811 = vunpack.c.h.b16 %v552
    %v812 = vunpack.c.l.b16 %v553
    %v813 = vunpack.c.h.b16 %v553
    %v814 = vunpack.c.l.b16 %v554
    %v815 = vunpack.c.h.b16 %v554
    %v816 = vunpack.c.l.b16 %v555
    %v817 = vunpack.c.h.b16 %v555
    %v818 = vunpack.c.l.b16 %v556
    %v819 = vunpack.c.h.b16 %v556
    %v820 = vunpack.c.l.b16 %v557
    %v821 = vunpack.c.h.b16 %v557
    %v822 = vunpack.c.l.b16 %v558
    %v823 = vunpack.c.h.b16 %v558
    %v824 = vunpack.c.l.b16 %v559
    %v825 = vunpack.c.h.b16 %v559
    %v826 = vunpack.c.l.b16 %v560
    %v827 = vunpack.c.h.b16 %v560
    %v828 = vunpack.c.l.b16 %v561
    %v829 = vunpack.c.h.b16 %v561
    %v830 = vunpack.c.l.b16 %v562
    %v831 = vunpack.c.h.b16 %v562
    %v832 = vunpack.c.l.b16 %v563
    %v833 = vunpack.c.h.b16 %v563
    %v834 = vunpack.c.l.b16 %v564
    %v835 = vunpack.c.h.b16 %v564
    %v836 = vunpack.c.l.b16 %v565
    %v837 = vunpack.c.h.b16 %v565
    %v838 = vunpack.c.l.b16 %v566
    %v839 = vunpack.c.h.b16 %v566
    %v840 = vunpack.c.l.b16 %v567
    %v841 = vunpack.c.h.b16 %v567
    %v842 = vunpack.c.l.b16 %v568
    %v843 = vunpack.c.h.b16 %v568
    %v844 = vunpack.c.l.b16 %v569
    %v845 = vunpack.c.h.b16 %v569
    %v846 = vunpack.c.l.b16 %v570
    %v847 = vunpack.c.h.b16 %v570
    %v848 = vunpack.c.l.b16 %v571
    %v849 = vunpack.c.h.b16 %v571
    %v850 = vunpack.c.l.b16 %v572
    %v851 = vunpack.c.h.b16 %v572
    %v852 = vunpack.c.l.b16 %v573
    %v853 = vunpack.c.h.b16 %v573
    %v854 = vunpack.c.l.b16 %v574
    %v855 = vunpack.c.h.b16 %v574
    %v856 = vunpack.c.l.b16 %v575
    %v857 = vunpack.c.h.b16 %v575
    %v858 = vunpack.c.l.b16 %v576
    %v859 = vunpack.c.h.b16 %v576
    %v860 = vunpack.c.l.b16 %v577
    %v861 = vunpack.c.h.b16 %v577
    %v862 = vunpack.c.l.b16 %v578
    %v863 = vunpack.c.h.b16 %v578
    %v864 = vunpack.c.l.b16 %v579
    %v865 = vunpack.c.h.b16 %v579
    %v866 = vunpack.c.l.b16 %v580
    %v867 = vunpack.c.h.b16 %v580
    %v868 = vunpack.c.l.b16 %v581
    %v869 = vunpack.c.h.b16 %v581
    %v870 = vunpack.c.l.b16 %v582
    %v871 = vunpack.c.h.b16 %v582
    %v872 = vunpack.c.l.b16 %v583
    %v873 = vunpack.c.h.b16 %v583
    %v874 = vunpack.c.l.b16 %v584
    %v875 = vunpack.c.h.b16 %v584
    %v876 = vunpack.c.l.b16 %v585
    %v877 = vunpack.c.h.b16 %v585
    %v878 = vunpack.c.l.b16 %v586
    %v879 = vunpack.c.h.b16 %v586
    %v880 = vunpack.c.l.b16 %v587
    %v881 = vunpack.c.h.b16 %v587
    %v882 = vunpack.c.l.b16 %v588
    %v883 = vunpack.c.h.b16 %v588
    %v884 = vunpack.c.l.b16 %v589
    %v885 = vunpack.c.h.b16 %v589
    %v886 = vunpack.c.l.b16 %v590
    %v887 = vunpack.c.h.b16 %v590
    %v888 = vunpack.c.l.b16 %v591
    %v889 = vunpack.c.h.b16 %v591
    %v890 = vunpack.c.l.b16 %v592
    %v891 = vunpack.c.h.b16 %v592
    %v892 = vunpack.c.l.b16 %v593
    %v893 = vunpack.c.h.b16 %v593
    %v894 = vunpack.c.l.b16 %v594
    %v895 = vunpack.c.h.b16 %v594
    %v896 = vunpack.c.l.b16 %v595
    %v897 = vunpack.c.h.b16 %v595
    %v898 = vunpack.c.l.b16 %v596
    %v899 = vunpack.c.h.b16 %v596
    %v900 = vunpack.c.l.b16 %v597
    %v901 = vunpack.c.h.b16 %v597
    %v902 = vunpack.c.l.b16 %v598
    %v903 = vunpack.c.h.b16 %v598
    %v904 = vunpack.c.l.b16 %v599
    %v905 = vunpack.c.h.b16 %v599
    %v906 = vunpack.c.l.b16 %v600
    %v907 = vunpack.c.h.b16 %v600
    %v908 = vunpack.c.l.b16 %v601
    %v909 = vunpack.c.h.b16 %v601
    %v910 = vunpack.c.l.b16 %v602
    %v911 = vunpack.c.h.b16 %v602
    %v912 = vunpack.c.l.b16 %v603
    %v913 = vunpack.c.h.b16 %v603
    %v914 = vunpack.c.l.b16 %v604
    %v915 = vunpack.c.h.b16 %v604
    %v916 = vunpack.c.l.b16 %v605
    %v917 = vunpack.c.h.b16 %v605
    %v918 = vunpack.c.l.b16 %v606
    %v919 = vunpack.c.h.b16 %v606
    %v920 = vunpack.c.l.b16 %v607
    %v921 = vunpack.c.h.b16 %v607
    %v922 = vunpack.c.l.b16 %v608
    %v923 = vunpack.c.h.b16 %v608
    %v924 = vunpack.c.l.b16 %v609
    %v925 = vunpack.c.h.b16 %v609
    %v926 = vunpack.c.l.b16 %v610
    %v927 = vunpack.c.h.b16 %v610
    %v928 = vunpack.c.l.b16 %v611
    %v929 = vunpack.c.h.b16 %v611
    %v930 = vunpack.c.l.b16 %v612
    %v931 = vunpack.c.h.b16 %v612
    %v932 = vunpack.c.l.b16 %v613
    %v933 = vunpack.c.h.b16 %v613
    %v934 = vunpack.c.l.b16 %v614
    %v935 = vunpack.c.h.b16 %v614
    %v936 = vunpack.c.l.b16 %v615
    %v937 = vunpack.c.h.b16 %v615
    %v938 = vunpack.c.l.b16 %v616
    %v939 = vunpack.c.h.b16 %v616
    %v940 = vunpack.c.l.b16 %v617
    %v941 = vunpack.c.h.b16 %v617
    %v942 = vunpack.c.l.b16 %v618
    %v943 = vunpack.c.h.b16 %v618
    %v944 = vunpack.c.l.b16 %v619
    %v945 = vunpack.c.h.b16 %v619
    %v946 = vunpack.c.l.b16 %v620
    %v947 = vunpack.c.h.b16 %v620
    %v948 = vunpack.c.l.b16 %v621
    %v949 = vunpack.c.h.b16 %v621
    %v950 = vunpack.c.l.b16 %v622
    %v951 = vunpack.c.h.b16 %v622
    %v952 = vunpack.c.l.b16 %v623
    %v953 = vunpack.c.h.b16 %v623
    %v954 = vunpack.c.l.b16 %v624
    %v955 = vunpack.c.h.b16 %v624
    %v956 = vunpack.c.l.b16 %v625
    %v957 = vunpack.c.h.b16 %v625
    %v958 = vunpack.c.l.b16 %v626
    %v959 = vunpack.c.h.b16 %v626
    %v960 = vunpack.c.l.b16 %v627
    %v961 = vunpack.c.h.b16 %v627
    %v962 = vunpack.c.l.b16 %v628
    %v963 = vunpack.c.h.b16 %v628
    %v964 = vunpack.c.l.b16 %v629
    %v965 = vunpack.c.h.b16 %v629
    %v966 = vunpack.c.l.b16 %v630
    %v967 = vunpack.c.h.b16 %v630
    %v968 = vunpack.c.l.b16 %v631
    %v969 = vunpack.c.h.b16 %v631
    %v970 = vunpack.c.l.b16 %v632
    %v971 = vunpack.c.h.b16 %v632
    %v972 = vunpack.c.l.b16 %v633
    %v973 = vunpack.c.h.b16 %v633
    %v974 = vunpack.c.l.b16 %v634
    %v975 = vunpack.c.h.b16 %v634
    %v976 = vunpack.c.l.b16 %v635
    %v977 = vunpack.c.h.b16 %v635
    %v978 = vunpack.c.l.b16 %v636
    %v979 = vunpack.c.h.b16 %v636
    %v980 = vunpack.c.l.b16 %v637
    %v981 = vunpack.c.h.b16 %v637
    %v982 = vunpack.c.l.b16 %v638
    %v983 = vunpack.c.h.b16 %v638
    %v984 = vunpack.c.l.b16 %v639
    %v985 = vunpack.c.h.b16 %v639
    %v986 = vunpack.c.l.b16 %v640
    %v987 = vunpack.c.h.b16 %v640
    %v988 = vunpack.c.l.b16 %v641
    %v989 = vunpack.c.h.b16 %v641
    %v990 = vunpack.c.l.b16 %v642
    %v991 = vunpack.c.h.b16 %v642
    %v992 = vunpack.c.l.b16 %v643
    %v993 = vunpack.c.h.b16 %v643
    %v994 = vunpack.c.l.b16 %v644
    %v995 = vunpack.c.h.b16 %v644
    %v996 = vunpack.c.l.b16 %v645
    %v997 = vunpack.c.h.b16 %v645
    %v998 = vunpack.c.l.b16 %v646
    %v999 = vunpack.c.h.b16 %v646
    %v1000 = vunpack.c.l.b16 %v647
    %v1001 = vunpack.c.h.b16 %v647
    %v1002 = vunpack.c.l.b16 %v648
    %v1003 = vunpack.c.h.b16 %v648
    %v1004 = vunpack.c.l.b16 %v649
    %v1005 = vunpack.c.h.b16 %v649
    %v1006 = vunpack.c.l.b16 %v650
    %v1007 = vunpack.c.h.b16 %v650
    %v1008 = vunpack.c.l.b16 %v651
    %v1009 = vunpack.c.h.b16 %v651
    %v1010 = vunpack.c.l.b16 %v652
    %v1011 = vunpack.c.h.b16 %v652
    %v1012 = vunpack.c.l.b16 %v653
    %v1013 = vunpack.c.h.b16 %v653
    %v1014 = vunpack.c.l.b16 %v654
    %v1015 = vunpack.c.h.b16 %v654
    %v1016 = vunpack.c.l.b16 %v655
    %v1017 = vunpack.c.h.b16 %v655
    %v1018 = vunpack.c.l.b16 %v656
    %v1019 = vunpack.c.h.b16 %v656
    %v1020 = vunpack.c.l.b16 %v657
    %v1021 = vunpack.c.h.b16 %v657
    %v1022 = vunpack.c.l.b16 %v658
    %v1023 = vunpack.c.h.b16 %v658
    %v1024 = vunpack.c.l.b16 %v659
    %v1025 = vunpack.c.h.b16 %v659
    %v1026 = vunpack.c.l.b16 %v660
    %v1027 = vunpack.c.h.b16 %v660
    %v1028 = vunpack.c.l.b16 %v661
    %v1029 = vunpack.c.h.b16 %v661
    %v1030 = vunpack.c.l.b16 %v662
    %v1031 = vunpack.c.h.b16 %v662
    %v1032 = vunpack.c.l.b16 %v663
    %v1033 = vunpack.c.h.b16 %v663
    %v1034 = vunpack.c.l.b16 %v664
    %v1035 = vunpack.c.h.b16 %v664
    %v1036 = vunpack.c.l.b16 %v665
    %v1037 = vunpack.c.h.b16 %v665
    %v1038 = vunpack.c.l.b16 %v666
    %v1039 = vunpack.c.h.b16 %v666
    %v1040 = vunpack.c.l.b16 %v667
    %v1041 = vunpack.c.h.b16 %v667
    %v1042 = vunpack.c.l.b16 %v668
    %v1043 = vunpack.c.h.b16 %v668
    %v1044 = vunpack.c.l.b16 %v669
    %v1045 = vunpack.c.h.b16 %v669
    %v1046 = vunpack.c.l.b16 %v670
    %v1047 = vunpack.c.h.b16 %v670
    %v1048 = vunpack.c.l.b16 %v671
    %v1049 = vunpack.c.h.b16 %v671
    %v1050 = vunpack.c.l.b16 %v672
    %v1051 = vunpack.c.h.b16 %v672
    %v1052 = vunpack.c.l.b16 %v673
    %v1053 = vunpack.c.h.b16 %v673
    %v1054 = vunpack.c.l.b16 %v674
    %v1055 = vunpack.c.h.b16 %v674
    %v1056 = vunpack.c.l.b16 %v675
    %v1057 = vunpack.c.h.b16 %v675
    %v1058 = vunpack.c.l.b16 %v676
    %v1059 = vunpack.c.h.b16 %v676
    %v1060 = vunpack.c.l.b16 %v677
    %v1061 = vunpack.c.h.b16 %v677
    %v1062 = vpack.c.b16 %v810, %v806
    %v1063 = vpack.c.b16 %v811, %v807
    %v1064 = vpack.c.b16 %v812, %v808
    %v1065 = vpack.c.b16 %v813, %v809
    %v1066 = vpack.c.b16 %v818, %v814
    %v1067 = vpack.c.b16 %v819, %v815
    %v1068 = vpack.c.b16 %v820, %v816
    %v1069 = vpack.c.b16 %v821, %v817
    %v1070 = vpack.c.b16 %v826, %v822
    %v1071 = vpack.c.b16 %v827, %v823
    %v1072 = vpack.c.b16 %v828, %v824
    %v1073 = vpack.c.b16 %v829, %v825
    %v1074 = vpack.c.b16 %v834, %v830
    %v1075 = vpack.c.b16 %v835, %v831
    %v1076 = vpack.c.b16 %v836, %v832
    %v1077 = vpack.c.b16 %v837, %v833
    %v1078 = vpack.c.b16 %v842, %v838
    %v1079 = vpack.c.b16 %v843, %v839
    %v1080 = vpack.c.b16 %v844, %v840
    %v1081 = vpack.c.b16 %v845, %v841
    %v1082 = vpack.c.b16 %v850, %v846
    %v1083 = vpack.c.b16 %v851, %v847
    %v1084 = vpack.c.b16 %v852, %v848
    %v1085 = vpack.c.b16 %v853, %v849
    %v1086 = vpack.c.b16 %v858, %v854
    %v1087 = vpack.c.b16 %v859, %v855
    %v1088 = vpack.c.b16 %v860, %v856
    %v1089 = vpack.c.b16 %v861, %v857
    %v1090 = vpack.c.b16 %v866, %v862
    %v1091 = vpack.c.b16 %v867, %v863
    %v1092 = vpack.c.b16 %v868, %v864
    %v1093 = vpack.c.b16 %v869, %v865
    %v1094 = vpack.c.b16 %v874, %v870
    %v1095 = vpack.c.b16 %v875, %v871
    %v1096 = vpack.c.b16 %v876, %v872
    %v1097 = vpack.c.b16 %v877, %v873
    %v1098 = vpack.c.b16 %v882, %v878
    %v1099 = vpack.c.b16 %v883, %v879
    %v1100 = vpack.c.b16 %v884, %v880
    %v1101 = vpack.c.b16 %v885, %v881
    %v1102 = vpack.c.b16 %v890, %v886
    %v1103 = vpack.c.b16 %v891, %v887
    %v1104 = vpack.c.b16 %v892, %v888
    %v1105 = vpack.c.b16 %v893, %v889
    %v1106 = vpack.c.b16 %v898, %v894
    %v1107 = vpack.c.b16 %v899, %v895
    %v1108 = vpack.c.b16 %v900, %v896
    %v1109 = vpack.c.b16 %v901, %v897
    %v1110 = vpack.c.b16 %v906, %v902
    %v1111 = vpack.c.b16 %v907, %v903
    %v1112 = vpack.c.b16 %v908, %v904
    %v1113 = vpack.c.b16 %v909, %v905
    %v1114 = vpack.c.b16 %v914, %v910
    %v1115 = vpack.c.b16 %v915, %v911
    %v1116 = vpack.c.b16 %v916, %v912
    %v1117 = vpack.c.b16 %v917, %v913
    %v1118 = vpack.c.b16 %v922, %v918
    %v1119 = vpack.c.b16 %v923, %v919
    %v1120 = vpack.c.b16 %v924, %v920
    %v1121 = vpack.c.b16 %v925, %v921
    %v1122 = vpack.c.b16 %v930, %v926
    %v1123 = vpack.c.b16 %v931, %v927
    %v1124 = vpack.c.b16 %v932, %v928
    %v1125 = vpack.c.b16 %v933, %v929
    %v1126 = vpack.c.b16 %v938, %v934
    %v1127 = vpack.c.b16 %v939, %v935
    %v1128 = vpack.c.b16 %v940, %v936
    %v1129 = vpack.c.b16 %v941, %v937
    %v1130 = vpack.c.b16 %v946, %v942
    %v1131 = vpack.c.b16 %v947, %v943
    %v1132 = vpack.c.b16 %v948, %v944
    %v1133 = vpack.c.b16 %v949, %v945
    %v1134 = vpack.c.b16 %v954, %v950
    %v1135 = vpack.c.b16 %v955, %v951
    %v1136 = vpack.c.b16 %v956, %v952
    %v1137 = vpack.c.b16 %v957, %v953
    %v1138 = vpack.c.b16 %v962, %v958
    %v1139 = vpack.c.b16 %v963, %v959
    %v1140 = vpack.c.b16 %v964, %v960
    %v1141 = vpack.c.b16 %v965, %v961
    %v1142 = vpack.c.b16 %v970, %v966
    %v1143 = vpack.c.b16 %v971, %v967
    %v1144 = vpack.c.b16 %v972, %v968
    %v1145 = vpack.c.b16 %v973, %v969
    %v1146 = vpack.c.b16 %v978, %v974
    %v1147 = vpack.c.b16 %v979, %v975
    %v1148 = vpack.c.b16 %v980, %v976
    %v1149 = vpack.c.b16 %v981, %v977
    %v1150 = vpack.c.b16 %v986, %v982
    %v1151 = vpack.c.b16 %v987, %v983
    %v1152 = vpack.c.b16 %v988, %v984
    %v1153 = vpack.c.b16 %v989, %v985
    %v1154 = vpack.c.b16 %v994, %v990
    %v1155 = vpack.c.b16 %v995, %v991
    %v1156 = vpack.c.b16 %v996, %v992
    %v1157 = vpack.c.b16 %v997, %v993
    %v1158 = vpack.c.b16 %v1002, %v998
    %v1159 = vpack.c.b16 %v1003, %v999
    %v1160 = vpack.c.b16 %v1004, %v1000
    %v1161 = vpack.c.b16 %v1005, %v1001
    %v1162 = vpack.c.b16 %v1010, %v1006
    %v1163 = vpack.c.b16 %v1011, %v1007
    %v1164 = vpack.c.b16 %v1012, %v1008
    %v1165 = vpack.c.b16 %v1013, %v1009
    %v1166 = vpack.c.b16 %v1018, %v1014
    %v1167 = vpack.c.b16 %v1019, %v1015
    %v1168 = vpack.c.b16 %v1020, %v1016
    %v1169 = vpack.c.b16 %v1021, %v1017
    %v1170 = vpack.c.b16 %v1026, %v1022
    %v1171 = vpack.c.b16 %v1027, %v1023
    %v1172 = vpack.c.b16 %v1028, %v1024
    %v1173 = vpack.c.b16 %v1029, %v1025
    %v1174 = vpack.c.b16 %v1034, %v1030
    %v1175 = vpack.c.b16 %v1035, %v1031
    %v1176 = vpack.c.b16 %v1036, %v1032
    %v1177 = vpack.c.b16 %v1037, %v1033
    %v1178 = vpack.c.b16 %v1042, %v1038
    %v1179 = vpack.c.b16 %v1043, %v1039
    %v1180 = vpack.c.b16 %v1044, %v1040
    %v1181 = vpack.c.b16 %v1045, %v1041
    %v1182 = vpack.c.b16 %v1050, %v1046
    %v1183 = vpack.c.b16 %v1051, %v1047
    %v1184 = vpack.c.b16 %v1052, %v1048
    %v1185 = vpack.c.b16 %v1053, %v1049
    %v1186 = vpack.c.b16 %v1058, %v1054
    %v1187 = vpack.c.b16 %v1059, %v1055
    %v1188 = vpack.c.b16 %v1060, %v1056
    %v1189 = vpack.c.b16 %v1061, %v1057
    %1318 = vmatprep.subr.bf16.mxu0 %v1091
    %1319 = vmatpush1.bf16.msra.mxu0 %v1090
    %1320 = vmatprep.subr.bf16.mxu0 %v1087
    %1321 = vmatpush1.bf16.msra.mxu0 %v1086
    %1322 = vmatprep.subr.bf16.mxu0 %v1083
    %1323 = vmatpush1.bf16.msra.mxu0 %v1082
    %1324 = vmatprep.subr.bf16.mxu0 %v1079
    %1325 = vmatpush1.bf16.msra.mxu0 %v1078
    %1326 = vmatprep.subr.bf16.mxu0 %v1075
    %1327 = vmatpush1.bf16.msra.mxu0 %v1074
    %1328 = vmatprep.subr.bf16.mxu0 %v1071
    %1329 = vmatpush1.bf16.msra.mxu0 %v1070
    %1330 = vmatprep.subr.bf16.mxu0 %v1067
    %1331 = vmatpush1.bf16.msra.mxu0 %v1066
    %1332 = vmatprep.subr.bf16.mxu0 %v1063
    %1333 = vmatpush1.bf16.msra.mxu0 %v1062
    %1334 = vmatprep.subr.bf16.mxu0 %v1123
    %1335 = vmatpush2.bf16.msra.mxu0 %v1122
    %1336 = vmatprep.subr.bf16.mxu0 %v1119
    %1337 = vmatpush2.bf16.msra.mxu0 %v1118
    %1338 = vmatprep.subr.bf16.mxu0 %v1115
    %1339 = vmatpush2.bf16.msra.mxu0 %v1114
    %1340 = vmatprep.subr.bf16.mxu0 %v1111
    %1341 = vmatpush2.bf16.msra.mxu0 %v1110
    %1342 = vmatprep.subr.bf16.mxu0 %v1107
    %1343 = vmatpush2.bf16.msra.mxu0 %v1106
    %1344 = vmatprep.subr.bf16.mxu0 %v1103
    %1345 = vmatpush2.bf16.msra.mxu0 %v1102
    %1346 = vmatprep.subr.bf16.mxu0 %v1099
    %1347 = vmatpush2.bf16.msra.mxu0 %v1098
    %1348 = vmatprep.subr.bf16.mxu0 %v1095
    %1349 = vmatpush2.bf16.msra.mxu0 %v1094
    %1350 = vmatprep.mubr.bf16.mxu0 %v547
    %1351 = vmatmul.mubr.bf16.gmra.mxu0 %v546
    %v1352 = vpop.f32.mrf.mxu0
    %v1353 = vadd.f32 0.0, %v1352
    %v1354 = vpop.f32.mrf.mxu0
    %v1355 = vadd.f32 0.0, %v1354
    %v1356 = vpop.f32.mrf.mxu0
    %v1357 = vpop.f32.mrf.mxu0
    %1358 = vdwg.mxu0
    %1359 = vmatprep.subr.bf16.mxu0 %v1155
    %1360 = vmatpush1.bf16.msra.mxu0 %v1154
    %1361 = vmatprep.subr.bf16.mxu0 %v1151
    %1362 = vmatpush1.bf16.msra.mxu0 %v1150
    %1363 = vmatprep.subr.bf16.mxu0 %v1147
    %1364 = vmatpush1.bf16.msra.mxu0 %v1146
    %1365 = vmatprep.subr.bf16.mxu0 %v1143
    %1366 = vmatpush1.bf16.msra.mxu0 %v1142
    %1367 = vmatprep.subr.bf16.mxu0 %v1139
    %1368 = vmatpush1.bf16.msra.mxu0 %v1138
    %1369 = vmatprep.subr.bf16.mxu0 %v1135
    %1370 = vmatpush1.bf16.msra.mxu0 %v1134
    %1371 = vmatprep.subr.bf16.mxu0 %v1131
    %1372 = vmatpush1.bf16.msra.mxu0 %v1130
    %1373 = vmatprep.subr.bf16.mxu0 %v1127
    %1374 = vmatpush1.bf16.msra.mxu0 %v1126
    %1375 = vmatprep.subr.bf16.mxu0 %v1187
    %1376 = vmatpush2.bf16.msra.mxu0 %v1186
    %1377 = vmatprep.subr.bf16.mxu0 %v1183
    %1378 = vmatpush2.bf16.msra.mxu0 %v1182
    %1379 = vmatprep.subr.bf16.mxu0 %v1179
    %1380 = vmatpush2.bf16.msra.mxu0 %v1178
    %1381 = vmatprep.subr.bf16.mxu0 %v1175
    %1382 = vmatpush2.bf16.msra.mxu0 %v1174
    %1383 = vmatprep.subr.bf16.mxu0 %v1171
    %1384 = vmatpush2.bf16.msra.mxu0 %v1170
    %1385 = vmatprep.subr.bf16.mxu0 %v1167
    %1386 = vmatpush2.bf16.msra.mxu0 %v1166
    %1387 = vmatprep.subr.bf16.mxu0 %v1163
    %1388 = vmatpush2.bf16.msra.mxu0 %v1162
    %1389 = vmatprep.subr.bf16.mxu0 %v1159
    %1390 = vmatpush2.bf16.msra.mxu0 %v1158
    %1391 = vmatprep.mubr.bf16.mxu0 %v549
    %1392 = vmatmul.mubr.bf16.gmra.mxu0 %v548
    %v1393 = vpop.f32.mrf.mxu0
    %v1394 = vadd.f32 %v1353, %v1393
    %v1395 = vpop.f32.mrf.mxu0
    %v1396 = vadd.f32 %v1355, %v1395
    %v1397 = vpop.f32.mrf.mxu0
    %v1398 = vpop.f32.mrf.mxu0
    %1399 = vdwg.mxu0
    %1400 = vmatprep.subr.bf16.mxu0 %v1093
    %1401 = vmatpush1.bf16.msra.mxu0 %v1092
    %1402 = vmatprep.subr.bf16.mxu0 %v1089
    %1403 = vmatpush1.bf16.msra.mxu0 %v1088
    %1404 = vmatprep.subr.bf16.mxu0 %v1085
    %1405 = vmatpush1.bf16.msra.mxu0 %v1084
    %1406 = vmatprep.subr.bf16.mxu0 %v1081
    %1407 = vmatpush1.bf16.msra.mxu0 %v1080
    %1408 = vmatprep.subr.bf16.mxu0 %v1077
    %1409 = vmatpush1.bf16.msra.mxu0 %v1076
    %1410 = vmatprep.subr.bf16.mxu0 %v1073
    %1411 = vmatpush1.bf16.msra.mxu0 %v1072
    %1412 = vmatprep.subr.bf16.mxu0 %v1069
    %1413 = vmatpush1.bf16.msra.mxu0 %v1068
    %1414 = vmatprep.subr.bf16.mxu0 %v1065
    %1415 = vmatpush1.bf16.msra.mxu0 %v1064
    %1416 = vmatprep.subr.bf16.mxu0 %v1125
    %1417 = vmatpush2.bf16.msra.mxu0 %v1124
    %1418 = vmatprep.subr.bf16.mxu0 %v1121
    %1419 = vmatpush2.bf16.msra.mxu0 %v1120
    %1420 = vmatprep.subr.bf16.mxu0 %v1117
    %1421 = vmatpush2.bf16.msra.mxu0 %v1116
    %1422 = vmatprep.subr.bf16.mxu0 %v1113
    %1423 = vmatpush2.bf16.msra.mxu0 %v1112
    %1424 = vmatprep.subr.bf16.mxu0 %v1109
    %1425 = vmatpush2.bf16.msra.mxu0 %v1108
    %1426 = vmatprep.subr.bf16.mxu0 %v1105
    %1427 = vmatpush2.bf16.msra.mxu0 %v1104
    %1428 = vmatprep.subr.bf16.mxu0 %v1101
    %1429 = vmatpush2.bf16.msra.mxu0 %v1100
    %1430 = vmatprep.subr.bf16.mxu0 %v1097
    %1431 = vmatpush2.bf16.msra.mxu0 %v1096
    %1432 = vmatprep.mubr.bf16.mxu0 %v547
    %1433 = vmatmul.mubr.bf16.gmra.mxu0 %v546
    %v1434 = vpop.f32.mrf.mxu0
    %v1435 = vadd.f32 0.0, %v1434
    %v1436 = vpop.f32.mrf.mxu0
    %v1437 = vadd.f32 0.0, %v1436
    %v1438 = vpop.f32.mrf.mxu0
    %v1439 = vpop.f32.mrf.mxu0
    %1440 = vdwg.mxu0
    %1441 = vmatprep.subr.bf16.mxu0 %v1157
    %1442 = vmatpush1.bf16.msra.mxu0 %v1156
    %1443 = vmatprep.subr.bf16.mxu0 %v1153
    %1444 = vmatpush1.bf16.msra.mxu0 %v1152
    %1445 = vmatprep.subr.bf16.mxu0 %v1149
    %1446 = vmatpush1.bf16.msra.mxu0 %v1148
    %1447 = vmatprep.subr.bf16.mxu0 %v1145
    %1448 = vmatpush1.bf16.msra.mxu0 %v1144
    %1449 = vmatprep.subr.bf16.mxu0 %v1141
    %1450 = vmatpush1.bf16.msra.mxu0 %v1140
    %1451 = vmatprep.subr.bf16.mxu0 %v1137
    %1452 = vmatpush1.bf16.msra.mxu0 %v1136
    %1453 = vmatprep.subr.bf16.mxu0 %v1133
    %1454 = vmatpush1.bf16.msra.mxu0 %v1132
    %1455 = vmatprep.subr.bf16.mxu0 %v1129
    %1456 = vmatpush1.bf16.msra.mxu0 %v1128
    %1457 = vmatprep.subr.bf16.mxu0 %v1189
    %1458 = vmatpush2.bf16.msra.mxu0 %v1188
    %1459 = vmatprep.subr.bf16.mxu0 %v1185
    %1460 = vmatpush2.bf16.msra.mxu0 %v1184
    %1461 = vmatprep.subr.bf16.mxu0 %v1181
    %1462 = vmatpush2.bf16.msra.mxu0 %v1180
    %1463 = vmatprep.subr.bf16.mxu0 %v1177
    %1464 = vmatpush2.bf16.msra.mxu0 %v1176
    %1465 = vmatprep.subr.bf16.mxu0 %v1173
    %1466 = vmatpush2.bf16.msra.mxu0 %v1172
    %1467 = vmatprep.subr.bf16.mxu0 %v1169
    %1468 = vmatpush2.bf16.msra.mxu0 %v1168
    %1469 = vmatprep.subr.bf16.mxu0 %v1165
    %1470 = vmatpush2.bf16.msra.mxu0 %v1164
    %1471 = vmatprep.subr.bf16.mxu0 %v1161
    %1472 = vmatpush2.bf16.msra.mxu0 %v1160
    %1473 = vmatprep.mubr.bf16.mxu0 %v549
    %1474 = vmatmul.mubr.bf16.gmra.mxu0 %v548
    %v1475 = vpop.f32.mrf.mxu0
    %v1476 = vadd.f32 %v1435, %v1475
    %v1477 = vpop.f32.mrf.mxu0
    %v1478 = vadd.f32 %v1437, %v1477
    %v1479 = vpop.f32.mrf.mxu0
    %v1480 = vpop.f32.mrf.mxu0
    %1481 = vdwg.mxu0
    %v1482 = vrot.slane %v1394, 4
    %v1483 = vadd.f32 %v1394, %v1482
    %v1484 = vrot.slane %v1483, 2
    %v1485 = vadd.f32 %v1483, %v1484
    %v1486 = vrot.slane %v1485, 1
    %v1487 = vadd.f32 %v1485, %v1486
    %v1488 = vrot.slane %v1396, 4
    %v1489 = vadd.f32 %v1396, %v1488
    %v1490 = vrot.slane %v1489, 2
    %v1491 = vadd.f32 %v1489, %v1490
    %v1492 = vrot.slane %v1491, 1
    %v1493 = vadd.f32 %v1491, %v1492
    %v1494 = vrot.slane %v1476, 4
    %v1495 = vadd.f32 %v1476, %v1494
    %v1496 = vrot.slane %v1495, 2
    %v1497 = vadd.f32 %v1495, %v1496
    %v1498 = vrot.slane %v1497, 1
    %v1499 = vadd.f32 %v1497, %v1498
    %v1500 = vrot.slane %v1478, 4
    %v1501 = vadd.f32 %v1478, %v1500
    %v1502 = vrot.slane %v1501, 2
    %v1503 = vadd.f32 %v1501, %v1502
    %v1504 = vrot.slane %v1503, 1
    %v1505 = vadd.f32 %v1503, %v1504
    %v1506 = vmul.f32 %v1487, %v411
    %v1507 = vmul.f32 %v1493, %v411
    %v1508 = vmul.f32 %v1499, %v411
    %v1509 = vmul.f32 %v1505, %v411
    %v1510 = vsub.f32 %v1394, %v1506
    %v1511 = vsub.f32 %v1396, %v1507
    %v1512 = vsub.f32 %v1476, %v1508
    %v1513 = vsub.f32 %v1478, %v1509
    %v1514 = vmul.f32 %v1510, %v1510
    %v1515 = vmul.f32 %v1511, %v1511
    %v1516 = vmul.f32 %v1512, %v1512
    %v1517 = vmul.f32 %v1513, %v1513
    %v1518 = vrot.slane %v1514, 4
    %v1519 = vadd.f32 %v1514, %v1518
    %v1520 = vrot.slane %v1519, 2
    %v1521 = vadd.f32 %v1519, %v1520
    %v1522 = vrot.slane %v1521, 1
    %v1523 = vadd.f32 %v1521, %v1522
    %v1524 = vrot.slane %v1515, 4
    %v1525 = vadd.f32 %v1515, %v1524
    %v1526 = vrot.slane %v1525, 2
    %v1527 = vadd.f32 %v1525, %v1526
    %v1528 = vrot.slane %v1527, 1
    %v1529 = vadd.f32 %v1527, %v1528
    %v1530 = vrot.slane %v1516, 4
    %v1531 = vadd.f32 %v1516, %v1530
    %v1532 = vrot.slane %v1531, 2
    %v1533 = vadd.f32 %v1531, %v1532
    %v1534 = vrot.slane %v1533, 1
    %v1535 = vadd.f32 %v1533, %v1534
    %v1536 = vrot.slane %v1517, 4
    %v1537 = vadd.f32 %v1517, %v1536
    %v1538 = vrot.slane %v1537, 2
    %v1539 = vadd.f32 %v1537, %v1538
    %v1540 = vrot.slane %v1539, 1
    %v1541 = vadd.f32 %v1539, %v1540
    %v1542 = vmul.f32 %v1523, %v411
    %v1543 = vmul.f32 %v1529, %v411
    %v1544 = vmul.f32 %v1535, %v411
    %v1545 = vmul.f32 %v1541, %v411
    %v1546 = vld [vmem:[%s5] sm:$0xf]
    %v1547 = vadd.f32 %v1542, 1e-05
    %v1548 = vadd.f32 %v1543, 1e-05
    %v1549 = vadd.f32 %v1544, 1e-05
    %v1550 = vadd.f32 %v1545, 1e-05
    %v1551 = vrsqrt.pop %v1547
    %v1552 = vrsqrt.pop %v1548
    %v1553 = vrsqrt.pop %v1549
    %v1554 = vrsqrt.pop %v1550
    %v1559 = vcombine.low %v1551, %v1552
    %v1560 = vcombine.low %v1553, %v1554
    %v1562 = vunpack.c.l.s4 1966171168
    %v1563 = vunpack.c.0.s8 %v1562
    %v1564 = vlaneseq
    %v1565 = vshrl.u32 %v1564, 7
    %v1566 = vsub.s32 %v1563, %v1565
    %v1567 = vrot.slane %v1559, %v1566
    %v1569 = vunpack.c.l.s4 1966171168
    %v1570 = vunpack.c.0.s8 %v1569
    %v1571 = vlaneseq
    %v1572 = vshrl.u32 %v1571, 7
    %v1573 = vsub.s32 %v1570, %v1572
    %v1574 = vrot.slane %v1560, %v1573
    %v1575 = vcombine.low %v1567, %v1574
    %v1577 = vunpack.c.l.s4 1966171168
    %v1578 = vunpack.c.0.s8 %v1577
    %v1579 = vlaneseq
    %v1580 = vshrl.u32 %v1579, 7
    %v1581 = vsub.s32 %v1578, %v1580
    %v1582 = vrot.slane %v1575, %v1581
    %v1584 = vmul.f32 %v1546, %v1582
    %v1586 = vlaneseq
    %v1587 = vshrl.u32 %v1586, 7
    %v1588 = vsub.s32 0, %v1587
    %v1589 = vrot.slane %v1584, %v1588
    %v1590 = vlaneseq
    %v1591 = vshrl.u32 %v1590, 7
    %v1592 = vsub.s32 1, %v1591
    %v1593 = vrot.slane %v1584, %v1592
    %v1594 = vlaneseq
    %v1595 = vshrl.u32 %v1594, 7
    %v1596 = vsub.s32 2, %v1595
    %v1597 = vrot.slane %v1584, %v1596
    %v1598 = vlaneseq
    %v1599 = vshrl.u32 %v1598, 7
    %v1600 = vsub.s32 3, %v1599
    %v1601 = vrot.slane %v1584, %v1600
    %v1606 = vmul.f32 %v1510, %v1589
    %v1607 = vmul.f32 %v1511, %v1593
    %v1608 = vmul.f32 %v1512, %v1597
    %v1609 = vmul.f32 %v1513, %v1601
    %v1610 = vld [vmem:[#allocation10] sm:$0xf]
    %v1612 = vlaneseq
    %v1613 = vshrl.u32 %v1612, 7
    %v1614 = vsub.s32 0, %v1613
    %v1615 = vrot.slane %v1610, %v1614
    %v1616 = vlaneseq
    %v1617 = vshrl.u32 %v1616, 7
    %v1618 = vsub.s32 1, %v1617
    %v1619 = vrot.slane %v1610, %v1618
    %v1620 = vlaneseq
    %v1621 = vshrl.u32 %v1620, 7
    %v1622 = vsub.s32 2, %v1621
    %v1623 = vrot.slane %v1610, %v1622
    %v1624 = vlaneseq
    %v1625 = vshrl.u32 %v1624, 7
    %v1626 = vsub.s32 3, %v1625
    %v1627 = vrot.slane %v1610, %v1626
    %v1632 = vadd.f32 %v1606, %v1615
    %v1633 = vadd.f32 %v1607, %v1619
    %v1634 = vadd.f32 %v1608, %v1623
    %v1635 = vadd.f32 %v1609, %v1627
    %v1636 = vmax.f32 %v1632, 0.0
    %v1637 = vmax.f32 %v1633, 0.0
    %v1638 = vmax.f32 %v1634, 0.0
    %v1639 = vmax.f32 %v1635, 0.0
    %v1640 = vpack.c.bf16 %v1636, %v1636
    %v1641 = vpack.c.bf16 %v1637, %v1637
    %v1642 = vpack.c.bf16 %v1638, %v1638
    %v1643 = vpack.c.bf16 %v1639, %v1639
    %v1644 = vld [vmem:[#allocation11] sm:$0xff]
    %v1645 = vld [vmem:[#allocation11 + $0x8] sm:$0xff]
    %v1646 = vld [vmem:[#allocation11 + $0x10] sm:$0xff]
    %v1647 = vld [vmem:[#allocation11 + $0x18] sm:$0xff]
    %v1648 = vld [vmem:[#allocation11 + $0x20] sm:$0xff]
    %v1649 = vld [vmem:[#allocation11 + $0x28] sm:$0xff]
    %v1650 = vld [vmem:[#allocation11 + $0x30] sm:$0xff]
    %v1651 = vld [vmem:[#allocation11 + $0x38] sm:$0xff]
    %v1652 = vld [vmem:[#allocation11 + $0x40] sm:$0xff]
    %v1653 = vld [vmem:[#allocation11 + $0x48] sm:$0xff]
    %v1654 = vld [vmem:[#allocation11 + $0x50] sm:$0xff]
    %v1655 = vld [vmem:[#allocation11 + $0x58] sm:$0xff]
    %v1656 = vld [vmem:[#allocation11 + $0x60] sm:$0xff]
    %v1657 = vld [vmem:[#allocation11 + $0x68] sm:$0xff]
    %v1658 = vld [vmem:[#allocation11 + $0x70] sm:$0xff]
    %v1659 = vld [vmem:[#allocation11 + $0x78] sm:$0xff]
    %v1660 = vld [vmem:[#allocation11 + $0x80] sm:$0xff]
    %v1661 = vld [vmem:[#allocation11 + $0x88] sm:$0xff]
    %v1662 = vld [vmem:[#allocation11 + $0x90] sm:$0xff]
    %v1663 = vld [vmem:[#allocation11 + $0x98] sm:$0xff]
    %v1664 = vld [vmem:[#allocation11 + $0xa0] sm:$0xff]
    %v1665 = vld [vmem:[#allocation11 + $0xa8] sm:$0xff]
    %v1666 = vld [vmem:[#allocation11 + $0xb0] sm:$0xff]
    %v1667 = vld [vmem:[#allocation11 + $0xb8] sm:$0xff]
    %v1668 = vld [vmem:[#allocation11 + $0xc0] sm:$0xff]
    %v1669 = vld [vmem:[#allocation11 + $0xc8] sm:$0xff]
    %v1670 = vld [vmem:[#allocation11 + $0xd0] sm:$0xff]
    %v1671 = vld [vmem:[#allocation11 + $0xd8] sm:$0xff]
    %v1672 = vld [vmem:[#allocation11 + $0xe0] sm:$0xff]
    %v1673 = vld [vmem:[#allocation11 + $0xe8] sm:$0xff]
    %v1674 = vld [vmem:[#allocation11 + $0xf0] sm:$0xff]
    %v1675 = vld [vmem:[#allocation11 + $0xf8] sm:$0xff]
    %v1676 = vld [vmem:[#allocation11 + $0x100] sm:$0xff]
    %v1677 = vld [vmem:[#allocation11 + $0x108] sm:$0xff]
    %v1678 = vld [vmem:[#allocation11 + $0x110] sm:$0xff]
    %v1679 = vld [vmem:[#allocation11 + $0x118] sm:$0xff]
    %v1680 = vld [vmem:[#allocation11 + $0x120] sm:$0xff]
    %v1681 = vld [vmem:[#allocation11 + $0x128] sm:$0xff]
    %v1682 = vld [vmem:[#allocation11 + $0x130] sm:$0xff]
    %v1683 = vld [vmem:[#allocation11 + $0x138] sm:$0xff]
    %v1684 = vld [vmem:[#allocation11 + $0x140] sm:$0xff]
    %v1685 = vld [vmem:[#allocation11 + $0x148] sm:$0xff]
    %v1686 = vld [vmem:[#allocation11 + $0x150] sm:$0xff]
    %v1687 = vld [vmem:[#allocation11 + $0x158] sm:$0xff]
    %v1688 = vld [vmem:[#allocation11 + $0x160] sm:$0xff]
    %v1689 = vld [vmem:[#allocation11 + $0x168] sm:$0xff]
    %v1690 = vld [vmem:[#allocation11 + $0x170] sm:$0xff]
    %v1691 = vld [vmem:[#allocation11 + $0x178] sm:$0xff]
    %v1692 = vld [vmem:[#allocation11 + $0x180] sm:$0xff]
    %v1693 = vld [vmem:[#allocation11 + $0x188] sm:$0xff]
    %v1694 = vld [vmem:[#allocation11 + $0x190] sm:$0xff]
    %v1695 = vld [vmem:[#allocation11 + $0x198] sm:$0xff]
    %v1696 = vld [vmem:[#allocation11 + $0x1a0] sm:$0xff]
    %v1697 = vld [vmem:[#allocation11 + $0x1a8] sm:$0xff]
    %v1698 = vld [vmem:[#allocation11 + $0x1b0] sm:$0xff]
    %v1699 = vld [vmem:[#allocation11 + $0x1b8] sm:$0xff]
    %v1700 = vld [vmem:[#allocation11 + $0x1c0] sm:$0xff]
    %v1701 = vld [vmem:[#allocation11 + $0x1c8] sm:$0xff]
    %v1702 = vld [vmem:[#allocation11 + $0x1d0] sm:$0xff]
    %v1703 = vld [vmem:[#allocation11 + $0x1d8] sm:$0xff]
    %v1704 = vld [vmem:[#allocation11 + $0x1e0] sm:$0xff]
    %v1705 = vld [vmem:[#allocation11 + $0x1e8] sm:$0xff]
    %v1706 = vld [vmem:[#allocation11 + $0x1f0] sm:$0xff]
    %v1707 = vld [vmem:[#allocation11 + $0x1f8] sm:$0xff]
    %v1772 = vunpack.c.l.b16 %v1644
    %v1773 = vunpack.c.h.b16 %v1644
    %v1774 = vunpack.c.l.b16 %v1645
    %v1775 = vunpack.c.h.b16 %v1645
    %v1776 = vunpack.c.l.b16 %v1646
    %v1777 = vunpack.c.h.b16 %v1646
    %v1778 = vunpack.c.l.b16 %v1647
    %v1779 = vunpack.c.h.b16 %v1647
    %v1780 = vunpack.c.l.b16 %v1648
    %v1781 = vunpack.c.h.b16 %v1648
    %v1782 = vunpack.c.l.b16 %v1649
    %v1783 = vunpack.c.h.b16 %v1649
    %v1784 = vunpack.c.l.b16 %v1650
    %v1785 = vunpack.c.h.b16 %v1650
    %v1786 = vunpack.c.l.b16 %v1651
    %v1787 = vunpack.c.h.b16 %v1651
    %v1788 = vunpack.c.l.b16 %v1652
    %v1789 = vunpack.c.h.b16 %v1652
    %v1790 = vunpack.c.l.b16 %v1653
    %v1791 = vunpack.c.h.b16 %v1653
    %v1792 = vunpack.c.l.b16 %v1654
    %v1793 = vunpack.c.h.b16 %v1654
    %v1794 = vunpack.c.l.b16 %v1655
    %v1795 = vunpack.c.h.b16 %v1655
    %v1796 = vunpack.c.l.b16 %v1656
    %v1797 = vunpack.c.h.b16 %v1656
    %v1798 = vunpack.c.l.b16 %v1657
    %v1799 = vunpack.c.h.b16 %v1657
    %v1800 = vunpack.c.l.b16 %v1658
    %v1801 = vunpack.c.h.b16 %v1658
    %v1802 = vunpack.c.l.b16 %v1659
    %v1803 = vunpack.c.h.b16 %v1659
    %v1804 = vunpack.c.l.b16 %v1660
    %v1805 = vunpack.c.h.b16 %v1660
    %v1806 = vunpack.c.l.b16 %v1661
    %v1807 = vunpack.c.h.b16 %v1661
    %v1808 = vunpack.c.l.b16 %v1662
    %v1809 = vunpack.c.h.b16 %v1662
    %v1810 = vunpack.c.l.b16 %v1663
    %v1811 = vunpack.c.h.b16 %v1663
    %v1812 = vunpack.c.l.b16 %v1664
    %v1813 = vunpack.c.h.b16 %v1664
    %v1814 = vunpack.c.l.b16 %v1665
    %v1815 = vunpack.c.h.b16 %v1665
    %v1816 = vunpack.c.l.b16 %v1666
    %v1817 = vunpack.c.h.b16 %v1666
    %v1818 = vunpack.c.l.b16 %v1667
    %v1819 = vunpack.c.h.b16 %v1667
    %v1820 = vunpack.c.l.b16 %v1668
    %v1821 = vunpack.c.h.b16 %v1668
    %v1822 = vunpack.c.l.b16 %v1669
    %v1823 = vunpack.c.h.b16 %v1669
    %v1824 = vunpack.c.l.b16 %v1670
    %v1825 = vunpack.c.h.b16 %v1670
    %v1826 = vunpack.c.l.b16 %v1671
    %v1827 = vunpack.c.h.b16 %v1671
    %v1828 = vunpack.c.l.b16 %v1672
    %v1829 = vunpack.c.h.b16 %v1672
    %v1830 = vunpack.c.l.b16 %v1673
    %v1831 = vunpack.c.h.b16 %v1673
    %v1832 = vunpack.c.l.b16 %v1674
    %v1833 = vunpack.c.h.b16 %v1674
    %v1834 = vunpack.c.l.b16 %v1675
    %v1835 = vunpack.c.h.b16 %v1675
    %v1836 = vunpack.c.l.b16 %v1676
    %v1837 = vunpack.c.h.b16 %v1676
    %v1838 = vunpack.c.l.b16 %v1677
    %v1839 = vunpack.c.h.b16 %v1677
    %v1840 = vunpack.c.l.b16 %v1678
    %v1841 = vunpack.c.h.b16 %v1678
    %v1842 = vunpack.c.l.b16 %v1679
    %v1843 = vunpack.c.h.b16 %v1679
    %v1844 = vunpack.c.l.b16 %v1680
    %v1845 = vunpack.c.h.b16 %v1680
    %v1846 = vunpack.c.l.b16 %v1681
    %v1847 = vunpack.c.h.b16 %v1681
    %v1848 = vunpack.c.l.b16 %v1682
    %v1849 = vunpack.c.h.b16 %v1682
    %v1850 = vunpack.c.l.b16 %v1683
    %v1851 = vunpack.c.h.b16 %v1683
    %v1852 = vunpack.c.l.b16 %v1684
    %v1853 = vunpack.c.h.b16 %v1684
    %v1854 = vunpack.c.l.b16 %v1685
    %v1855 = vunpack.c.h.b16 %v1685
    %v1856 = vunpack.c.l.b16 %v1686
    %v1857 = vunpack.c.h.b16 %v1686
    %v1858 = vunpack.c.l.b16 %v1687
    %v1859 = vunpack.c.h.b16 %v1687
    %v1860 = vunpack.c.l.b16 %v1688
    %v1861 = vunpack.c.h.b16 %v1688
    %v1862 = vunpack.c.l.b16 %v1689
    %v1863 = vunpack.c.h.b16 %v1689
    %v1864 = vunpack.c.l.b16 %v1690
    %v1865 = vunpack.c.h.b16 %v1690
    %v1866 = vunpack.c.l.b16 %v1691
    %v1867 = vunpack.c.h.b16 %v1691
    %v1868 = vunpack.c.l.b16 %v1692
    %v1869 = vunpack.c.h.b16 %v1692
    %v1870 = vunpack.c.l.b16 %v1693
    %v1871 = vunpack.c.h.b16 %v1693
    %v1872 = vunpack.c.l.b16 %v1694
    %v1873 = vunpack.c.h.b16 %v1694
    %v1874 = vunpack.c.l.b16 %v1695
    %v1875 = vunpack.c.h.b16 %v1695
    %v1876 = vunpack.c.l.b16 %v1696
    %v1877 = vunpack.c.h.b16 %v1696
    %v1878 = vunpack.c.l.b16 %v1697
    %v1879 = vunpack.c.h.b16 %v1697
    %v1880 = vunpack.c.l.b16 %v1698
    %v1881 = vunpack.c.h.b16 %v1698
    %v1882 = vunpack.c.l.b16 %v1699
    %v1883 = vunpack.c.h.b16 %v1699
    %v1884 = vunpack.c.l.b16 %v1700
    %v1885 = vunpack.c.h.b16 %v1700
    %v1886 = vunpack.c.l.b16 %v1701
    %v1887 = vunpack.c.h.b16 %v1701
    %v1888 = vunpack.c.l.b16 %v1702
    %v1889 = vunpack.c.h.b16 %v1702
    %v1890 = vunpack.c.l.b16 %v1703
    %v1891 = vunpack.c.h.b16 %v1703
    %v1892 = vunpack.c.l.b16 %v1704
    %v1893 = vunpack.c.h.b16 %v1704
    %v1894 = vunpack.c.l.b16 %v1705
    %v1895 = vunpack.c.h.b16 %v1705
    %v1896 = vunpack.c.l.b16 %v1706
    %v1897 = vunpack.c.h.b16 %v1706
    %v1898 = vunpack.c.l.b16 %v1707
    %v1899 = vunpack.c.h.b16 %v1707
    %v1900 = vpack.c.b16 %v1774, %v1772
    %v1901 = vpack.c.b16 %v1775, %v1773
    %v1902 = vpack.c.b16 %v1778, %v1776
    %v1903 = vpack.c.b16 %v1779, %v1777
    %v1904 = vpack.c.b16 %v1782, %v1780
    %v1905 = vpack.c.b16 %v1783, %v1781
    %v1906 = vpack.c.b16 %v1786, %v1784
    %v1907 = vpack.c.b16 %v1787, %v1785
    %v1908 = vpack.c.b16 %v1790, %v1788
    %v1909 = vpack.c.b16 %v1791, %v1789
    %v1910 = vpack.c.b16 %v1794, %v1792
    %v1911 = vpack.c.b16 %v1795, %v1793
    %v1912 = vpack.c.b16 %v1798, %v1796
    %v1913 = vpack.c.b16 %v1799, %v1797
    %v1914 = vpack.c.b16 %v1802, %v1800
    %v1915 = vpack.c.b16 %v1803, %v1801
    %v1916 = vpack.c.b16 %v1806, %v1804
    %v1917 = vpack.c.b16 %v1807, %v1805
    %v1918 = vpack.c.b16 %v1810, %v1808
    %v1919 = vpack.c.b16 %v1811, %v1809
    %v1920 = vpack.c.b16 %v1814, %v1812
    %v1921 = vpack.c.b16 %v1815, %v1813
    %v1922 = vpack.c.b16 %v1818, %v1816
    %v1923 = vpack.c.b16 %v1819, %v1817
    %v1924 = vpack.c.b16 %v1822, %v1820
    %v1925 = vpack.c.b16 %v1823, %v1821
    %v1926 = vpack.c.b16 %v1826, %v1824
    %v1927 = vpack.c.b16 %v1827, %v1825
    %v1928 = vpack.c.b16 %v1830, %v1828
    %v1929 = vpack.c.b16 %v1831, %v1829
    %v1930 = vpack.c.b16 %v1834, %v1832
    %v1931 = vpack.c.b16 %v1835, %v1833
    %v1932 = vpack.c.b16 %v1838, %v1836
    %v1933 = vpack.c.b16 %v1839, %v1837
    %v1934 = vpack.c.b16 %v1842, %v1840
    %v1935 = vpack.c.b16 %v1843, %v1841
    %v1936 = vpack.c.b16 %v1846, %v1844
    %v1937 = vpack.c.b16 %v1847, %v1845
    %v1938 = vpack.c.b16 %v1850, %v1848
    %v1939 = vpack.c.b16 %v1851, %v1849
    %v1940 = vpack.c.b16 %v1854, %v1852
    %v1941 = vpack.c.b16 %v1855, %v1853
    %v1942 = vpack.c.b16 %v1858, %v1856
    %v1943 = vpack.c.b16 %v1859, %v1857
    %v1944 = vpack.c.b16 %v1862, %v1860
    %v1945 = vpack.c.b16 %v1863, %v1861
    %v1946 = vpack.c.b16 %v1866, %v1864
    %v1947 = vpack.c.b16 %v1867, %v1865
    %v1948 = vpack.c.b16 %v1870, %v1868
    %v1949 = vpack.c.b16 %v1871, %v1869
    %v1950 = vpack.c.b16 %v1874, %v1872
    %v1951 = vpack.c.b16 %v1875, %v1873
    %v1952 = vpack.c.b16 %v1878, %v1876
    %v1953 = vpack.c.b16 %v1879, %v1877
    %v1954 = vpack.c.b16 %v1882, %v1880
    %v1955 = vpack.c.b16 %v1883, %v1881
    %v1956 = vpack.c.b16 %v1886, %v1884
    %v1957 = vpack.c.b16 %v1887, %v1885
    %v1958 = vpack.c.b16 %v1890, %v1888
    %v1959 = vpack.c.b16 %v1891, %v1889
    %v1960 = vpack.c.b16 %v1894, %v1892
    %v1961 = vpack.c.b16 %v1895, %v1893
    %v1962 = vpack.c.b16 %v1898, %v1896
    %v1963 = vpack.c.b16 %v1899, %v1897
    %2028 = vmatprep.subr.bf16.mxu0 %v1915
    %2029 = vmatpush1.bf16.msra.mxu0 %v1914
    %2030 = vmatprep.subr.bf16.mxu0 %v1913
    %2031 = vmatpush1.bf16.msra.mxu0 %v1912
    %2032 = vmatprep.subr.bf16.mxu0 %v1911
    %2033 = vmatpush1.bf16.msra.mxu0 %v1910
    %2034 = vmatprep.subr.bf16.mxu0 %v1909
    %2035 = vmatpush1.bf16.msra.mxu0 %v1908
    %2036 = vmatprep.subr.bf16.mxu0 %v1907
    %2037 = vmatpush1.bf16.msra.mxu0 %v1906
    %2038 = vmatprep.subr.bf16.mxu0 %v1905
    %2039 = vmatpush1.bf16.msra.mxu0 %v1904
    %2040 = vmatprep.subr.bf16.mxu0 %v1903
    %2041 = vmatpush1.bf16.msra.mxu0 %v1902
    %2042 = vmatprep.subr.bf16.mxu0 %v1901
    %2043 = vmatpush1.bf16.msra.mxu0 %v1900
    %2044 = vmatprep.subr.bf16.mxu0 %v1931
    %2045 = vmatpush2.bf16.msra.mxu0 %v1930
    %2046 = vmatprep.subr.bf16.mxu0 %v1929
    %2047 = vmatpush2.bf16.msra.mxu0 %v1928
    %2048 = vmatprep.subr.bf16.mxu0 %v1927
    %2049 = vmatpush2.bf16.msra.mxu0 %v1926
    %2050 = vmatprep.subr.bf16.mxu0 %v1925
    %2051 = vmatpush2.bf16.msra.mxu0 %v1924
    %2052 = vmatprep.subr.bf16.mxu0 %v1923
    %2053 = vmatpush2.bf16.msra.mxu0 %v1922
    %2054 = vmatprep.subr.bf16.mxu0 %v1921
    %2055 = vmatpush2.bf16.msra.mxu0 %v1920
    %2056 = vmatprep.subr.bf16.mxu0 %v1919
    %2057 = vmatpush2.bf16.msra.mxu0 %v1918
    %2058 = vmatprep.subr.bf16.mxu0 %v1917
    %2059 = vmatpush2.bf16.msra.mxu0 %v1916
    %2060 = vmatprep.mubr.bf16.mxu0 %v1641
    %2061 = vmatmul.mubr.bf16.gmra.mxu0 %v1640
    %v2062 = vpop.f32.mrf.mxu0
    %v2063 = vadd.f32 0.0, %v2062
    %v2064 = vpop.f32.mrf.mxu0
    %v2065 = vadd.f32 0.0, %v2064
    %v2066 = vpop.f32.mrf.mxu0
    %v2067 = vpop.f32.mrf.mxu0
    %2068 = vdwg.mxu0
    %2069 = vmatprep.subr.bf16.mxu0 %v1947
    %2070 = vmatpush1.bf16.msra.mxu0 %v1946
    %2071 = vmatprep.subr.bf16.mxu0 %v1945
    %2072 = vmatpush1.bf16.msra.mxu0 %v1944
    %2073 = vmatprep.subr.bf16.mxu0 %v1943
    %2074 = vmatpush1.bf16.msra.mxu0 %v1942
    %2075 = vmatprep.subr.bf16.mxu0 %v1941
    %2076 = vmatpush1.bf16.msra.mxu0 %v1940
    %2077 = vmatprep.subr.bf16.mxu0 %v1939
    %2078 = vmatpush1.bf16.msra.mxu0 %v1938
    %2079 = vmatprep.subr.bf16.mxu0 %v1937
    %2080 = vmatpush1.bf16.msra.mxu0 %v1936
    %2081 = vmatprep.subr.bf16.mxu0 %v1935
    %2082 = vmatpush1.bf16.msra.mxu0 %v1934
    %2083 = vmatprep.subr.bf16.mxu0 %v1933
    %2084 = vmatpush1.bf16.msra.mxu0 %v1932
    %2085 = vmatprep.subr.bf16.mxu0 %v1963
    %2086 = vmatpush2.bf16.msra.mxu0 %v1962
    %2087 = vmatprep.subr.bf16.mxu0 %v1961
    %2088 = vmatpush2.bf16.msra.mxu0 %v1960
    %2089 = vmatprep.subr.bf16.mxu0 %v1959
    %2090 = vmatpush2.bf16.msra.mxu0 %v1958
    %2091 = vmatprep.subr.bf16.mxu0 %v1957
    %2092 = vmatpush2.bf16.msra.mxu0 %v1956
    %2093 = vmatprep.subr.bf16.mxu0 %v1955
    %2094 = vmatpush2.bf16.msra.mxu0 %v1954
    %2095 = vmatprep.subr.bf16.mxu0 %v1953
    %2096 = vmatpush2.bf16.msra.mxu0 %v1952
    %2097 = vmatprep.subr.bf16.mxu0 %v1951
    %2098 = vmatpush2.bf16.msra.mxu0 %v1950
    %2099 = vmatprep.subr.bf16.mxu0 %v1949
    %2100 = vmatpush2.bf16.msra.mxu0 %v1948
    %2101 = vmatprep.mubr.bf16.mxu0 %v1643
    %2102 = vmatmul.mubr.bf16.gmra.mxu0 %v1642
    %v2103 = vpop.f32.mrf.mxu0
    %v2104 = vadd.f32 %v2063, %v2103
    %v2105 = vpop.f32.mrf.mxu0
    %v2106 = vadd.f32 %v2065, %v2105
    %v2107 = vpop.f32.mrf.mxu0
    %v2108 = vpop.f32.mrf.mxu0
    %2109 = vdwg.mxu0
    %v2110 = vrot.slane %v2104, 4
    %v2111 = vadd.f32 %v2104, %v2110
    %v2112 = vrot.slane %v2111, 2
    %v2113 = vadd.f32 %v2111, %v2112
    %v2114 = vrot.slane %v2113, 1
    %v2115 = vadd.f32 %v2113, %v2114
    %v2116 = vrot.slane %v2106, 4
    %v2117 = vadd.f32 %v2106, %v2116
    %v2118 = vrot.slane %v2117, 2
    %v2119 = vadd.f32 %v2117, %v2118
    %v2120 = vrot.slane %v2119, 1
    %v2121 = vadd.f32 %v2119, %v2120
    %v2122 = vmul.f32 %v2115, %v411
    %v2123 = vmul.f32 %v2121, %v411
    %v2124 = vsub.f32 %v2104, %v2122
    %v2125 = vsub.f32 %v2106, %v2123
    %v2126 = vmul.f32 %v2124, %v2124
    %v2127 = vmul.f32 %v2125, %v2125
    %v2128 = vrot.slane %v2126, 4
    %v2129 = vadd.f32 %v2126, %v2128
    %v2130 = vrot.slane %v2129, 2
    %v2131 = vadd.f32 %v2129, %v2130
    %v2132 = vrot.slane %v2131, 1
    %v2133 = vadd.f32 %v2131, %v2132
    %v2134 = vrot.slane %v2127, 4
    %v2135 = vadd.f32 %v2127, %v2134
    %v2136 = vrot.slane %v2135, 2
    %v2137 = vadd.f32 %v2135, %v2136
    %v2138 = vrot.slane %v2137, 1
    %v2139 = vadd.f32 %v2137, %v2138
    %v2140 = vmul.f32 %v2133, %v411
    %v2141 = vmul.f32 %v2139, %v411
    %v2142 = vld [vmem:[#allocation13] sm:$0x3]
    %v2143 = vadd.f32 %v2140, 1e-05
    %v2144 = vadd.f32 %v2141, 1e-05
    %v2145 = vrsqrt.pop %v2143
    %v2146 = vrsqrt.pop %v2144
    %v2149 = vcombine.low %v2145, %v2146
    %v2151 = vunpack.c.l.s4 1966171168
    %v2152 = vunpack.c.0.s8 %v2151
    %v2153 = vlaneseq
    %v2154 = vshrl.u32 %v2153, 7
    %v2155 = vsub.s32 %v2152, %v2154
    %v2156 = vrot.slane %v2149, %v2155
    %v2158 = vunpack.c.l.s4 1966171168
    %v2159 = vunpack.c.0.s8 %v2158
    %v2160 = vlaneseq
    %v2161 = vshrl.u32 %v2160, 7
    %v2162 = vsub.s32 %v2159, %v2161
    %v2163 = vrot.slane %v2156, %v2162
    %v2165 = vmul.f32 %v2142, %v2163
    %v2167 = vlaneseq
    %v2168 = vshrl.u32 %v2167, 7
    %v2169 = vsub.s32 0, %v2168
    %v2170 = vrot.slane %v2165, %v2169
    %v2171 = vlaneseq
    %v2172 = vshrl.u32 %v2171, 7
    %v2173 = vsub.s32 1, %v2172
    %v2174 = vrot.slane %v2165, %v2173
    %v2177 = vmul.f32 %v2124, %v2170
    %v2178 = vmul.f32 %v2125, %v2174
    %v2179 = vld [vmem:[#allocation14] sm:$0x3]
    %v2181 = vlaneseq
    %v2182 = vshrl.u32 %v2181, 7
    %v2183 = vsub.s32 0, %v2182
    %v2184 = vrot.slane %v2179, %v2183
    %v2185 = vlaneseq
    %v2186 = vshrl.u32 %v2185, 7
    %v2187 = vsub.s32 1, %v2186
    %v2188 = vrot.slane %v2179, %v2187
    %v2191 = vadd.f32 %v2177, %v2184
    %v2192 = vadd.f32 %v2178, %v2188
    %v2193 = vpack.c.bf16 %v2191, %v2191
    %v2194 = vpack.c.bf16 %v2192, %v2192
    %v2195 = vld [vmem:[#allocation16] sm:$0xff]
    %v2196 = vld [vmem:[#allocation16 + $0x8] sm:$0xff]
    %v2197 = vld [vmem:[#allocation16 + $0x10] sm:$0xff]
    %v2198 = vld [vmem:[#allocation16 + $0x18] sm:$0xff]
    %v2199 = vld [vmem:[#allocation16 + $0x20] sm:$0xff]
    %v2200 = vld [vmem:[#allocation16 + $0x28] sm:$0xff]
    %v2201 = vld [vmem:[#allocation16 + $0x30] sm:$0xff]
    %v2202 = vld [vmem:[#allocation16 + $0x38] sm:$0xff]
    %v2203 = vld [vmem:[#allocation16 + $0x40] sm:$0xff]
    %v2204 = vld [vmem:[#allocation16 + $0x48] sm:$0xff]
    %v2205 = vld [vmem:[#allocation16 + $0x50] sm:$0xff]
    %v2206 = vld [vmem:[#allocation16 + $0x58] sm:$0xff]
    %v2207 = vld [vmem:[#allocation16 + $0x60] sm:$0xff]
    %v2208 = vld [vmem:[#allocation16 + $0x68] sm:$0xff]
    %v2209 = vld [vmem:[#allocation16 + $0x70] sm:$0xff]
    %v2210 = vld [vmem:[#allocation16 + $0x78] sm:$0xff]
    %v2211 = vld [vmem:[#allocation16 + $0x80] sm:$0xff]
    %v2212 = vld [vmem:[#allocation16 + $0x88] sm:$0xff]
    %v2213 = vld [vmem:[#allocation16 + $0x90] sm:$0xff]
    %v2214 = vld [vmem:[#allocation16 + $0x98] sm:$0xff]
    %v2215 = vld [vmem:[#allocation16 + $0xa0] sm:$0xff]
    %v2216 = vld [vmem:[#allocation16 + $0xa8] sm:$0xff]
    %v2217 = vld [vmem:[#allocation16 + $0xb0] sm:$0xff]
    %v2218 = vld [vmem:[#allocation16 + $0xb8] sm:$0xff]
    %v2219 = vld [vmem:[#allocation16 + $0xc0] sm:$0xff]
    %v2220 = vld [vmem:[#allocation16 + $0xc8] sm:$0xff]
    %v2221 = vld [vmem:[#allocation16 + $0xd0] sm:$0xff]
    %v2222 = vld [vmem:[#allocation16 + $0xd8] sm:$0xff]
    %v2223 = vld [vmem:[#allocation16 + $0xe0] sm:$0xff]
    %v2224 = vld [vmem:[#allocation16 + $0xe8] sm:$0xff]
    %v2225 = vld [vmem:[#allocation16 + $0xf0] sm:$0xff]
    %v2226 = vld [vmem:[#allocation16 + $0xf8] sm:$0xff]
    %v2227 = vld [vmem:[#allocation16 + $0x100] sm:$0xff]
    %v2228 = vld [vmem:[#allocation16 + $0x108] sm:$0xff]
    %v2229 = vld [vmem:[#allocation16 + $0x110] sm:$0xff]
    %v2230 = vld [vmem:[#allocation16 + $0x118] sm:$0xff]
    %v2231 = vld [vmem:[#allocation16 + $0x120] sm:$0xff]
    %v2232 = vld [vmem:[#allocation16 + $0x128] sm:$0xff]
    %v2233 = vld [vmem:[#allocation16 + $0x130] sm:$0xff]
    %v2234 = vld [vmem:[#allocation16 + $0x138] sm:$0xff]
    %v2235 = vld [vmem:[#allocation16 + $0x140] sm:$0xff]
    %v2236 = vld [vmem:[#allocation16 + $0x148] sm:$0xff]
    %v2237 = vld [vmem:[#allocation16 + $0x150] sm:$0xff]
    %v2238 = vld [vmem:[#allocation16 + $0x158] sm:$0xff]
    %v2239 = vld [vmem:[#allocation16 + $0x160] sm:$0xff]
    %v2240 = vld [vmem:[#allocation16 + $0x168] sm:$0xff]
    %v2241 = vld [vmem:[#allocation16 + $0x170] sm:$0xff]
    %v2242 = vld [vmem:[#allocation16 + $0x178] sm:$0xff]
    %v2243 = vld [vmem:[#allocation16 + $0x180] sm:$0xff]
    %v2244 = vld [vmem:[#allocation16 + $0x188] sm:$0xff]
    %v2245 = vld [vmem:[#allocation16 + $0x190] sm:$0xff]
    %v2246 = vld [vmem:[#allocation16 + $0x198] sm:$0xff]
    %v2247 = vld [vmem:[#allocation16 + $0x1a0] sm:$0xff]
    %v2248 = vld [vmem:[#allocation16 + $0x1a8] sm:$0xff]
    %v2249 = vld [vmem:[#allocation16 + $0x1b0] sm:$0xff]
    %v2250 = vld [vmem:[#allocation16 + $0x1b8] sm:$0xff]
    %v2251 = vld [vmem:[#allocation16 + $0x1c0] sm:$0xff]
    %v2252 = vld [vmem:[#allocation16 + $0x1c8] sm:$0xff]
    %v2253 = vld [vmem:[#allocation16 + $0x1d0] sm:$0xff]
    %v2254 = vld [vmem:[#allocation16 + $0x1d8] sm:$0xff]
    %v2255 = vld [vmem:[#allocation16 + $0x1e0] sm:$0xff]
    %v2256 = vld [vmem:[#allocation16 + $0x1e8] sm:$0xff]
    %v2257 = vld [vmem:[#allocation16 + $0x1f0] sm:$0xff]
    %v2258 = vld [vmem:[#allocation16 + $0x1f8] sm:$0xff]
    %v2323 = vunpack.c.l.b16 %v2195
    %v2324 = vunpack.c.h.b16 %v2195
    %v2325 = vunpack.c.l.b16 %v2196
    %v2326 = vunpack.c.h.b16 %v2196
    %v2327 = vunpack.c.l.b16 %v2197
    %v2328 = vunpack.c.h.b16 %v2197
    %v2329 = vunpack.c.l.b16 %v2198
    %v2330 = vunpack.c.h.b16 %v2198
    %v2331 = vunpack.c.l.b16 %v2199
    %v2332 = vunpack.c.h.b16 %v2199
    %v2333 = vunpack.c.l.b16 %v2200
    %v2334 = vunpack.c.h.b16 %v2200
    %v2335 = vunpack.c.l.b16 %v2201
    %v2336 = vunpack.c.h.b16 %v2201
    %v2337 = vunpack.c.l.b16 %v2202
    %v2338 = vunpack.c.h.b16 %v2202
    %v2339 = vunpack.c.l.b16 %v2203
    %v2340 = vunpack.c.h.b16 %v2203
    %v2341 = vunpack.c.l.b16 %v2204
    %v2342 = vunpack.c.h.b16 %v2204
    %v2343 = vunpack.c.l.b16 %v2205
    %v2344 = vunpack.c.h.b16 %v2205
    %v2345 = vunpack.c.l.b16 %v2206
    %v2346 = vunpack.c.h.b16 %v2206
    %v2347 = vunpack.c.l.b16 %v2207
    %v2348 = vunpack.c.h.b16 %v2207
    %v2349 = vunpack.c.l.b16 %v2208
    %v2350 = vunpack.c.h.b16 %v2208
    %v2351 = vunpack.c.l.b16 %v2209
    %v2352 = vunpack.c.h.b16 %v2209
    %v2353 = vunpack.c.l.b16 %v2210
    %v2354 = vunpack.c.h.b16 %v2210
    %v2355 = vunpack.c.l.b16 %v2211
    %v2356 = vunpack.c.h.b16 %v2211
    %v2357 = vunpack.c.l.b16 %v2212
    %v2358 = vunpack.c.h.b16 %v2212
    %v2359 = vunpack.c.l.b16 %v2213
    %v2360 = vunpack.c.h.b16 %v2213
    %v2361 = vunpack.c.l.b16 %v2214
    %v2362 = vunpack.c.h.b16 %v2214
    %v2363 = vunpack.c.l.b16 %v2215
    %v2364 = vunpack.c.h.b16 %v2215
    %v2365 = vunpack.c.l.b16 %v2216
    %v2366 = vunpack.c.h.b16 %v2216
    %v2367 = vunpack.c.l.b16 %v2217
    %v2368 = vunpack.c.h.b16 %v2217
    %v2369 = vunpack.c.l.b16 %v2218
    %v2370 = vunpack.c.h.b16 %v2218
    %v2371 = vunpack.c.l.b16 %v2219
    %v2372 = vunpack.c.h.b16 %v2219
    %v2373 = vunpack.c.l.b16 %v2220
    %v2374 = vunpack.c.h.b16 %v2220
    %v2375 = vunpack.c.l.b16 %v2221
    %v2376 = vunpack.c.h.b16 %v2221
    %v2377 = vunpack.c.l.b16 %v2222
    %v2378 = vunpack.c.h.b16 %v2222
    %v2379 = vunpack.c.l.b16 %v2223
    %v2380 = vunpack.c.h.b16 %v2223
    %v2381 = vunpack.c.l.b16 %v2224
    %v2382 = vunpack.c.h.b16 %v2224
    %v2383 = vunpack.c.l.b16 %v2225
    %v2384 = vunpack.c.h.b16 %v2225
    %v2385 = vunpack.c.l.b16 %v2226
    %v2386 = vunpack.c.h.b16 %v2226
    %v2387 = vunpack.c.l.b16 %v2227
    %v2388 = vunpack.c.h.b16 %v2227
    %v2389 = vunpack.c.l.b16 %v2228
    %v2390 = vunpack.c.h.b16 %v2228
    %v2391 = vunpack.c.l.b16 %v2229
    %v2392 = vunpack.c.h.b16 %v2229
    %v2393 = vunpack.c.l.b16 %v2230
    %v2394 = vunpack.c.h.b16 %v2230
    %v2395 = vunpack.c.l.b16 %v2231
    %v2396 = vunpack.c.h.b16 %v2231
    %v2397 = vunpack.c.l.b16 %v2232
    %v2398 = vunpack.c.h.b16 %v2232
    %v2399 = vunpack.c.l.b16 %v2233
    %v2400 = vunpack.c.h.b16 %v2233
    %v2401 = vunpack.c.l.b16 %v2234
    %v2402 = vunpack.c.h.b16 %v2234
    %v2403 = vunpack.c.l.b16 %v2235
    %v2404 = vunpack.c.h.b16 %v2235
    %v2405 = vunpack.c.l.b16 %v2236
    %v2406 = vunpack.c.h.b16 %v2236
    %v2407 = vunpack.c.l.b16 %v2237
    %v2408 = vunpack.c.h.b16 %v2237
    %v2409 = vunpack.c.l.b16 %v2238
    %v2410 = vunpack.c.h.b16 %v2238
    %v2411 = vunpack.c.l.b16 %v2239
    %v2412 = vunpack.c.h.b16 %v2239
    %v2413 = vunpack.c.l.b16 %v2240
    %v2414 = vunpack.c.h.b16 %v2240
    %v2415 = vunpack.c.l.b16 %v2241
    %v2416 = vunpack.c.h.b16 %v2241
    %v2417 = vunpack.c.l.b16 %v2242
    %v2418 = vunpack.c.h.b16 %v2242
    %v2419 = vunpack.c.l.b16 %v2243
    %v2420 = vunpack.c.h.b16 %v2243
    %v2421 = vunpack.c.l.b16 %v2244
    %v2422 = vunpack.c.h.b16 %v2244
    %v2423 = vunpack.c.l.b16 %v2245
    %v2424 = vunpack.c.h.b16 %v2245
    %v2425 = vunpack.c.l.b16 %v2246
    %v2426 = vunpack.c.h.b16 %v2246
    %v2427 = vunpack.c.l.b16 %v2247
    %v2428 = vunpack.c.h.b16 %v2247
    %v2429 = vunpack.c.l.b16 %v2248
    %v2430 = vunpack.c.h.b16 %v2248
    %v2431 = vunpack.c.l.b16 %v2249
    %v2432 = vunpack.c.h.b16 %v2249
    %v2433 = vunpack.c.l.b16 %v2250
    %v2434 = vunpack.c.h.b16 %v2250
    %v2435 = vunpack.c.l.b16 %v2251
    %v2436 = vunpack.c.h.b16 %v2251
    %v2437 = vunpack.c.l.b16 %v2252
    %v2438 = vunpack.c.h.b16 %v2252
    %v2439 = vunpack.c.l.b16 %v2253
    %v2440 = vunpack.c.h.b16 %v2253
    %v2441 = vunpack.c.l.b16 %v2254
    %v2442 = vunpack.c.h.b16 %v2254
    %v2443 = vunpack.c.l.b16 %v2255
    %v2444 = vunpack.c.h.b16 %v2255
    %v2445 = vunpack.c.l.b16 %v2256
    %v2446 = vunpack.c.h.b16 %v2256
    %v2447 = vunpack.c.l.b16 %v2257
    %v2448 = vunpack.c.h.b16 %v2257
    %v2449 = vunpack.c.l.b16 %v2258
    %v2450 = vunpack.c.h.b16 %v2258
    %v2451 = vpack.c.b16 %v2327, %v2323
    %v2452 = vpack.c.b16 %v2328, %v2324
    %v2453 = vpack.c.b16 %v2329, %v2325
    %v2454 = vpack.c.b16 %v2330, %v2326
    %v2455 = vpack.c.b16 %v2335, %v2331
    %v2456 = vpack.c.b16 %v2336, %v2332
    %v2457 = vpack.c.b16 %v2337, %v2333
    %v2458 = vpack.c.b16 %v2338, %v2334
    %v2459 = vpack.c.b16 %v2343, %v2339
    %v2460 = vpack.c.b16 %v2344, %v2340
    %v2461 = vpack.c.b16 %v2345, %v2341
    %v2462 = vpack.c.b16 %v2346, %v2342
    %v2463 = vpack.c.b16 %v2351, %v2347
    %v2464 = vpack.c.b16 %v2352, %v2348
    %v2465 = vpack.c.b16 %v2353, %v2349
    %v2466 = vpack.c.b16 %v2354, %v2350
    %v2467 = vpack.c.b16 %v2359, %v2355
    %v2468 = vpack.c.b16 %v2360, %v2356
    %v2469 = vpack.c.b16 %v2361, %v2357
    %v2470 = vpack.c.b16 %v2362, %v2358
    %v2471 = vpack.c.b16 %v2367, %v2363
    %v2472 = vpack.c.b16 %v2368, %v2364
    %v2473 = vpack.c.b16 %v2369, %v2365
    %v2474 = vpack.c.b16 %v2370, %v2366
    %v2475 = vpack.c.b16 %v2375, %v2371
    %v2476 = vpack.c.b16 %v2376, %v2372
    %v2477 = vpack.c.b16 %v2377, %v2373
    %v2478 = vpack.c.b16 %v2378, %v2374
    %v2479 = vpack.c.b16 %v2383, %v2379
    %v2480 = vpack.c.b16 %v2384, %v2380
    %v2481 = vpack.c.b16 %v2385, %v2381
    %v2482 = vpack.c.b16 %v2386, %v2382
    %v2483 = vpack.c.b16 %v2391, %v2387
    %v2484 = vpack.c.b16 %v2392, %v2388
    %v2485 = vpack.c.b16 %v2393, %v2389
    %v2486 = vpack.c.b16 %v2394, %v2390
    %v2487 = vpack.c.b16 %v2399, %v2395
    %v2488 = vpack.c.b16 %v2400, %v2396
    %v2489 = vpack.c.b16 %v2401, %v2397
    %v2490 = vpack.c.b16 %v2402, %v2398
    %v2491 = vpack.c.b16 %v2407, %v2403
    %v2492 = vpack.c.b16 %v2408, %v2404
    %v2493 = vpack.c.b16 %v2409, %v2405
    %v2494 = vpack.c.b16 %v2410, %v2406
    %v2495 = vpack.c.b16 %v2415, %v2411
    %v2496 = vpack.c.b16 %v2416, %v2412
    %v2497 = vpack.c.b16 %v2417, %v2413
    %v2498 = vpack.c.b16 %v2418, %v2414
    %v2499 = vpack.c.b16 %v2423, %v2419
    %v2500 = vpack.c.b16 %v2424, %v2420
    %v2501 = vpack.c.b16 %v2425, %v2421
    %v2502 = vpack.c.b16 %v2426, %v2422
    %v2503 = vpack.c.b16 %v2431, %v2427
    %v2504 = vpack.c.b16 %v2432, %v2428
    %v2505 = vpack.c.b16 %v2433, %v2429
    %v2506 = vpack.c.b16 %v2434, %v2430
    %v2507 = vpack.c.b16 %v2439, %v2435
    %v2508 = vpack.c.b16 %v2440, %v2436
    %v2509 = vpack.c.b16 %v2441, %v2437
    %v2510 = vpack.c.b16 %v2442, %v2438
    %v2511 = vpack.c.b16 %v2447, %v2443
    %v2512 = vpack.c.b16 %v2448, %v2444
    %v2513 = vpack.c.b16 %v2449, %v2445
    %v2514 = vpack.c.b16 %v2450, %v2446
    %2579 = vmatprep.subr.bf16.mxu0 %v2480
    %2580 = vmatpush1.bf16.msra.mxu0 %v2479
    %2581 = vmatprep.subr.bf16.mxu0 %v2476
    %2582 = vmatpush1.bf16.msra.mxu0 %v2475
    %2583 = vmatprep.subr.bf16.mxu0 %v2472
    %2584 = vmatpush1.bf16.msra.mxu0 %v2471
    %2585 = vmatprep.subr.bf16.mxu0 %v2468
    %2586 = vmatpush1.bf16.msra.mxu0 %v2467
    %2587 = vmatprep.subr.bf16.mxu0 %v2464
    %2588 = vmatpush1.bf16.msra.mxu0 %v2463
    %2589 = vmatprep.subr.bf16.mxu0 %v2460
    %2590 = vmatpush1.bf16.msra.mxu0 %v2459
    %2591 = vmatprep.subr.bf16.mxu0 %v2456
    %2592 = vmatpush1.bf16.msra.mxu0 %v2455
    %2593 = vmatprep.subr.bf16.mxu0 %v2452
    %2594 = vmatpush1.bf16.msra.mxu0 %v2451
    %2595 = vmatprep.subr.bf16.mxu0 %v2512
    %2596 = vmatpush2.bf16.msra.mxu0 %v2511
    %2597 = vmatprep.subr.bf16.mxu0 %v2508
    %2598 = vmatpush2.bf16.msra.mxu0 %v2507
    %2599 = vmatprep.subr.bf16.mxu0 %v2504
    %2600 = vmatpush2.bf16.msra.mxu0 %v2503
    %2601 = vmatprep.subr.bf16.mxu0 %v2500
    %2602 = vmatpush2.bf16.msra.mxu0 %v2499
    %2603 = vmatprep.subr.bf16.mxu0 %v2496
    %2604 = vmatpush2.bf16.msra.mxu0 %v2495
    %2605 = vmatprep.subr.bf16.mxu0 %v2492
    %2606 = vmatpush2.bf16.msra.mxu0 %v2491
    %2607 = vmatprep.subr.bf16.mxu0 %v2488
    %2608 = vmatpush2.bf16.msra.mxu0 %v2487
    %2609 = vmatprep.subr.bf16.mxu0 %v2484
    %2610 = vmatpush2.bf16.msra.mxu0 %v2483
    %2611 = vmatprep.mubr.bf16.mxu0 %v2194
    %2612 = vmatmul.mubr.bf16.gmra.mxu0 %v2193
    %v2613 = vpop.f32.mrf.mxu0
    %v2614 = vadd.f32 0.0, %v2613
    %v2615 = vpop.f32.mrf.mxu0
    %v2616 = vadd.f32 0.0, %v2615
    %v2617 = vpop.f32.mrf.mxu0
    %v2618 = vpop.f32.mrf.mxu0
    %2619 = vdwg.mxu0
    %2620 = vmatprep.subr.bf16.mxu0 %v2482
    %2621 = vmatpush1.bf16.msra.mxu0 %v2481
    %2622 = vmatprep.subr.bf16.mxu0 %v2478
    %2623 = vmatpush1.bf16.msra.mxu0 %v2477
    %2624 = vmatprep.subr.bf16.mxu0 %v2474
    %2625 = vmatpush1.bf16.msra.mxu0 %v2473
    %2626 = vmatprep.subr.bf16.mxu0 %v2470
    %2627 = vmatpush1.bf16.msra.mxu0 %v2469
    %2628 = vmatprep.subr.bf16.mxu0 %v2466
    %2629 = vmatpush1.bf16.msra.mxu0 %v2465
    %2630 = vmatprep.subr.bf16.mxu0 %v2462
    %2631 = vmatpush1.bf16.msra.mxu0 %v2461
    %2632 = vmatprep.subr.bf16.mxu0 %v2458
    %2633 = vmatpush1.bf16.msra.mxu0 %v2457
    %2634 = vmatprep.subr.bf16.mxu0 %v2454
    %2635 = vmatpush1.bf16.msra.mxu0 %v2453
    %2636 = vmatprep.subr.bf16.mxu0 %v2514
    %2637 = vmatpush2.bf16.msra.mxu0 %v2513
    %2638 = vmatprep.subr.bf16.mxu0 %v2510
    %2639 = vmatpush2.bf16.msra.mxu0 %v2509
    %2640 = vmatprep.subr.bf16.mxu0 %v2506
    %2641 = vmatpush2.bf16.msra.mxu0 %v2505
    %2642 = vmatprep.subr.bf16.mxu0 %v2502
    %2643 = vmatpush2.bf16.msra.mxu0 %v2501
    %2644 = vmatprep.subr.bf16.mxu0 %v2498
    %2645 = vmatpush2.bf16.msra.mxu0 %v2497
    %2646 = vmatprep.subr.bf16.mxu0 %v2494
    %2647 = vmatpush2.bf16.msra.mxu0 %v2493
    %2648 = vmatprep.subr.bf16.mxu0 %v2490
    %2649 = vmatpush2.bf16.msra.mxu0 %v2489
    %2650 = vmatprep.subr.bf16.mxu0 %v2486
    %2651 = vmatpush2.bf16.msra.mxu0 %v2485
    %2652 = vmatprep.mubr.bf16.mxu0 %v2194
    %2653 = vmatmul.mubr.bf16.gmra.mxu0 %v2193
    %v2654 = vpop.f32.mrf.mxu0
    %v2655 = vadd.f32 0.0, %v2654
    %v2656 = vpop.f32.mrf.mxu0
    %v2657 = vadd.f32 0.0, %v2656
    %v2658 = vpop.f32.mrf.mxu0
    %v2659 = vpop.f32.mrf.mxu0
    %2660 = vdwg.mxu0
    %v2661 = vrot.slane %v2614, 4
    %v2662 = vadd.f32 %v2614, %v2661
    %v2663 = vrot.slane %v2662, 2
    %v2664 = vadd.f32 %v2662, %v2663
    %v2665 = vrot.slane %v2664, 1
    %v2666 = vadd.f32 %v2664, %v2665
    %v2667 = vrot.slane %v2616, 4
    %v2668 = vadd.f32 %v2616, %v2667
    %v2669 = vrot.slane %v2668, 2
    %v2670 = vadd.f32 %v2668, %v2669
    %v2671 = vrot.slane %v2670, 1
    %v2672 = vadd.f32 %v2670, %v2671
    %v2673 = vrot.slane %v2655, 4
    %v2674 = vadd.f32 %v2655, %v2673
    %v2675 = vrot.slane %v2674, 2
    %v2676 = vadd.f32 %v2674, %v2675
    %v2677 = vrot.slane %v2676, 1
    %v2678 = vadd.f32 %v2676, %v2677
    %v2679 = vrot.slane %v2657, 4
    %v2680 = vadd.f32 %v2657, %v2679
    %v2681 = vrot.slane %v2680, 2
    %v2682 = vadd.f32 %v2680, %v2681
    %v2683 = vrot.slane %v2682, 1
    %v2684 = vadd.f32 %v2682, %v2683
    %v2685 = vmul.f32 %v2666, %v411
    %v2686 = vmul.f32 %v2672, %v411
    %v2687 = vmul.f32 %v2678, %v411
    %v2688 = vmul.f32 %v2684, %v411
    %v2689 = vsub.f32 %v2614, %v2685
    %v2690 = vsub.f32 %v2616, %v2686
    %v2691 = vsub.f32 %v2655, %v2687
    %v2692 = vsub.f32 %v2657, %v2688
    %v2693 = vmul.f32 %v2689, %v2689
    %v2694 = vmul.f32 %v2690, %v2690
    %v2695 = vmul.f32 %v2691, %v2691
    %v2696 = vmul.f32 %v2692, %v2692
    %v2697 = vrot.slane %v2693, 4
    %v2698 = vadd.f32 %v2693, %v2697
    %v2699 = vrot.slane %v2698, 2
    %v2700 = vadd.f32 %v2698, %v2699
    %v2701 = vrot.slane %v2700, 1
    %v2702 = vadd.f32 %v2700, %v2701
    %v2703 = vrot.slane %v2694, 4
    %v2704 = vadd.f32 %v2694, %v2703
    %v2705 = vrot.slane %v2704, 2
    %v2706 = vadd.f32 %v2704, %v2705
    %v2707 = vrot.slane %v2706, 1
    %v2708 = vadd.f32 %v2706, %v2707
    %v2709 = vrot.slane %v2695, 4
    %v2710 = vadd.f32 %v2695, %v2709
    %v2711 = vrot.slane %v2710, 2
    %v2712 = vadd.f32 %v2710, %v2711
    %v2713 = vrot.slane %v2712, 1
    %v2714 = vadd.f32 %v2712, %v2713
    %v2715 = vrot.slane %v2696, 4
    %v2716 = vadd.f32 %v2696, %v2715
    %v2717 = vrot.slane %v2716, 2
    %v2718 = vadd.f32 %v2716, %v2717
    %v2719 = vrot.slane %v2718, 1
    %v2720 = vadd.f32 %v2718, %v2719
    %v2721 = vmul.f32 %v2702, %v411
    %v2722 = vmul.f32 %v2708, %v411
    %v2723 = vmul.f32 %v2714, %v411
    %v2724 = vmul.f32 %v2720, %v411
    %v2725 = vld [vmem:[%s11] sm:$0xf]
    %v2726 = vadd.f32 %v2721, 1e-05
    %v2727 = vadd.f32 %v2722, 1e-05
    %v2728 = vadd.f32 %v2723, 1e-05
    %v2729 = vadd.f32 %v2724, 1e-05
    %v2730 = vrsqrt.pop %v2726
    %v2731 = vrsqrt.pop %v2727
    %v2732 = vrsqrt.pop %v2728
    %v2733 = vrsqrt.pop %v2729
    %v2738 = vcombine.low %v2730, %v2731
    %v2739 = vcombine.low %v2732, %v2733
    %v2741 = vunpack.c.l.s4 1966171168
    %v2742 = vunpack.c.0.s8 %v2741
    %v2743 = vlaneseq
    %v2744 = vshrl.u32 %v2743, 7
    %v2745 = vsub.s32 %v2742, %v2744
    %v2746 = vrot.slane %v2738, %v2745
    %v2748 = vunpack.c.l.s4 1966171168
    %v2749 = vunpack.c.0.s8 %v2748
    %v2750 = vlaneseq
    %v2751 = vshrl.u32 %v2750, 7
    %v2752 = vsub.s32 %v2749, %v2751
    %v2753 = vrot.slane %v2739, %v2752
    %v2754 = vcombine.low %v2746, %v2753
    %v2756 = vunpack.c.l.s4 1966171168
    %v2757 = vunpack.c.0.s8 %v2756
    %v2758 = vlaneseq
    %v2759 = vshrl.u32 %v2758, 7
    %v2760 = vsub.s32 %v2757, %v2759
    %v2761 = vrot.slane %v2754, %v2760
    %v2763 = vmul.f32 %v2725, %v2761
    %v2765 = vlaneseq
    %v2766 = vshrl.u32 %v2765, 7
    %v2767 = vsub.s32 0, %v2766
    %v2768 = vrot.slane %v2763, %v2767
    %v2769 = vlaneseq
    %v2770 = vshrl.u32 %v2769, 7
    %v2771 = vsub.s32 1, %v2770
    %v2772 = vrot.slane %v2763, %v2771
    %v2773 = vlaneseq
    %v2774 = vshrl.u32 %v2773, 7
    %v2775 = vsub.s32 2, %v2774
    %v2776 = vrot.slane %v2763, %v2775
    %v2777 = vlaneseq
    %v2778 = vshrl.u32 %v2777, 7
    %v2779 = vsub.s32 3, %v2778
    %v2780 = vrot.slane %v2763, %v2779
    %v2785 = vmul.f32 %v2689, %v2768
    %v2786 = vmul.f32 %v2690, %v2772
    %v2787 = vmul.f32 %v2691, %v2776
    %v2788 = vmul.f32 %v2692, %v2780
    %v2789 = vld [vmem:[%s12] sm:$0xf]
    %v2791 = vlaneseq
    %v2792 = vshrl.u32 %v2791, 7
    %v2793 = vsub.s32 0, %v2792
    %v2794 = vrot.slane %v2789, %v2793
    %v2795 = vlaneseq
    %v2796 = vshrl.u32 %v2795, 7
    %v2797 = vsub.s32 1, %v2796
    %v2798 = vrot.slane %v2789, %v2797
    %v2799 = vlaneseq
    %v2800 = vshrl.u32 %v2799, 7
    %v2801 = vsub.s32 2, %v2800
    %v2802 = vrot.slane %v2789, %v2801
    %v2803 = vlaneseq
    %v2804 = vshrl.u32 %v2803, 7
    %v2805 = vsub.s32 3, %v2804
    %v2806 = vrot.slane %v2789, %v2805
    %v2811 = vadd.f32 %v2785, %v2794
    %v2812 = vadd.f32 %v2786, %v2798
    %v2813 = vadd.f32 %v2787, %v2802
    %v2814 = vadd.f32 %v2788, %v2806
    %v2815 = vmax.f32 %v2811, 0.0
    %v2816 = vmax.f32 %v2812, 0.0
    %v2817 = vmax.f32 %v2813, 0.0
    %v2818 = vmax.f32 %v2814, 0.0
    %v2819 = vpack.c.bf16 %v2815, %v2815
    %v2820 = vpack.c.bf16 %v2816, %v2816
    %v2821 = vpack.c.bf16 %v2817, %v2817
    %v2822 = vpack.c.bf16 %v2818, %v2818
    %v2823 = vld [vmem:[#allocation17] sm:$0xff]
    %v2824 = vld [vmem:[#allocation17 + $0x8] sm:$0xff]
    %v2825 = vld [vmem:[#allocation17 + $0x10] sm:$0xff]
    %v2826 = vld [vmem:[#allocation17 + $0x18] sm:$0xff]
    %v2827 = vld [vmem:[#allocation17 + $0x20] sm:$0xff]
    %v2828 = vld [vmem:[#allocation17 + $0x28] sm:$0xff]
    %v2829 = vld [vmem:[#allocation17 + $0x30] sm:$0xff]
    %v2830 = vld [vmem:[#allocation17 + $0x38] sm:$0xff]
    %v2831 = vld [vmem:[#allocation17 + $0x40] sm:$0xff]
    %v2832 = vld [vmem:[#allocation17 + $0x48] sm:$0xff]
    %v2833 = vld [vmem:[#allocation17 + $0x50] sm:$0xff]
    %v2834 = vld [vmem:[#allocation17 + $0x58] sm:$0xff]
    %v2835 = vld [vmem:[#allocation17 + $0x60] sm:$0xff]
    %v2836 = vld [vmem:[#allocation17 + $0x68] sm:$0xff]
    %v2837 = vld [vmem:[#allocation17 + $0x70] sm:$0xff]
    %v2838 = vld [vmem:[#allocation17 + $0x78] sm:$0xff]
    %v2839 = vld [vmem:[#allocation17 + $0x80] sm:$0xff]
    %v2840 = vld [vmem:[#allocation17 + $0x88] sm:$0xff]
    %v2841 = vld [vmem:[#allocation17 + $0x90] sm:$0xff]
    %v2842 = vld [vmem:[#allocation17 + $0x98] sm:$0xff]
    %v2843 = vld [vmem:[#allocation17 + $0xa0] sm:$0xff]
    %v2844 = vld [vmem:[#allocation17 + $0xa8] sm:$0xff]
    %v2845 = vld [vmem:[#allocation17 + $0xb0] sm:$0xff]
    %v2846 = vld [vmem:[#allocation17 + $0xb8] sm:$0xff]
    %v2847 = vld [vmem:[#allocation17 + $0xc0] sm:$0xff]
    %v2848 = vld [vmem:[#allocation17 + $0xc8] sm:$0xff]
    %v2849 = vld [vmem:[#allocation17 + $0xd0] sm:$0xff]
    %v2850 = vld [vmem:[#allocation17 + $0xd8] sm:$0xff]
    %v2851 = vld [vmem:[#allocation17 + $0xe0] sm:$0xff]
    %v2852 = vld [vmem:[#allocation17 + $0xe8] sm:$0xff]
    %v2853 = vld [vmem:[#allocation17 + $0xf0] sm:$0xff]
    %v2854 = vld [vmem:[#allocation17 + $0xf8] sm:$0xff]
    %v2855 = vld [vmem:[#allocation17 + $0x100] sm:$0xff]
    %v2856 = vld [vmem:[#allocation17 + $0x108] sm:$0xff]
    %v2857 = vld [vmem:[#allocation17 + $0x110] sm:$0xff]
    %v2858 = vld [vmem:[#allocation17 + $0x118] sm:$0xff]
    %v2859 = vld [vmem:[#allocation17 + $0x120] sm:$0xff]
    %v2860 = vld [vmem:[#allocation17 + $0x128] sm:$0xff]
    %v2861 = vld [vmem:[#allocation17 + $0x130] sm:$0xff]
    %v2862 = vld [vmem:[#allocation17 + $0x138] sm:$0xff]
    %v2863 = vld [vmem:[#allocation17 + $0x140] sm:$0xff]
    %v2864 = vld [vmem:[#allocation17 + $0x148] sm:$0xff]
    %v2865 = vld [vmem:[#allocation17 + $0x150] sm:$0xff]
    %v2866 = vld [vmem:[#allocation17 + $0x158] sm:$0xff]
    %v2867 = vld [vmem:[#allocation17 + $0x160] sm:$0xff]
    %v2868 = vld [vmem:[#allocation17 + $0x168] sm:$0xff]
    %v2869 = vld [vmem:[#allocation17 + $0x170] sm:$0xff]
    %v2870 = vld [vmem:[#allocation17 + $0x178] sm:$0xff]
    %v2871 = vld [vmem:[#allocation17 + $0x180] sm:$0xff]
    %v2872 = vld [vmem:[#allocation17 + $0x188] sm:$0xff]
    %v2873 = vld [vmem:[#allocation17 + $0x190] sm:$0xff]
    %v2874 = vld [vmem:[#allocation17 + $0x198] sm:$0xff]
    %v2875 = vld [vmem:[#allocation17 + $0x1a0] sm:$0xff]
    %v2876 = vld [vmem:[#allocation17 + $0x1a8] sm:$0xff]
    %v2877 = vld [vmem:[#allocation17 + $0x1b0] sm:$0xff]
    %v2878 = vld [vmem:[#allocation17 + $0x1b8] sm:$0xff]
    %v2879 = vld [vmem:[#allocation17 + $0x1c0] sm:$0xff]
    %v2880 = vld [vmem:[#allocation17 + $0x1c8] sm:$0xff]
    %v2881 = vld [vmem:[#allocation17 + $0x1d0] sm:$0xff]
    %v2882 = vld [vmem:[#allocation17 + $0x1d8] sm:$0xff]
    %v2883 = vld [vmem:[#allocation17 + $0x1e0] sm:$0xff]
    %v2884 = vld [vmem:[#allocation17 + $0x1e8] sm:$0xff]
    %v2885 = vld [vmem:[#allocation17 + $0x1f0] sm:$0xff]
    %v2886 = vld [vmem:[#allocation17 + $0x1f8] sm:$0xff]
    %v2887 = vld [vmem:[#allocation17 + $0x200] sm:$0xff]
    %v2888 = vld [vmem:[#allocation17 + $0x208] sm:$0xff]
    %v2889 = vld [vmem:[#allocation17 + $0x210] sm:$0xff]
    %v2890 = vld [vmem:[#allocation17 + $0x218] sm:$0xff]
    %v2891 = vld [vmem:[#allocation17 + $0x220] sm:$0xff]
    %v2892 = vld [vmem:[#allocation17 + $0x228] sm:$0xff]
    %v2893 = vld [vmem:[#allocation17 + $0x230] sm:$0xff]
    %v2894 = vld [vmem:[#allocation17 + $0x238] sm:$0xff]
    %v2895 = vld [vmem:[#allocation17 + $0x240] sm:$0xff]
    %v2896 = vld [vmem:[#allocation17 + $0x248] sm:$0xff]
    %v2897 = vld [vmem:[#allocation17 + $0x250] sm:$0xff]
    %v2898 = vld [vmem:[#allocation17 + $0x258] sm:$0xff]
    %v2899 = vld [vmem:[#allocation17 + $0x260] sm:$0xff]
    %v2900 = vld [vmem:[#allocation17 + $0x268] sm:$0xff]
    %v2901 = vld [vmem:[#allocation17 + $0x270] sm:$0xff]
    %v2902 = vld [vmem:[#allocation17 + $0x278] sm:$0xff]
    %v2903 = vld [vmem:[#allocation17 + $0x280] sm:$0xff]
    %v2904 = vld [vmem:[#allocation17 + $0x288] sm:$0xff]
    %v2905 = vld [vmem:[#allocation17 + $0x290] sm:$0xff]
    %v2906 = vld [vmem:[#allocation17 + $0x298] sm:$0xff]
    %v2907 = vld [vmem:[#allocation17 + $0x2a0] sm:$0xff]
    %v2908 = vld [vmem:[#allocation17 + $0x2a8] sm:$0xff]
    %v2909 = vld [vmem:[#allocation17 + $0x2b0] sm:$0xff]
    %v2910 = vld [vmem:[#allocation17 + $0x2b8] sm:$0xff]
    %v2911 = vld [vmem:[#allocation17 + $0x2c0] sm:$0xff]
    %v2912 = vld [vmem:[#allocation17 + $0x2c8] sm:$0xff]
    %v2913 = vld [vmem:[#allocation17 + $0x2d0] sm:$0xff]
    %v2914 = vld [vmem:[#allocation17 + $0x2d8] sm:$0xff]
    %v2915 = vld [vmem:[#allocation17 + $0x2e0] sm:$0xff]
    %v2916 = vld [vmem:[#allocation17 + $0x2e8] sm:$0xff]
    %v2917 = vld [vmem:[#allocation17 + $0x2f0] sm:$0xff]
    %v2918 = vld [vmem:[#allocation17 + $0x2f8] sm:$0xff]
    %v2919 = vld [vmem:[#allocation17 + $0x300] sm:$0xff]
    %v2920 = vld [vmem:[#allocation17 + $0x308] sm:$0xff]
    %v2921 = vld [vmem:[#allocation17 + $0x310] sm:$0xff]
    %v2922 = vld [vmem:[#allocation17 + $0x318] sm:$0xff]
    %v2923 = vld [vmem:[#allocation17 + $0x320] sm:$0xff]
    %v2924 = vld [vmem:[#allocation17 + $0x328] sm:$0xff]
    %v2925 = vld [vmem:[#allocation17 + $0x330] sm:$0xff]
    %v2926 = vld [vmem:[#allocation17 + $0x338] sm:$0xff]
    %v2927 = vld [vmem:[#allocation17 + $0x340] sm:$0xff]
    %v2928 = vld [vmem:[#allocation17 + $0x348] sm:$0xff]
    %v2929 = vld [vmem:[#allocation17 + $0x350] sm:$0xff]
    %v2930 = vld [vmem:[#allocation17 + $0x358] sm:$0xff]
    %v2931 = vld [vmem:[#allocation17 + $0x360] sm:$0xff]
    %v2932 = vld [vmem:[#allocation17 + $0x368] sm:$0xff]
    %v2933 = vld [vmem:[#allocation17 + $0x370] sm:$0xff]
    %v2934 = vld [vmem:[#allocation17 + $0x378] sm:$0xff]
    %v2935 = vld [vmem:[#allocation17 + $0x380] sm:$0xff]
    %v2936 = vld [vmem:[#allocation17 + $0x388] sm:$0xff]
    %v2937 = vld [vmem:[#allocation17 + $0x390] sm:$0xff]
    %v2938 = vld [vmem:[#allocation17 + $0x398] sm:$0xff]
    %v2939 = vld [vmem:[#allocation17 + $0x3a0] sm:$0xff]
    %v2940 = vld [vmem:[#allocation17 + $0x3a8] sm:$0xff]
    %v2941 = vld [vmem:[#allocation17 + $0x3b0] sm:$0xff]
    %v2942 = vld [vmem:[#allocation17 + $0x3b8] sm:$0xff]
    %v2943 = vld [vmem:[#allocation17 + $0x3c0] sm:$0xff]
    %v2944 = vld [vmem:[#allocation17 + $0x3c8] sm:$0xff]
    %v2945 = vld [vmem:[#allocation17 + $0x3d0] sm:$0xff]
    %v2946 = vld [vmem:[#allocation17 + $0x3d8] sm:$0xff]
    %v2947 = vld [vmem:[#allocation17 + $0x3e0] sm:$0xff]
    %v2948 = vld [vmem:[#allocation17 + $0x3e8] sm:$0xff]
    %v2949 = vld [vmem:[#allocation17 + $0x3f0] sm:$0xff]
    %v2950 = vld [vmem:[#allocation17 + $0x3f8] sm:$0xff]
    %v3079 = vunpack.c.l.b16 %v2823
    %v3080 = vunpack.c.h.b16 %v2823
    %v3081 = vunpack.c.l.b16 %v2824
    %v3082 = vunpack.c.h.b16 %v2824
    %v3083 = vunpack.c.l.b16 %v2825
    %v3084 = vunpack.c.h.b16 %v2825
    %v3085 = vunpack.c.l.b16 %v2826
    %v3086 = vunpack.c.h.b16 %v2826
    %v3087 = vunpack.c.l.b16 %v2827
    %v3088 = vunpack.c.h.b16 %v2827
    %v3089 = vunpack.c.l.b16 %v2828
    %v3090 = vunpack.c.h.b16 %v2828
    %v3091 = vunpack.c.l.b16 %v2829
    %v3092 = vunpack.c.h.b16 %v2829
    %v3093 = vunpack.c.l.b16 %v2830
    %v3094 = vunpack.c.h.b16 %v2830
    %v3095 = vunpack.c.l.b16 %v2831
    %v3096 = vunpack.c.h.b16 %v2831
    %v3097 = vunpack.c.l.b16 %v2832
    %v3098 = vunpack.c.h.b16 %v2832
    %v3099 = vunpack.c.l.b16 %v2833
    %v3100 = vunpack.c.h.b16 %v2833
    %v3101 = vunpack.c.l.b16 %v2834
    %v3102 = vunpack.c.h.b16 %v2834
    %v3103 = vunpack.c.l.b16 %v2835
    %v3104 = vunpack.c.h.b16 %v2835
    %v3105 = vunpack.c.l.b16 %v2836
    %v3106 = vunpack.c.h.b16 %v2836
    %v3107 = vunpack.c.l.b16 %v2837
    %v3108 = vunpack.c.h.b16 %v2837
    %v3109 = vunpack.c.l.b16 %v2838
    %v3110 = vunpack.c.h.b16 %v2838
    %v3111 = vunpack.c.l.b16 %v2839
    %v3112 = vunpack.c.h.b16 %v2839
    %v3113 = vunpack.c.l.b16 %v2840
    %v3114 = vunpack.c.h.b16 %v2840
    %v3115 = vunpack.c.l.b16 %v2841
    %v3116 = vunpack.c.h.b16 %v2841
    %v3117 = vunpack.c.l.b16 %v2842
    %v3118 = vunpack.c.h.b16 %v2842
    %v3119 = vunpack.c.l.b16 %v2843
    %v3120 = vunpack.c.h.b16 %v2843
    %v3121 = vunpack.c.l.b16 %v2844
    %v3122 = vunpack.c.h.b16 %v2844
    %v3123 = vunpack.c.l.b16 %v2845
    %v3124 = vunpack.c.h.b16 %v2845
    %v3125 = vunpack.c.l.b16 %v2846
    %v3126 = vunpack.c.h.b16 %v2846
    %v3127 = vunpack.c.l.b16 %v2847
    %v3128 = vunpack.c.h.b16 %v2847
    %v3129 = vunpack.c.l.b16 %v2848
    %v3130 = vunpack.c.h.b16 %v2848
    %v3131 = vunpack.c.l.b16 %v2849
    %v3132 = vunpack.c.h.b16 %v2849
    %v3133 = vunpack.c.l.b16 %v2850
    %v3134 = vunpack.c.h.b16 %v2850
    %v3135 = vunpack.c.l.b16 %v2851
    %v3136 = vunpack.c.h.b16 %v2851
    %v3137 = vunpack.c.l.b16 %v2852
    %v3138 = vunpack.c.h.b16 %v2852
    %v3139 = vunpack.c.l.b16 %v2853
    %v3140 = vunpack.c.h.b16 %v2853
    %v3141 = vunpack.c.l.b16 %v2854
    %v3142 = vunpack.c.h.b16 %v2854
    %v3143 = vunpack.c.l.b16 %v2855
    %v3144 = vunpack.c.h.b16 %v2855
    %v3145 = vunpack.c.l.b16 %v2856
    %v3146 = vunpack.c.h.b16 %v2856
    %v3147 = vunpack.c.l.b16 %v2857
    %v3148 = vunpack.c.h.b16 %v2857
    %v3149 = vunpack.c.l.b16 %v2858
    %v3150 = vunpack.c.h.b16 %v2858
    %v3151 = vunpack.c.l.b16 %v2859
    %v3152 = vunpack.c.h.b16 %v2859
    %v3153 = vunpack.c.l.b16 %v2860
    %v3154 = vunpack.c.h.b16 %v2860
    %v3155 = vunpack.c.l.b16 %v2861
    %v3156 = vunpack.c.h.b16 %v2861
    %v3157 = vunpack.c.l.b16 %v2862
    %v3158 = vunpack.c.h.b16 %v2862
    %v3159 = vunpack.c.l.b16 %v2863
    %v3160 = vunpack.c.h.b16 %v2863
    %v3161 = vunpack.c.l.b16 %v2864
    %v3162 = vunpack.c.h.b16 %v2864
    %v3163 = vunpack.c.l.b16 %v2865
    %v3164 = vunpack.c.h.b16 %v2865
    %v3165 = vunpack.c.l.b16 %v2866
    %v3166 = vunpack.c.h.b16 %v2866
    %v3167 = vunpack.c.l.b16 %v2867
    %v3168 = vunpack.c.h.b16 %v2867
    %v3169 = vunpack.c.l.b16 %v2868
    %v3170 = vunpack.c.h.b16 %v2868
    %v3171 = vunpack.c.l.b16 %v2869
    %v3172 = vunpack.c.h.b16 %v2869
    %v3173 = vunpack.c.l.b16 %v2870
    %v3174 = vunpack.c.h.b16 %v2870
    %v3175 = vunpack.c.l.b16 %v2871
    %v3176 = vunpack.c.h.b16 %v2871
    %v3177 = vunpack.c.l.b16 %v2872
    %v3178 = vunpack.c.h.b16 %v2872
    %v3179 = vunpack.c.l.b16 %v2873
    %v3180 = vunpack.c.h.b16 %v2873
    %v3181 = vunpack.c.l.b16 %v2874
    %v3182 = vunpack.c.h.b16 %v2874
    %v3183 = vunpack.c.l.b16 %v2875
    %v3184 = vunpack.c.h.b16 %v2875
    %v3185 = vunpack.c.l.b16 %v2876
    %v3186 = vunpack.c.h.b16 %v2876
    %v3187 = vunpack.c.l.b16 %v2877
    %v3188 = vunpack.c.h.b16 %v2877
    %v3189 = vunpack.c.l.b16 %v2878
    %v3190 = vunpack.c.h.b16 %v2878
    %v3191 = vunpack.c.l.b16 %v2879
    %v3192 = vunpack.c.h.b16 %v2879
    %v3193 = vunpack.c.l.b16 %v2880
    %v3194 = vunpack.c.h.b16 %v2880
    %v3195 = vunpack.c.l.b16 %v2881
    %v3196 = vunpack.c.h.b16 %v2881
    %v3197 = vunpack.c.l.b16 %v2882
    %v3198 = vunpack.c.h.b16 %v2882
    %v3199 = vunpack.c.l.b16 %v2883
    %v3200 = vunpack.c.h.b16 %v2883
    %v3201 = vunpack.c.l.b16 %v2884
    %v3202 = vunpack.c.h.b16 %v2884
    %v3203 = vunpack.c.l.b16 %v2885
    %v3204 = vunpack.c.h.b16 %v2885
    %v3205 = vunpack.c.l.b16 %v2886
    %v3206 = vunpack.c.h.b16 %v2886
    %v3207 = vunpack.c.l.b16 %v2887
    %v3208 = vunpack.c.h.b16 %v2887
    %v3209 = vunpack.c.l.b16 %v2888
    %v3210 = vunpack.c.h.b16 %v2888
    %v3211 = vunpack.c.l.b16 %v2889
    %v3212 = vunpack.c.h.b16 %v2889
    %v3213 = vunpack.c.l.b16 %v2890
    %v3214 = vunpack.c.h.b16 %v2890
    %v3215 = vunpack.c.l.b16 %v2891
    %v3216 = vunpack.c.h.b16 %v2891
    %v3217 = vunpack.c.l.b16 %v2892
    %v3218 = vunpack.c.h.b16 %v2892
    %v3219 = vunpack.c.l.b16 %v2893
    %v3220 = vunpack.c.h.b16 %v2893
    %v3221 = vunpack.c.l.b16 %v2894
    %v3222 = vunpack.c.h.b16 %v2894
    %v3223 = vunpack.c.l.b16 %v2895
    %v3224 = vunpack.c.h.b16 %v2895
    %v3225 = vunpack.c.l.b16 %v2896
    %v3226 = vunpack.c.h.b16 %v2896
    %v3227 = vunpack.c.l.b16 %v2897
    %v3228 = vunpack.c.h.b16 %v2897
    %v3229 = vunpack.c.l.b16 %v2898
    %v3230 = vunpack.c.h.b16 %v2898
    %v3231 = vunpack.c.l.b16 %v2899
    %v3232 = vunpack.c.h.b16 %v2899
    %v3233 = vunpack.c.l.b16 %v2900
    %v3234 = vunpack.c.h.b16 %v2900
    %v3235 = vunpack.c.l.b16 %v2901
    %v3236 = vunpack.c.h.b16 %v2901
    %v3237 = vunpack.c.l.b16 %v2902
    %v3238 = vunpack.c.h.b16 %v2902
    %v3239 = vunpack.c.l.b16 %v2903
    %v3240 = vunpack.c.h.b16 %v2903
    %v3241 = vunpack.c.l.b16 %v2904
    %v3242 = vunpack.c.h.b16 %v2904
    %v3243 = vunpack.c.l.b16 %v2905
    %v3244 = vunpack.c.h.b16 %v2905
    %v3245 = vunpack.c.l.b16 %v2906
    %v3246 = vunpack.c.h.b16 %v2906
    %v3247 = vunpack.c.l.b16 %v2907
    %v3248 = vunpack.c.h.b16 %v2907
    %v3249 = vunpack.c.l.b16 %v2908
    %v3250 = vunpack.c.h.b16 %v2908
    %v3251 = vunpack.c.l.b16 %v2909
    %v3252 = vunpack.c.h.b16 %v2909
    %v3253 = vunpack.c.l.b16 %v2910
    %v3254 = vunpack.c.h.b16 %v2910
    %v3255 = vunpack.c.l.b16 %v2911
    %v3256 = vunpack.c.h.b16 %v2911
    %v3257 = vunpack.c.l.b16 %v2912
    %v3258 = vunpack.c.h.b16 %v2912
    %v3259 = vunpack.c.l.b16 %v2913
    %v3260 = vunpack.c.h.b16 %v2913
    %v3261 = vunpack.c.l.b16 %v2914
    %v3262 = vunpack.c.h.b16 %v2914
    %v3263 = vunpack.c.l.b16 %v2915
    %v3264 = vunpack.c.h.b16 %v2915
    %v3265 = vunpack.c.l.b16 %v2916
    %v3266 = vunpack.c.h.b16 %v2916
    %v3267 = vunpack.c.l.b16 %v2917
    %v3268 = vunpack.c.h.b16 %v2917
    %v3269 = vunpack.c.l.b16 %v2918
    %v3270 = vunpack.c.h.b16 %v2918
    %v3271 = vunpack.c.l.b16 %v2919
    %v3272 = vunpack.c.h.b16 %v2919
    %v3273 = vunpack.c.l.b16 %v2920
    %v3274 = vunpack.c.h.b16 %v2920
    %v3275 = vunpack.c.l.b16 %v2921
    %v3276 = vunpack.c.h.b16 %v2921
    %v3277 = vunpack.c.l.b16 %v2922
    %v3278 = vunpack.c.h.b16 %v2922
    %v3279 = vunpack.c.l.b16 %v2923
    %v3280 = vunpack.c.h.b16 %v2923
    %v3281 = vunpack.c.l.b16 %v2924
    %v3282 = vunpack.c.h.b16 %v2924
    %v3283 = vunpack.c.l.b16 %v2925
    %v3284 = vunpack.c.h.b16 %v2925
    %v3285 = vunpack.c.l.b16 %v2926
    %v3286 = vunpack.c.h.b16 %v2926
    %v3287 = vunpack.c.l.b16 %v2927
    %v3288 = vunpack.c.h.b16 %v2927
    %v3289 = vunpack.c.l.b16 %v2928
    %v3290 = vunpack.c.h.b16 %v2928
    %v3291 = vunpack.c.l.b16 %v2929
    %v3292 = vunpack.c.h.b16 %v2929
    %v3293 = vunpack.c.l.b16 %v2930
    %v3294 = vunpack.c.h.b16 %v2930
    %v3295 = vunpack.c.l.b16 %v2931
    %v3296 = vunpack.c.h.b16 %v2931
    %v3297 = vunpack.c.l.b16 %v2932
    %v3298 = vunpack.c.h.b16 %v2932
    %v3299 = vunpack.c.l.b16 %v2933
    %v3300 = vunpack.c.h.b16 %v2933
    %v3301 = vunpack.c.l.b16 %v2934
    %v3302 = vunpack.c.h.b16 %v2934
    %v3303 = vunpack.c.l.b16 %v2935
    %v3304 = vunpack.c.h.b16 %v2935
    %v3305 = vunpack.c.l.b16 %v2936
    %v3306 = vunpack.c.h.b16 %v2936
    %v3307 = vunpack.c.l.b16 %v2937
    %v3308 = vunpack.c.h.b16 %v2937
    %v3309 = vunpack.c.l.b16 %v2938
    %v3310 = vunpack.c.h.b16 %v2938
    %v3311 = vunpack.c.l.b16 %v2939
    %v3312 = vunpack.c.h.b16 %v2939
    %v3313 = vunpack.c.l.b16 %v2940
    %v3314 = vunpack.c.h.b16 %v2940
    %v3315 = vunpack.c.l.b16 %v2941
    %v3316 = vunpack.c.h.b16 %v2941
    %v3317 = vunpack.c.l.b16 %v2942
    %v3318 = vunpack.c.h.b16 %v2942
    %v3319 = vunpack.c.l.b16 %v2943
    %v3320 = vunpack.c.h.b16 %v2943
    %v3321 = vunpack.c.l.b16 %v2944
    %v3322 = vunpack.c.h.b16 %v2944
    %v3323 = vunpack.c.l.b16 %v2945
    %v3324 = vunpack.c.h.b16 %v2945
    %v3325 = vunpack.c.l.b16 %v2946
    %v3326 = vunpack.c.h.b16 %v2946
    %v3327 = vunpack.c.l.b16 %v2947
    %v3328 = vunpack.c.h.b16 %v2947
    %v3329 = vunpack.c.l.b16 %v2948
    %v3330 = vunpack.c.h.b16 %v2948
    %v3331 = vunpack.c.l.b16 %v2949
    %v3332 = vunpack.c.h.b16 %v2949
    %v3333 = vunpack.c.l.b16 %v2950
    %v3334 = vunpack.c.h.b16 %v2950
    %v3335 = vpack.c.b16 %v3083, %v3079
    %v3336 = vpack.c.b16 %v3084, %v3080
    %v3337 = vpack.c.b16 %v3085, %v3081
    %v3338 = vpack.c.b16 %v3086, %v3082
    %v3339 = vpack.c.b16 %v3091, %v3087
    %v3340 = vpack.c.b16 %v3092, %v3088
    %v3341 = vpack.c.b16 %v3093, %v3089
    %v3342 = vpack.c.b16 %v3094, %v3090
    %v3343 = vpack.c.b16 %v3099, %v3095
    %v3344 = vpack.c.b16 %v3100, %v3096
    %v3345 = vpack.c.b16 %v3101, %v3097
    %v3346 = vpack.c.b16 %v3102, %v3098
    %v3347 = vpack.c.b16 %v3107, %v3103
    %v3348 = vpack.c.b16 %v3108, %v3104
    %v3349 = vpack.c.b16 %v3109, %v3105
    %v3350 = vpack.c.b16 %v3110, %v3106
    %v3351 = vpack.c.b16 %v3115, %v3111
    %v3352 = vpack.c.b16 %v3116, %v3112
    %v3353 = vpack.c.b16 %v3117, %v3113
    %v3354 = vpack.c.b16 %v3118, %v3114
    %v3355 = vpack.c.b16 %v3123, %v3119
    %v3356 = vpack.c.b16 %v3124, %v3120
    %v3357 = vpack.c.b16 %v3125, %v3121
    %v3358 = vpack.c.b16 %v3126, %v3122
    %v3359 = vpack.c.b16 %v3131, %v3127
    %v3360 = vpack.c.b16 %v3132, %v3128
    %v3361 = vpack.c.b16 %v3133, %v3129
    %v3362 = vpack.c.b16 %v3134, %v3130
    %v3363 = vpack.c.b16 %v3139, %v3135
    %v3364 = vpack.c.b16 %v3140, %v3136
    %v3365 = vpack.c.b16 %v3141, %v3137
    %v3366 = vpack.c.b16 %v3142, %v3138
    %v3367 = vpack.c.b16 %v3147, %v3143
    %v3368 = vpack.c.b16 %v3148, %v3144
    %v3369 = vpack.c.b16 %v3149, %v3145
    %v3370 = vpack.c.b16 %v3150, %v3146
    %v3371 = vpack.c.b16 %v3155, %v3151
    %v3372 = vpack.c.b16 %v3156, %v3152
    %v3373 = vpack.c.b16 %v3157, %v3153
    %v3374 = vpack.c.b16 %v3158, %v3154
    %v3375 = vpack.c.b16 %v3163, %v3159
    %v3376 = vpack.c.b16 %v3164, %v3160
    %v3377 = vpack.c.b16 %v3165, %v3161
    %v3378 = vpack.c.b16 %v3166, %v3162
    %v3379 = vpack.c.b16 %v3171, %v3167
    %v3380 = vpack.c.b16 %v3172, %v3168
    %v3381 = vpack.c.b16 %v3173, %v3169
    %v3382 = vpack.c.b16 %v3174, %v3170
    %v3383 = vpack.c.b16 %v3179, %v3175
    %v3384 = vpack.c.b16 %v3180, %v3176
    %v3385 = vpack.c.b16 %v3181, %v3177
    %v3386 = vpack.c.b16 %v3182, %v3178
    %v3387 = vpack.c.b16 %v3187, %v3183
    %v3388 = vpack.c.b16 %v3188, %v3184
    %v3389 = vpack.c.b16 %v3189, %v3185
    %v3390 = vpack.c.b16 %v3190, %v3186
    %v3391 = vpack.c.b16 %v3195, %v3191
    %v3392 = vpack.c.b16 %v3196, %v3192
    %v3393 = vpack.c.b16 %v3197, %v3193
    %v3394 = vpack.c.b16 %v3198, %v3194
    %v3395 = vpack.c.b16 %v3203, %v3199
    %v3396 = vpack.c.b16 %v3204, %v3200
    %v3397 = vpack.c.b16 %v3205, %v3201
    %v3398 = vpack.c.b16 %v3206, %v3202
    %v3399 = vpack.c.b16 %v3211, %v3207
    %v3400 = vpack.c.b16 %v3212, %v3208
    %v3401 = vpack.c.b16 %v3213, %v3209
    %v3402 = vpack.c.b16 %v3214, %v3210
    %v3403 = vpack.c.b16 %v3219, %v3215
    %v3404 = vpack.c.b16 %v3220, %v3216
    %v3405 = vpack.c.b16 %v3221, %v3217
    %v3406 = vpack.c.b16 %v3222, %v3218
    %v3407 = vpack.c.b16 %v3227, %v3223
    %v3408 = vpack.c.b16 %v3228, %v3224
    %v3409 = vpack.c.b16 %v3229, %v3225
    %v3410 = vpack.c.b16 %v3230, %v3226
    %v3411 = vpack.c.b16 %v3235, %v3231
    %v3412 = vpack.c.b16 %v3236, %v3232
    %v3413 = vpack.c.b16 %v3237, %v3233
    %v3414 = vpack.c.b16 %v3238, %v3234
    %v3415 = vpack.c.b16 %v3243, %v3239
    %v3416 = vpack.c.b16 %v3244, %v3240
    %v3417 = vpack.c.b16 %v3245, %v3241
    %v3418 = vpack.c.b16 %v3246, %v3242
    %v3419 = vpack.c.b16 %v3251, %v3247
    %v3420 = vpack.c.b16 %v3252, %v3248
    %v3421 = vpack.c.b16 %v3253, %v3249
    %v3422 = vpack.c.b16 %v3254, %v3250
    %v3423 = vpack.c.b16 %v3259, %v3255
    %v3424 = vpack.c.b16 %v3260, %v3256
    %v3425 = vpack.c.b16 %v3261, %v3257
    %v3426 = vpack.c.b16 %v3262, %v3258
    %v3427 = vpack.c.b16 %v3267, %v3263
    %v3428 = vpack.c.b16 %v3268, %v3264
    %v3429 = vpack.c.b16 %v3269, %v3265
    %v3430 = vpack.c.b16 %v3270, %v3266
    %v3431 = vpack.c.b16 %v3275, %v3271
    %v3432 = vpack.c.b16 %v3276, %v3272
    %v3433 = vpack.c.b16 %v3277, %v3273
    %v3434 = vpack.c.b16 %v3278, %v3274
    %v3435 = vpack.c.b16 %v3283, %v3279
    %v3436 = vpack.c.b16 %v3284, %v3280
    %v3437 = vpack.c.b16 %v3285, %v3281
    %v3438 = vpack.c.b16 %v3286, %v3282
    %v3439 = vpack.c.b16 %v3291, %v3287
    %v3440 = vpack.c.b16 %v3292, %v3288
    %v3441 = vpack.c.b16 %v3293, %v3289
    %v3442 = vpack.c.b16 %v3294, %v3290
    %v3443 = vpack.c.b16 %v3299, %v3295
    %v3444 = vpack.c.b16 %v3300, %v3296
    %v3445 = vpack.c.b16 %v3301, %v3297
    %v3446 = vpack.c.b16 %v3302, %v3298
    %v3447 = vpack.c.b16 %v3307, %v3303
    %v3448 = vpack.c.b16 %v3308, %v3304
    %v3449 = vpack.c.b16 %v3309, %v3305
    %v3450 = vpack.c.b16 %v3310, %v3306
    %v3451 = vpack.c.b16 %v3315, %v3311
    %v3452 = vpack.c.b16 %v3316, %v3312
    %v3453 = vpack.c.b16 %v3317, %v3313
    %v3454 = vpack.c.b16 %v3318, %v3314
    %v3455 = vpack.c.b16 %v3323, %v3319
    %v3456 = vpack.c.b16 %v3324, %v3320
    %v3457 = vpack.c.b16 %v3325, %v3321
    %v3458 = vpack.c.b16 %v3326, %v3322
    %v3459 = vpack.c.b16 %v3331, %v3327
    %v3460 = vpack.c.b16 %v3332, %v3328
    %v3461 = vpack.c.b16 %v3333, %v3329
    %v3462 = vpack.c.b16 %v3334, %v3330
    %3591 = vmatprep.subr.bf16.mxu0 %v3364
    %3592 = vmatpush1.bf16.msra.mxu0 %v3363
    %3593 = vmatprep.subr.bf16.mxu0 %v3360
    %3594 = vmatpush1.bf16.msra.mxu0 %v3359
    %3595 = vmatprep.subr.bf16.mxu0 %v3356
    %3596 = vmatpush1.bf16.msra.mxu0 %v3355
    %3597 = vmatprep.subr.bf16.mxu0 %v3352
    %3598 = vmatpush1.bf16.msra.mxu0 %v3351
    %3599 = vmatprep.subr.bf16.mxu0 %v3348
    %3600 = vmatpush1.bf16.msra.mxu0 %v3347
    %3601 = vmatprep.subr.bf16.mxu0 %v3344
    %3602 = vmatpush1.bf16.msra.mxu0 %v3343
    %3603 = vmatprep.subr.bf16.mxu0 %v3340
    %3604 = vmatpush1.bf16.msra.mxu0 %v3339
    %3605 = vmatprep.subr.bf16.mxu0 %v3336
    %3606 = vmatpush1.bf16.msra.mxu0 %v3335
    %3607 = vmatprep.subr.bf16.mxu0 %v3396
    %3608 = vmatpush2.bf16.msra.mxu0 %v3395
    %3609 = vmatprep.subr.bf16.mxu0 %v3392
    %3610 = vmatpush2.bf16.msra.mxu0 %v3391
    %3611 = vmatprep.subr.bf16.mxu0 %v3388
    %3612 = vmatpush2.bf16.msra.mxu0 %v3387
    %3613 = vmatprep.subr.bf16.mxu0 %v3384
    %3614 = vmatpush2.bf16.msra.mxu0 %v3383
    %3615 = vmatprep.subr.bf16.mxu0 %v3380
    %3616 = vmatpush2.bf16.msra.mxu0 %v3379
    %3617 = vmatprep.subr.bf16.mxu0 %v3376
    %3618 = vmatpush2.bf16.msra.mxu0 %v3375
    %3619 = vmatprep.subr.bf16.mxu0 %v3372
    %3620 = vmatpush2.bf16.msra.mxu0 %v3371
    %3621 = vmatprep.subr.bf16.mxu0 %v3368
    %3622 = vmatpush2.bf16.msra.mxu0 %v3367
    %3623 = vmatprep.mubr.bf16.mxu0 %v2820
    %3624 = vmatmul.mubr.bf16.gmra.mxu0 %v2819
    %v3625 = vpop.f32.mrf.mxu0
    %v3626 = vadd.f32 0.0, %v3625
    %v3627 = vpop.f32.mrf.mxu0
    %v3628 = vadd.f32 0.0, %v3627
    %v3629 = vpop.f32.mrf.mxu0
    %v3630 = vpop.f32.mrf.mxu0
    %3631 = vdwg.mxu0
    %3632 = vmatprep.subr.bf16.mxu0 %v3428
    %3633 = vmatpush1.bf16.msra.mxu0 %v3427
    %3634 = vmatprep.subr.bf16.mxu0 %v3424
    %3635 = vmatpush1.bf16.msra.mxu0 %v3423
    %3636 = vmatprep.subr.bf16.mxu0 %v3420
    %3637 = vmatpush1.bf16.msra.mxu0 %v3419
    %3638 = vmatprep.subr.bf16.mxu0 %v3416
    %3639 = vmatpush1.bf16.msra.mxu0 %v3415
    %3640 = vmatprep.subr.bf16.mxu0 %v3412
    %3641 = vmatpush1.bf16.msra.mxu0 %v3411
    %3642 = vmatprep.subr.bf16.mxu0 %v3408
    %3643 = vmatpush1.bf16.msra.mxu0 %v3407
    %3644 = vmatprep.subr.bf16.mxu0 %v3404
    %3645 = vmatpush1.bf16.msra.mxu0 %v3403
    %3646 = vmatprep.subr.bf16.mxu0 %v3400
    %3647 = vmatpush1.bf16.msra.mxu0 %v3399
    %3648 = vmatprep.subr.bf16.mxu0 %v3460
    %3649 = vmatpush2.bf16.msra.mxu0 %v3459
    %3650 = vmatprep.subr.bf16.mxu0 %v3456
    %3651 = vmatpush2.bf16.msra.mxu0 %v3455
    %3652 = vmatprep.subr.bf16.mxu0 %v3452
    %3653 = vmatpush2.bf16.msra.mxu0 %v3451
    %3654 = vmatprep.subr.bf16.mxu0 %v3448
    %3655 = vmatpush2.bf16.msra.mxu0 %v3447
    %3656 = vmatprep.subr.bf16.mxu0 %v3444
    %3657 = vmatpush2.bf16.msra.mxu0 %v3443
    %3658 = vmatprep.subr.bf16.mxu0 %v3440
    %3659 = vmatpush2.bf16.msra.mxu0 %v3439
    %3660 = vmatprep.subr.bf16.mxu0 %v3436
    %3661 = vmatpush2.bf16.msra.mxu0 %v3435
    %3662 = vmatprep.subr.bf16.mxu0 %v3432
    %3663 = vmatpush2.bf16.msra.mxu0 %v3431
    %3664 = vmatprep.mubr.bf16.mxu0 %v2822
    %3665 = vmatmul.mubr.bf16.gmra.mxu0 %v2821
    %v3666 = vpop.f32.mrf.mxu0
    %v3667 = vadd.f32 %v3626, %v3666
    %v3668 = vpop.f32.mrf.mxu0
    %v3669 = vadd.f32 %v3628, %v3668
    %v3670 = vpop.f32.mrf.mxu0
    %v3671 = vpop.f32.mrf.mxu0
    %3672 = vdwg.mxu0
    %3673 = vmatprep.subr.bf16.mxu0 %v3366
    %3674 = vmatpush1.bf16.msra.mxu0 %v3365
    %3675 = vmatprep.subr.bf16.mxu0 %v3362
    %3676 = vmatpush1.bf16.msra.mxu0 %v3361
    %3677 = vmatprep.subr.bf16.mxu0 %v3358
    %3678 = vmatpush1.bf16.msra.mxu0 %v3357
    %3679 = vmatprep.subr.bf16.mxu0 %v3354
    %3680 = vmatpush1.bf16.msra.mxu0 %v3353
    %3681 = vmatprep.subr.bf16.mxu0 %v3350
    %3682 = vmatpush1.bf16.msra.mxu0 %v3349
    %3683 = vmatprep.subr.bf16.mxu0 %v3346
    %3684 = vmatpush1.bf16.msra.mxu0 %v3345
    %3685 = vmatprep.subr.bf16.mxu0 %v3342
    %3686 = vmatpush1.bf16.msra.mxu0 %v3341
    %3687 = vmatprep.subr.bf16.mxu0 %v3338
    %3688 = vmatpush1.bf16.msra.mxu0 %v3337
    %3689 = vmatprep.subr.bf16.mxu0 %v3398
    %3690 = vmatpush2.bf16.msra.mxu0 %v3397
    %3691 = vmatprep.subr.bf16.mxu0 %v3394
    %3692 = vmatpush2.bf16.msra.mxu0 %v3393
    %3693 = vmatprep.subr.bf16.mxu0 %v3390
    %3694 = vmatpush2.bf16.msra.mxu0 %v3389
    %3695 = vmatprep.subr.bf16.mxu0 %v3386
    %3696 = vmatpush2.bf16.msra.mxu0 %v3385
    %3697 = vmatprep.subr.bf16.mxu0 %v3382
    %3698 = vmatpush2.bf16.msra.mxu0 %v3381
    %3699 = vmatprep.subr.bf16.mxu0 %v3378
    %3700 = vmatpush2.bf16.msra.mxu0 %v3377
    %3701 = vmatprep.subr.bf16.mxu0 %v3374
    %3702 = vmatpush2.bf16.msra.mxu0 %v3373
    %3703 = vmatprep.subr.bf16.mxu0 %v3370
    %3704 = vmatpush2.bf16.msra.mxu0 %v3369
    %3705 = vmatprep.mubr.bf16.mxu0 %v2820
    %3706 = vmatmul.mubr.bf16.gmra.mxu0 %v2819
    %v3707 = vpop.f32.mrf.mxu0
    %v3708 = vadd.f32 0.0, %v3707
    %v3709 = vpop.f32.mrf.mxu0
    %v3710 = vadd.f32 0.0, %v3709
    %v3711 = vpop.f32.mrf.mxu0
    %v3712 = vpop.f32.mrf.mxu0
    %3713 = vdwg.mxu0
    %3714 = vmatprep.subr.bf16.mxu0 %v3430
    %3715 = vmatpush1.bf16.msra.mxu0 %v3429
    %3716 = vmatprep.subr.bf16.mxu0 %v3426
    %3717 = vmatpush1.bf16.msra.mxu0 %v3425
    %3718 = vmatprep.subr.bf16.mxu0 %v3422
    %3719 = vmatpush1.bf16.msra.mxu0 %v3421
    %3720 = vmatprep.subr.bf16.mxu0 %v3418
    %3721 = vmatpush1.bf16.msra.mxu0 %v3417
    %3722 = vmatprep.subr.bf16.mxu0 %v3414
    %3723 = vmatpush1.bf16.msra.mxu0 %v3413
    %3724 = vmatprep.subr.bf16.mxu0 %v3410
    %3725 = vmatpush1.bf16.msra.mxu0 %v3409
    %3726 = vmatprep.subr.bf16.mxu0 %v3406
    %3727 = vmatpush1.bf16.msra.mxu0 %v3405
    %3728 = vmatprep.subr.bf16.mxu0 %v3402
    %3729 = vmatpush1.bf16.msra.mxu0 %v3401
    %3730 = vmatprep.subr.bf16.mxu0 %v3462
    %3731 = vmatpush2.bf16.msra.mxu0 %v3461
    %3732 = vmatprep.subr.bf16.mxu0 %v3458
    %3733 = vmatpush2.bf16.msra.mxu0 %v3457
    %3734 = vmatprep.subr.bf16.mxu0 %v3454
    %3735 = vmatpush2.bf16.msra.mxu0 %v3453
    %3736 = vmatprep.subr.bf16.mxu0 %v3450
    %3737 = vmatpush2.bf16.msra.mxu0 %v3449
    %3738 = vmatprep.subr.bf16.mxu0 %v3446
    %3739 = vmatpush2.bf16.msra.mxu0 %v3445
    %3740 = vmatprep.subr.bf16.mxu0 %v3442
    %3741 = vmatpush2.bf16.msra.mxu0 %v3441
    %3742 = vmatprep.subr.bf16.mxu0 %v3438
    %3743 = vmatpush2.bf16.msra.mxu0 %v3437
    %3744 = vmatprep.subr.bf16.mxu0 %v3434
    %3745 = vmatpush2.bf16.msra.mxu0 %v3433
    %3746 = vmatprep.mubr.bf16.mxu0 %v2822
    %3747 = vmatmul.mubr.bf16.gmra.mxu0 %v2821
    %v3748 = vpop.f32.mrf.mxu0
    %v3749 = vadd.f32 %v3708, %v3748
    %v3750 = vpop.f32.mrf.mxu0
    %v3751 = vadd.f32 %v3710, %v3750
    %v3752 = vpop.f32.mrf.mxu0
    %v3753 = vpop.f32.mrf.mxu0
    %3754 = vdwg.mxu0
    %v3755 = vrot.slane %v3667, 4
    %v3756 = vadd.f32 %v3667, %v3755
    %v3757 = vrot.slane %v3756, 2
    %v3758 = vadd.f32 %v3756, %v3757
    %v3759 = vrot.slane %v3758, 1
    %v3760 = vadd.f32 %v3758, %v3759
    %v3761 = vrot.slane %v3669, 4
    %v3762 = vadd.f32 %v3669, %v3761
    %v3763 = vrot.slane %v3762, 2
    %v3764 = vadd.f32 %v3762, %v3763
    %v3765 = vrot.slane %v3764, 1
    %v3766 = vadd.f32 %v3764, %v3765
    %v3767 = vrot.slane %v3749, 4
    %v3768 = vadd.f32 %v3749, %v3767
    %v3769 = vrot.slane %v3768, 2
    %v3770 = vadd.f32 %v3768, %v3769
    %v3771 = vrot.slane %v3770, 1
    %v3772 = vadd.f32 %v3770, %v3771
    %v3773 = vrot.slane %v3751, 4
    %v3774 = vadd.f32 %v3751, %v3773
    %v3775 = vrot.slane %v3774, 2
    %v3776 = vadd.f32 %v3774, %v3775
    %v3777 = vrot.slane %v3776, 1
    %v3778 = vadd.f32 %v3776, %v3777
    %v3779 = vmul.f32 %v3760, %v411
    %v3780 = vmul.f32 %v3766, %v411
    %v3781 = vmul.f32 %v3772, %v411
    %v3782 = vmul.f32 %v3778, %v411
    %v3783 = vsub.f32 %v3667, %v3779
    %v3784 = vsub.f32 %v3669, %v3780
    %v3785 = vsub.f32 %v3749, %v3781
    %v3786 = vsub.f32 %v3751, %v3782
    %v3787 = vmul.f32 %v3783, %v3783
    %v3788 = vmul.f32 %v3784, %v3784
    %v3789 = vmul.f32 %v3785, %v3785
    %v3790 = vmul.f32 %v3786, %v3786
    %v3791 = vrot.slane %v3787, 4
    %v3792 = vadd.f32 %v3787, %v3791
    %v3793 = vrot.slane %v3792, 2
    %v3794 = vadd.f32 %v3792, %v3793
    %v3795 = vrot.slane %v3794, 1
    %v3796 = vadd.f32 %v3794, %v3795
    %v3797 = vrot.slane %v3788, 4
    %v3798 = vadd.f32 %v3788, %v3797
    %v3799 = vrot.slane %v3798, 2
    %v3800 = vadd.f32 %v3798, %v3799
    %v3801 = vrot.slane %v3800, 1
    %v3802 = vadd.f32 %v3800, %v3801
    %v3803 = vrot.slane %v3789, 4
    %v3804 = vadd.f32 %v3789, %v3803
    %v3805 = vrot.slane %v3804, 2
    %v3806 = vadd.f32 %v3804, %v3805
    %v3807 = vrot.slane %v3806, 1
    %v3808 = vadd.f32 %v3806, %v3807
    %v3809 = vrot.slane %v3790, 4
    %v3810 = vadd.f32 %v3790, %v3809
    %v3811 = vrot.slane %v3810, 2
    %v3812 = vadd.f32 %v3810, %v3811
    %v3813 = vrot.slane %v3812, 1
    %v3814 = vadd.f32 %v3812, %v3813
    %v3815 = vmul.f32 %v3796, %v411
    %v3816 = vmul.f32 %v3802, %v411
    %v3817 = vmul.f32 %v3808, %v411
    %v3818 = vmul.f32 %v3814, %v411
    %v3819 = vld [vmem:[%s14] sm:$0xf]
    %v3820 = vadd.f32 %v3815, 1e-05
    %v3821 = vadd.f32 %v3816, 1e-05
    %v3822 = vadd.f32 %v3817, 1e-05
    %v3823 = vadd.f32 %v3818, 1e-05
    %v3824 = vrsqrt.pop %v3820
    %v3825 = vrsqrt.pop %v3821
    %v3826 = vrsqrt.pop %v3822
    %v3827 = vrsqrt.pop %v3823
    %v3832 = vcombine.low %v3824, %v3825
    %v3833 = vcombine.low %v3826, %v3827
    %v3835 = vunpack.c.l.s4 1966171168
    %v3836 = vunpack.c.0.s8 %v3835
    %v3837 = vlaneseq
    %v3838 = vshrl.u32 %v3837, 7
    %v3839 = vsub.s32 %v3836, %v3838
    %v3840 = vrot.slane %v3832, %v3839
    %v3842 = vunpack.c.l.s4 1966171168
    %v3843 = vunpack.c.0.s8 %v3842
    %v3844 = vlaneseq
    %v3845 = vshrl.u32 %v3844, 7
    %v3846 = vsub.s32 %v3843, %v3845
    %v3847 = vrot.slane %v3833, %v3846
    %v3848 = vcombine.low %v3840, %v3847
    %v3850 = vunpack.c.l.s4 1966171168
    %v3851 = vunpack.c.0.s8 %v3850
    %v3852 = vlaneseq
    %v3853 = vshrl.u32 %v3852, 7
    %v3854 = vsub.s32 %v3851, %v3853
    %v3855 = vrot.slane %v3848, %v3854
    %v3857 = vmul.f32 %v3819, %v3855
    %v3859 = vlaneseq
    %v3860 = vshrl.u32 %v3859, 7
    %v3861 = vsub.s32 0, %v3860
    %v3862 = vrot.slane %v3857, %v3861
    %v3863 = vlaneseq
    %v3864 = vshrl.u32 %v3863, 7
    %v3865 = vsub.s32 1, %v3864
    %v3866 = vrot.slane %v3857, %v3865
    %v3867 = vlaneseq
    %v3868 = vshrl.u32 %v3867, 7
    %v3869 = vsub.s32 2, %v3868
    %v3870 = vrot.slane %v3857, %v3869
    %v3871 = vlaneseq
    %v3872 = vshrl.u32 %v3871, 7
    %v3873 = vsub.s32 3, %v3872
    %v3874 = vrot.slane %v3857, %v3873
    %v3879 = vmul.f32 %v3783, %v3862
    %v3880 = vmul.f32 %v3784, %v3866
    %v3881 = vmul.f32 %v3785, %v3870
    %v3882 = vmul.f32 %v3786, %v3874
    %v3883 = vld [vmem:[%s15] sm:$0xf]
    %v3885 = vlaneseq
    %v3886 = vshrl.u32 %v3885, 7
    %v3887 = vsub.s32 0, %v3886
    %v3888 = vrot.slane %v3883, %v3887
    %v3889 = vlaneseq
    %v3890 = vshrl.u32 %v3889, 7
    %v3891 = vsub.s32 1, %v3890
    %v3892 = vrot.slane %v3883, %v3891
    %v3893 = vlaneseq
    %v3894 = vshrl.u32 %v3893, 7
    %v3895 = vsub.s32 2, %v3894
    %v3896 = vrot.slane %v3883, %v3895
    %v3897 = vlaneseq
    %v3898 = vshrl.u32 %v3897, 7
    %v3899 = vsub.s32 3, %v3898
    %v3900 = vrot.slane %v3883, %v3899
    %v3905 = vadd.f32 %v3879, %v3888
    %v3906 = vadd.f32 %v3880, %v3892
    %v3907 = vadd.f32 %v3881, %v3896
    %v3908 = vadd.f32 %v3882, %v3900
    %v3909 = vmax.f32 %v3905, 0.0
    %v3910 = vmax.f32 %v3906, 0.0
    %v3911 = vmax.f32 %v3907, 0.0
    %v3912 = vmax.f32 %v3908, 0.0
    %v3913 = vpack.c.bf16 %v3909, %v3909
    %v3914 = vpack.c.bf16 %v3910, %v3910
    %v3915 = vpack.c.bf16 %v3911, %v3911
    %v3916 = vpack.c.bf16 %v3912, %v3912
    %v3917 = vld [vmem:[#allocation19] sm:$0xf]
    %v3918 = vld [vmem:[#allocation19 + $0x4] sm:$0xf]
    %v3919 = vld [vmem:[#allocation19 + $0x8] sm:$0xf]
    %v3920 = vld [vmem:[#allocation19 + $0xc] sm:$0xf]
    %v3921 = vld [vmem:[#allocation19 + $0x10] sm:$0xf]
    %v3922 = vld [vmem:[#allocation19 + $0x14] sm:$0xf]
    %v3923 = vld [vmem:[#allocation19 + $0x18] sm:$0xf]
    %v3924 = vld [vmem:[#allocation19 + $0x1c] sm:$0xf]
    %v3925 = vld [vmem:[#allocation19 + $0x20] sm:$0xf]
    %v3926 = vld [vmem:[#allocation19 + $0x24] sm:$0xf]
    %v3927 = vld [vmem:[#allocation19 + $0x28] sm:$0xf]
    %v3928 = vld [vmem:[#allocation19 + $0x2c] sm:$0xf]
    %v3929 = vld [vmem:[#allocation19 + $0x30] sm:$0xf]
    %v3930 = vld [vmem:[#allocation19 + $0x34] sm:$0xf]
    %v3931 = vld [vmem:[#allocation19 + $0x38] sm:$0xf]
    %v3932 = vld [vmem:[#allocation19 + $0x3c] sm:$0xf]
    %v3933 = vld [vmem:[#allocation19 + $0x40] sm:$0xf]
    %v3934 = vld [vmem:[#allocation19 + $0x44] sm:$0xf]
    %v3935 = vld [vmem:[#allocation19 + $0x48] sm:$0xf]
    %v3936 = vld [vmem:[#allocation19 + $0x4c] sm:$0xf]
    %v3937 = vld [vmem:[#allocation19 + $0x50] sm:$0xf]
    %v3938 = vld [vmem:[#allocation19 + $0x54] sm:$0xf]
    %v3939 = vld [vmem:[#allocation19 + $0x58] sm:$0xf]
    %v3940 = vld [vmem:[#allocation19 + $0x5c] sm:$0xf]
    %v3941 = vld [vmem:[#allocation19 + $0x60] sm:$0xf]
    %v3942 = vld [vmem:[#allocation19 + $0x64] sm:$0xf]
    %v3943 = vld [vmem:[#allocation19 + $0x68] sm:$0xf]
    %v3944 = vld [vmem:[#allocation19 + $0x6c] sm:$0xf]
    %v3945 = vld [vmem:[#allocation19 + $0x70] sm:$0xf]
    %v3946 = vld [vmem:[#allocation19 + $0x74] sm:$0xf]
    %v3947 = vld [vmem:[#allocation19 + $0x78] sm:$0xf]
    %v3948 = vld [vmem:[#allocation19 + $0x7c] sm:$0xf]
    %v3949 = vld [vmem:[#allocation19 + $0x80] sm:$0xf]
    %v3950 = vld [vmem:[#allocation19 + $0x84] sm:$0xf]
    %v3951 = vld [vmem:[#allocation19 + $0x88] sm:$0xf]
    %v3952 = vld [vmem:[#allocation19 + $0x8c] sm:$0xf]
    %v3953 = vld [vmem:[#allocation19 + $0x90] sm:$0xf]
    %v3954 = vld [vmem:[#allocation19 + $0x94] sm:$0xf]
    %v3955 = vld [vmem:[#allocation19 + $0x98] sm:$0xf]
    %v3956 = vld [vmem:[#allocation19 + $0x9c] sm:$0xf]
    %v3957 = vld [vmem:[#allocation19 + $0xa0] sm:$0xf]
    %v3958 = vld [vmem:[#allocation19 + $0xa4] sm:$0xf]
    %v3959 = vld [vmem:[#allocation19 + $0xa8] sm:$0xf]
    %v3960 = vld [vmem:[#allocation19 + $0xac] sm:$0xf]
    %v3961 = vld [vmem:[#allocation19 + $0xb0] sm:$0xf]
    %v3962 = vld [vmem:[#allocation19 + $0xb4] sm:$0xf]
    %v3963 = vld [vmem:[#allocation19 + $0xb8] sm:$0xf]
    %v3964 = vld [vmem:[#allocation19 + $0xbc] sm:$0xf]
    %v3965 = vld [vmem:[#allocation19 + $0xc0] sm:$0xf]
    %v3966 = vld [vmem:[#allocation19 + $0xc4] sm:$0xf]
    %v3967 = vld [vmem:[#allocation19 + $0xc8] sm:$0xf]
    %v3968 = vld [vmem:[#allocation19 + $0xcc] sm:$0xf]
    %v3969 = vld [vmem:[#allocation19 + $0xd0] sm:$0xf]
    %v3970 = vld [vmem:[#allocation19 + $0xd4] sm:$0xf]
    %v3971 = vld [vmem:[#allocation19 + $0xd8] sm:$0xf]
    %v3972 = vld [vmem:[#allocation19 + $0xdc] sm:$0xf]
    %v3973 = vld [vmem:[#allocation19 + $0xe0] sm:$0xf]
    %v3974 = vld [vmem:[#allocation19 + $0xe4] sm:$0xf]
    %v3975 = vld [vmem:[#allocation19 + $0xe8] sm:$0xf]
    %v3976 = vld [vmem:[#allocation19 + $0xec] sm:$0xf]
    %v3977 = vld [vmem:[#allocation19 + $0xf0] sm:$0xf]
    %v3978 = vld [vmem:[#allocation19 + $0xf4] sm:$0xf]
    %v3979 = vld [vmem:[#allocation19 + $0xf8] sm:$0xf]
    %v3980 = vld [vmem:[#allocation19 + $0xfc] sm:$0xf]
    %v4045 = vunpack.c.l.b16 %v3917
    %v4046 = vunpack.c.l.b16 %v3918
    %v4047 = vunpack.c.l.b16 %v3919
    %v4048 = vunpack.c.l.b16 %v3920
    %v4049 = vunpack.c.l.b16 %v3921
    %v4050 = vunpack.c.l.b16 %v3922
    %v4051 = vunpack.c.l.b16 %v3923
    %v4052 = vunpack.c.l.b16 %v3924
    %v4053 = vunpack.c.l.b16 %v3925
    %v4054 = vunpack.c.l.b16 %v3926
    %v4055 = vunpack.c.l.b16 %v3927
    %v4056 = vunpack.c.l.b16 %v3928
    %v4057 = vunpack.c.l.b16 %v3929
    %v4058 = vunpack.c.l.b16 %v3930
    %v4059 = vunpack.c.l.b16 %v3931
    %v4060 = vunpack.c.l.b16 %v3932
    %v4061 = vunpack.c.l.b16 %v3933
    %v4062 = vunpack.c.l.b16 %v3934
    %v4063 = vunpack.c.l.b16 %v3935
    %v4064 = vunpack.c.l.b16 %v3936
    %v4065 = vunpack.c.l.b16 %v3937
    %v4066 = vunpack.c.l.b16 %v3938
    %v4067 = vunpack.c.l.b16 %v3939
    %v4068 = vunpack.c.l.b16 %v3940
    %v4069 = vunpack.c.l.b16 %v3941
    %v4070 = vunpack.c.l.b16 %v3942
    %v4071 = vunpack.c.l.b16 %v3943
    %v4072 = vunpack.c.l.b16 %v3944
    %v4073 = vunpack.c.l.b16 %v3945
    %v4074 = vunpack.c.l.b16 %v3946
    %v4075 = vunpack.c.l.b16 %v3947
    %v4076 = vunpack.c.l.b16 %v3948
    %v4077 = vunpack.c.l.b16 %v3949
    %v4078 = vunpack.c.l.b16 %v3950
    %v4079 = vunpack.c.l.b16 %v3951
    %v4080 = vunpack.c.l.b16 %v3952
    %v4081 = vunpack.c.l.b16 %v3953
    %v4082 = vunpack.c.l.b16 %v3954
    %v4083 = vunpack.c.l.b16 %v3955
    %v4084 = vunpack.c.l.b16 %v3956
    %v4085 = vunpack.c.l.b16 %v3957
    %v4086 = vunpack.c.l.b16 %v3958
    %v4087 = vunpack.c.l.b16 %v3959
    %v4088 = vunpack.c.l.b16 %v3960
    %v4089 = vunpack.c.l.b16 %v3961
    %v4090 = vunpack.c.l.b16 %v3962
    %v4091 = vunpack.c.l.b16 %v3963
    %v4092 = vunpack.c.l.b16 %v3964
    %v4093 = vunpack.c.l.b16 %v3965
    %v4094 = vunpack.c.l.b16 %v3966
    %v4095 = vunpack.c.l.b16 %v3967
    %v4096 = vunpack.c.l.b16 %v3968
    %v4097 = vunpack.c.l.b16 %v3969
    %v4098 = vunpack.c.l.b16 %v3970
    %v4099 = vunpack.c.l.b16 %v3971
    %v4100 = vunpack.c.l.b16 %v3972
    %v4101 = vunpack.c.l.b16 %v3973
    %v4102 = vunpack.c.l.b16 %v3974
    %v4103 = vunpack.c.l.b16 %v3975
    %v4104 = vunpack.c.l.b16 %v3976
    %v4105 = vunpack.c.l.b16 %v3977
    %v4106 = vunpack.c.l.b16 %v3978
    %v4107 = vunpack.c.l.b16 %v3979
    %v4108 = vunpack.c.l.b16 %v3980
    %v4109 = vpack.c.b16 %v4046, %v4045
    %v4110 = vpack.c.b16 %v4048, %v4047
    %v4111 = vpack.c.b16 %v4050, %v4049
    %v4112 = vpack.c.b16 %v4052, %v4051
    %v4113 = vpack.c.b16 %v4054, %v4053
    %v4114 = vpack.c.b16 %v4056, %v4055
    %v4115 = vpack.c.b16 %v4058, %v4057
    %v4116 = vpack.c.b16 %v4060, %v4059
    %v4117 = vpack.c.b16 %v4062, %v4061
    %v4118 = vpack.c.b16 %v4064, %v4063
    %v4119 = vpack.c.b16 %v4066, %v4065
    %v4120 = vpack.c.b16 %v4068, %v4067
    %v4121 = vpack.c.b16 %v4070, %v4069
    %v4122 = vpack.c.b16 %v4072, %v4071
    %v4123 = vpack.c.b16 %v4074, %v4073
    %v4124 = vpack.c.b16 %v4076, %v4075
    %v4125 = vpack.c.b16 %v4078, %v4077
    %v4126 = vpack.c.b16 %v4080, %v4079
    %v4127 = vpack.c.b16 %v4082, %v4081
    %v4128 = vpack.c.b16 %v4084, %v4083
    %v4129 = vpack.c.b16 %v4086, %v4085
    %v4130 = vpack.c.b16 %v4088, %v4087
    %v4131 = vpack.c.b16 %v4090, %v4089
    %v4132 = vpack.c.b16 %v4092, %v4091
    %v4133 = vpack.c.b16 %v4094, %v4093
    %v4134 = vpack.c.b16 %v4096, %v4095
    %v4135 = vpack.c.b16 %v4098, %v4097
    %v4136 = vpack.c.b16 %v4100, %v4099
    %v4137 = vpack.c.b16 %v4102, %v4101
    %v4138 = vpack.c.b16 %v4104, %v4103
    %v4139 = vpack.c.b16 %v4106, %v4105
    %v4140 = vpack.c.b16 %v4108, %v4107
    %4173 = vmatprep.subr.bf16.mxu0 0
    %4174 = vmatpush1.bf16.msra.mxu0 %v4116
    %4175 = vmatprep.subr.bf16.mxu0 0
    %4176 = vmatpush1.bf16.msra.mxu0 %v4115
    %4177 = vmatprep.subr.bf16.mxu0 0
    %4178 = vmatpush1.bf16.msra.mxu0 %v4114
    %4179 = vmatprep.subr.bf16.mxu0 0
    %4180 = vmatpush1.bf16.msra.mxu0 %v4113
    %4181 = vmatprep.subr.bf16.mxu0 0
    %4182 = vmatpush1.bf16.msra.mxu0 %v4112
    %4183 = vmatprep.subr.bf16.mxu0 0
    %4184 = vmatpush1.bf16.msra.mxu0 %v4111
    %4185 = vmatprep.subr.bf16.mxu0 0
    %4186 = vmatpush1.bf16.msra.mxu0 %v4110
    %4187 = vmatprep.subr.bf16.mxu0 0
    %4188 = vmatpush1.bf16.msra.mxu0 %v4109
    %4189 = vmatprep.subr.bf16.mxu0 0
    %4190 = vmatpush2.bf16.msra.mxu0 %v4124
    %4191 = vmatprep.subr.bf16.mxu0 0
    %4192 = vmatpush2.bf16.msra.mxu0 %v4123
    %4193 = vmatprep.subr.bf16.mxu0 0
    %4194 = vmatpush2.bf16.msra.mxu0 %v4122
    %4195 = vmatprep.subr.bf16.mxu0 0
    %4196 = vmatpush2.bf16.msra.mxu0 %v4121
    %4197 = vmatprep.subr.bf16.mxu0 0
    %4198 = vmatpush2.bf16.msra.mxu0 %v4120
    %4199 = vmatprep.subr.bf16.mxu0 0
    %4200 = vmatpush2.bf16.msra.mxu0 %v4119
    %4201 = vmatprep.subr.bf16.mxu0 0
    %4202 = vmatpush2.bf16.msra.mxu0 %v4118
    %4203 = vmatprep.subr.bf16.mxu0 0
    %4204 = vmatpush2.bf16.msra.mxu0 %v4117
    %4205 = vmatprep.mubr.bf16.mxu0 %v3914
    %4206 = vmatmul.mubr.bf16.gmra.mxu0 %v3913
    %v4207 = vpop.f32.mrf.mxu0
    %v4208 = vadd.f32 0.0, %v4207
    %v4209 = vpop.f32.mrf.mxu0
    %v4210 = vpop.f32.mrf.mxu0
    %v4211 = vpop.f32.mrf.mxu0
    %4212 = vdwg.mxu0
    %4213 = vmatprep.subr.bf16.mxu0 0
    %4214 = vmatpush1.bf16.msra.mxu0 %v4132
    %4215 = vmatprep.subr.bf16.mxu0 0
    %4216 = vmatpush1.bf16.msra.mxu0 %v4131
    %4217 = vmatprep.subr.bf16.mxu0 0
    %4218 = vmatpush1.bf16.msra.mxu0 %v4130
    %4219 = vmatprep.subr.bf16.mxu0 0
    %4220 = vmatpush1.bf16.msra.mxu0 %v4129
    %4221 = vmatprep.subr.bf16.mxu0 0
    %4222 = vmatpush1.bf16.msra.mxu0 %v4128
    %4223 = vmatprep.subr.bf16.mxu0 0
    %4224 = vmatpush1.bf16.msra.mxu0 %v4127
    %4225 = vmatprep.subr.bf16.mxu0 0
    %4226 = vmatpush1.bf16.msra.mxu0 %v4126
    %4227 = vmatprep.subr.bf16.mxu0 0
    %4228 = vmatpush1.bf16.msra.mxu0 %v4125
    %4229 = vmatprep.subr.bf16.mxu0 0
    %4230 = vmatpush2.bf16.msra.mxu0 %v4140
    %4231 = vmatprep.subr.bf16.mxu0 0
    %4232 = vmatpush2.bf16.msra.mxu0 %v4139
    %4233 = vmatprep.subr.bf16.mxu0 0
    %4234 = vmatpush2.bf16.msra.mxu0 %v4138
    %4235 = vmatprep.subr.bf16.mxu0 0
    %4236 = vmatpush2.bf16.msra.mxu0 %v4137
    %4237 = vmatprep.subr.bf16.mxu0 0
    %4238 = vmatpush2.bf16.msra.mxu0 %v4136
    %4239 = vmatprep.subr.bf16.mxu0 0
    %4240 = vmatpush2.bf16.msra.mxu0 %v4135
    %4241 = vmatprep.subr.bf16.mxu0 0
    %4242 = vmatpush2.bf16.msra.mxu0 %v4134
    %4243 = vmatprep.subr.bf16.mxu0 0
    %4244 = vmatpush2.bf16.msra.mxu0 %v4133
    %4245 = vmatprep.mubr.bf16.mxu0 %v3916
    %4246 = vmatmul.mubr.bf16.gmra.mxu0 %v3915
    %v4247 = vpop.f32.mrf.mxu0
    %v4248 = vadd.f32 %v4208, %v4247
    %v4249 = vpop.f32.mrf.mxu0
    %v4250 = vpop.f32.mrf.mxu0
    %v4251 = vpop.f32.mrf.mxu0
    %4252 = vdwg.mxu0
    %v4253 = vrot.slane %v4248, 4
    %v4254 = vadd.f32 %v4248, %v4253
    %v4255 = vrot.slane %v4254, 2
    %v4256 = vadd.f32 %v4254, %v4255
    %v4257 = vrot.slane %v4256, 1
    %v4258 = vadd.f32 %v4256, %v4257
    %v4259 = vmul.f32 %v4258, %v411
    %v4260 = vsub.f32 %v4248, %v4259
    %v4261 = vmul.f32 %v4260, %v4260
    %v4262 = vrot.slane %v4261, 4
    %v4263 = vadd.f32 %v4261, %v4262
    %v4264 = vrot.slane %v4263, 2
    %v4265 = vadd.f32 %v4263, %v4264
    %v4266 = vrot.slane %v4265, 1
    %v4267 = vadd.f32 %v4265, %v4266
    %v4268 = vmul.f32 %v4267, %v411
    %v4269 = vld [vmem:[%s17] sm:$0x1]
    %v4270 = vadd.f32 %v4268, 1e-05
    %v4271 = vrsqrt.pop %v4270
    %v4272 = vmul.f32 %v4269, %v4271
    %v4274 = vlaneseq
    %v4275 = vshrl.u32 %v4274, 7
    %v4276 = vsub.s32 0, %v4275
    %v4277 = vrot.slane %v4272, %v4276
    %v4279 = vmul.f32 %v4260, %v4277
    %v4280 = vld [vmem:[%s18] sm:$0x1]
    %v4282 = vlaneseq
    %v4283 = vshrl.u32 %v4282, 7
    %v4284 = vsub.s32 0, %v4283
    %v4285 = vrot.slane %v4280, %v4284
    %v4287 = vadd.f32 %v4279, %v4285
    %v4288 = vxor.u32 %v4287, 2147483648
    %v4289 = vmul.f32 %v4288, 1.442695
    %v4290 = vpow.pop %v4289
    %v4291 = vadd.f32 %v4290, 1.0
    %v4292 = vrcp.pop %v4291
    %v4293 = vmul.f32 1.0, %v4292
    %4294 = vst [vmem:[#allocation20] sm:$0xff] %v4293
    // Predicated region
    $region122: #{tpu_custom_call.1} parent=1 // pred_check
      _
    $region123: #{tpu_custom_call.1} parent=1 // pred_check_branch
      %4296 = sbr.rel (0) target = $region125
    $region124: #{tpu_custom_call.1} parent=1 // pred_region
      %s4298 = ssub.s32 128, 128
      %4299 = vsyncadd [#allocation4], %s4298
      %s4301 = sshll.u32 [#allocation20], 4
      %s4302 = int_to_ptr.vmem [resolvable:$true] %s4301
      %4304 = dma.vmem_to_hbm [thread:$0]  %s4302, 128, %s19, [#allocation4]
    $region125: #{tpu_custom_call.1} parent=1 // pred_fallthru
      _
    // Predicated region
    $region126: #{tpu_custom_call.1} parent=1 // pred_check
      _
    $region127: #{tpu_custom_call.1} parent=1 // pred_check_branch
      %4306 = sbr.rel (0) target = $region129
    $region128: #{tpu_custom_call.1} parent=1 // pred_region
      %4307 = dma.done [#allocation4], 128
    $region129: #{tpu_custom_call.1} parent=1 // pred_fallthru
      _
    %4308 = vsyncpa [#allocation3], 1
    %4309 = vsyncpa [#allocation6], 1
    %4310 = vsyncpa [#allocation9], 1
    %4311 = vsyncpa [#allocation12], 1
    %4312 = vsyncpa [#allocation15], 1
    %4313 = vsyncpa [#allocation18], 1
    %4314 = vsyncpa [#allocation4], 1

</llo_original>
